<compile_context>
chip_gen: v7x
topology: tpu7x:2x2x1
jax: 0.10.0
libtpu: 0.0.40
codegen_flags: <defaults>
</compile_context>

<pallas_src>
import numpy as np
import jax
import jax.numpy as jnp
from jax.experimental import pallas as pl
from jax.experimental.pallas import tpu as pltpu

F32 = jnp.float32
_VMEM = pl.BlockSpec(memory_space=pltpu.MemorySpace.VMEM)


# ----------------------------------------------------------------------------
# Parameter init (deterministic, PyTorch-like uniform fan-in init)
# ----------------------------------------------------------------------------
def _uniform(key, shape, bound):
    return jax.random.uniform(key, shape, F32, minval=-bound, maxval=bound)


def init_linear(key, in_dim, out_dim):
    # weight stored pre-transposed: (in_dim, out_dim); bias (1, out_dim)
    k1, k2 = jax.random.split(key)
    b = 1.0 / np.sqrt(in_dim)
    return _uniform(k1, (in_dim, out_dim), b), _uniform(k2, (1, out_dim), b)


def init_row_linear(key, in_dim):
    # nn.Linear(in_dim, 1): weight as a (1, in_dim) row (applied via lane-reduce), bias (1, 1)
    k1, k2 = jax.random.split(key)
    b = 1.0 / np.sqrt(in_dim)
    return _uniform(k1, (1, in_dim), b), _uniform(k2, (1, 1), b)


def init_gru_dir(key, e, h):
    # one GRU direction: gate weights pre-transposed (in, h), biases (1, h)
    b = 1.0 / np.sqrt(h)
    ks = jax.random.split(key, 12)
    u = lambda k, s: _uniform(k, s, b)
    return (u(ks[0], (e, h)), u(ks[1], (e, h)), u(ks[2], (e, h)),      # W_ir W_iz W_in
            u(ks[3], (h, h)), u(ks[4], (h, h)), u(ks[5], (h, h)),      # W_hr W_hz W_hn
            u(ks[6], (1, h)), u(ks[7], (1, h)), u(ks[8], (1, h)),      # b_ir b_iz b_in
            u(ks[9], (1, h)), u(ks[10], (1, h)), u(ks[11], (1, h)))    # b_hr b_hz b_hn


def init_params(key, vocab_size, embed_dim, hidden_dim):
    ks = jax.random.split(key, 18)
    p = {}
    p["W_emb"] = jax.random.normal(ks[0], (vocab_size, embed_dim), F32)
    p["q_gru_f"] = init_gru_dir(ks[1], embed_dim, hidden_dim)
    p["q_gru_b"] = init_gru_dir(ks[2], embed_dim, hidden_dim)
    p["d_gru_f"] = init_gru_dir(ks[3], embed_dim, hidden_dim)
    p["d_gru_b"] = init_gru_dir(ks[4], embed_dim, hidden_dim)
    p["linear_q"] = init_linear(ks[5], 2 * hidden_dim, hidden_dim)
    p["linear_d"] = init_linear(ks[6], 2 * hidden_dim, hidden_dim)
    p["Wu"] = init_linear(ks[7], hidden_dim, hidden_dim)       # InitPrev
    p["Wv"] = init_linear(ks[8], hidden_dim, hidden_dim)
    p["lin_init"] = init_row_linear(ks[9], hidden_dim)
    p["Wy"] = init_linear(ks[10], hidden_dim, hidden_dim)      # AttnLayer
    p["Wh"] = init_linear(ks[11], hidden_dim, hidden_dim)
    p["Wr"] = init_linear(ks[12], hidden_dim, hidden_dim)
    p["lin_attn"] = init_row_linear(ks[13], hidden_dim)
    p["Wt"] = init_linear(ks[14], hidden_dim, hidden_dim)
    p["Wp"] = init_linear(ks[15], hidden_dim, hidden_dim)      # OutputLayer
    p["Wx"] = init_linear(ks[16], hidden_dim, hidden_dim)
    p["lin_out"] = init_linear(ks[17], hidden_dim, 3)
    return p


def make_scramble3(tq, h):
    # Reproduces  view(B*Q, H) -> view(B, H, Q) -> sum(dim=2)  exactly:
    # prev_h[b, i] = sum_{q,h'} f[b,q,h'] * [ (q*H + h') // Q == i ]
    k = (np.arange(tq)[:, None] * h + np.arange(h)[None, :]) // tq        # (Tq, H)
    s = (k[..., None] == np.arange(h)[None, None, :]).astype(np.float32)  # (Tq, H, H)
    return jnp.asarray(s)


def prepare_gru(gru_params):
    # Fuse the three gate weights and pre-sum the paired biases.
    (wir, wiz, win, whr, whz, whn, bir, biz, bin_, bhr, bhz, bhn) = gru_params
    wi3 = jnp.concatenate([wir, wiz, win], axis=1)                 # (E, 3H)
    wh3 = jnp.concatenate([whr, whz, whn], axis=1)                 # (H, 3H)
    bi3 = jnp.concatenate([bir + bhr, biz + bhz, bin_], axis=1)    # (1, 3H)
    return wi3, wh3, bi3, bhn                                      # bhn kept separate (inside r*)


# ----------------------------------------------------------------------------
# Pallas kernels
# ----------------------------------------------------------------------------
def _bigru_proj_kernel(x_ref, h0f_ref, h0b_ref,
                       wif_ref, whf_ref, bif_ref, bhnf_ref,
                       wib_ref, whb_ref, bib_ref, bhnb_ref,
                       wpf_ref, wpb_ref, bp_ref,
                       out_ref, hN_ref,
                       gxf_ref, gxb_ref, sf_ref, sb_ref):
    # Fused bidirectional GRU (time-major) + 2H->H projection.
    T, B, E = x_ref.shape
    H = h0f_ref.shape[1]

    # Hoisted input projections: one big matmul per direction for the whole sequence.
    x2d = x_ref[...].reshape(T * B, E)
    gxf_ref[...] = (jnp.dot(x2d, wif_ref[...], preferred_element_type=F32)
                    + bif_ref[...]).reshape(T, B, 3 * H)
    gxb_ref[...] = (jnp.dot(x2d, wib_ref[...], preferred_element_type=F32)
                    + bib_ref[...]).reshape(T, B, 3 * H)

    whf = whf_ref[...]
    whb = whb_ref[...]
    bhnf = jnp.broadcast_to(bhnf_ref[...], (B, H))
    bhnb = jnp.broadcast_to(bhnb_ref[...], (B, H))

    def gate(gx, gh, h, bhn):
        r = jax.nn.sigmoid(gx[:, :H] + gh[:, :H])
        z = jax.nn.sigmoid(gx[:, H:2 * H] + gh[:, H:2 * H])
        n = jnp.tanh(gx[:, 2 * H:] + r * (gh[:, 2 * H:] + bhn))
        return (1.0 - z) * n + z * h

    def step(t, carry):
        hf, hb = carry
        tb = T - 1 - t
        hf_new = gate(gxf_ref[t], jnp.dot(hf, whf, preferred_element_type=F32), hf, bhnf)
        hb_new = gate(gxb_ref[tb], jnp.dot(hb, whb, preferred_element_type=F32), hb, bhnb)
        sf_ref[t] = hf_new
        sb_ref[tb] = hb_new
        return (hf_new, hb_new)

    hf_fin, hb_fin = jax.lax.fori_loop(0, T, step, (h0f_ref[...], h0b_ref[...]))
    hN_ref[0] = hf_fin
    hN_ref[1] = hb_fin

    # Encoder linear (2H -> H) fused here; weight split into fwd/bwd halves so no concat.
    out_ref[...] = (jnp.dot(sf_ref[...].reshape(T * B, H), wpf_ref[...],
                            preferred_element_type=F32)
                    + jnp.dot(sb_ref[...].reshape(T * B, H), wpb_ref[...],
                              preferred_element_type=F32)
                    + bp_ref[...]).reshape(T, B, H)


def _attention_output_kernel(doc_h_ref, qry_h_ref, qry_sc_ref, qm_ref, vr_ref,
                             wu_ref, bu_ref, wy_ref, by_ref,
                             wli_ref, bli_ref,
                             wh_ref, bhr_ref, wr_ref,
                             wl_ref, bl_ref, wt_ref, bt_ref,
                             wp_ref, bp_ref, wx_ref, bx_ref, wo_ref, bo_ref,
                             out_ref, ctx_ref):
    # InitPrev + recurrent AttnLayer over document positions + OutputLayer.
    Td, B, H = doc_h_ref.shape
    Tq = qry_h_ref.shape[1]

    qm = qm_ref[...]                                                      # (B, Tq)
    qry_h = qry_h_ref[...]                                                # (B, Tq, H)
    qry2d = qry_h.reshape(B * Tq, H)

    # Loop-invariant projections, hoisted out of the per-step AttnLayer call.
    qry_wu = (jnp.dot(qry2d, wu_ref[...], preferred_element_type=F32)
              + bu_ref[...]).reshape(B, Tq, H)
    qry_wy = (jnp.dot(qry2d, wy_ref[...], preferred_element_type=F32)
              + by_ref[...]).reshape(B, Tq, H)

    # doc_i@Wh + bh + br precomputed for every doc position as one matmul.
    ctx_ref[...] = (jnp.dot(doc_h_ref[...].reshape(Td * B, H), wh_ref[...],
                            preferred_element_type=F32)
                    + bhr_ref[...]).reshape(Td, B, H)

    wli_b = jnp.broadcast_to(wli_ref[...], (B, Tq, H))                    # hoisted broadcasts
    wl_b = jnp.broadcast_to(wl_ref[...], (B, Tq, H))
    bli = bli_ref[...]                                                    # (1, 1)
    bl = bl_ref[...]                                                      # (1, 1)

    # ---------------- InitPrev ----------------
    s3 = jnp.tanh(qry_wu + vr_ref[...])                                   # (B, Tq, H)
    s0 = jnp.sum(s3 * wli_b, axis=-1) + bli                               # (B, Tq)
    m0 = jnp.max(s0, axis=-1, keepdims=True)
    e0 = jnp.exp(s0 - m0)
    a0 = e0 * pl.reciprocal(jnp.sum(e0, axis=-1, keepdims=True), approx=True)
    a0 = a0 * qm                                                          # padded_attn (mask then
    a0 = a0 * pl.reciprocal(jnp.sum(a0, axis=-1, keepdims=True), approx=True)  # renormalize)
    # view(B, H, Tq).sum(2) scramble, precontracted with qry_h in glue (qry_sc).
    prev_rt = jnp.sum(a0[:, :, None] * qry_sc_ref[...], axis=1)           # (B, H)

    wr = wr_ref[...]
    wt = wt_ref[...]
    bt_b = jnp.broadcast_to(bt_ref[...], (B, H))

    # ---------------- AttnLayer, iterated over doc positions ----------------
    def attn_step(i, prev):
        ctx = ctx_ref[i] + jnp.dot(prev, wr, preferred_element_type=F32)  # (B, H)
        mt = jnp.tanh(qry_wy + ctx[:, None, :])                           # (B, Tq, H)
        s = jnp.sum(mt * wl_b, axis=-1) + bl                              # (B, Tq)
        m = jnp.max(s, axis=-1, keepdims=True)
        e = jnp.exp(s - m)
        a = e * pl.reciprocal(jnp.sum(e, axis=-1, keepdims=True), approx=True)
        a = a * qm
        a = a * pl.reciprocal(jnp.sum(a, axis=-1, keepdims=True), approx=True)
        w_qry = jnp.sum(a[:, :, None] * qry_h, axis=1)                    # bmm(qry_h^T, alpha)
        # TODO(synk): PyTorch adds (B,H,1)+(B,H) (shape bug unless B==H); we produce the
        #             intended (B,H) result which downstream to_2D() would yield anyway.
        return w_qry + jnp.tanh(jnp.dot(prev, wt, preferred_element_type=F32) + bt_b)

    rt = jax.lax.fori_loop(0, Td, attn_step, prev_rt)

    # ---------------- OutputLayer ----------------
    hN = doc_h_ref[Td - 1]                                                # doc_h[:, -1, :]
    h = jnp.tanh(jnp.dot(rt, wp_ref[...], preferred_element_type=F32) + bp_ref[...]
                 + jnp.dot(hN, wx_ref[...], preferred_element_type=F32) + bx_ref[...])
    out_ref[...] = jnp.dot(h, wo_ref[...], preferred_element_type=F32) + bo_ref[...]


# ----------------------------------------------------------------------------
# Pallas wrappers (glue)
# ----------------------------------------------------------------------------
def pallas_bigru_proj(x_tbe, h0_f, h0_b, gru_f, gru_b, proj):
    # One launch per bi-GRU: both directions + the 2H->H encoder projection fused.
    T, B, _ = x_tbe.shape
    H = h0_f.shape[1]
    wif, whf, bif, bhnf = gru_f
    wib, whb, bib, bhnb = gru_b
    wpf, wpb, bp = proj
    return pl.pallas_call(
        _bigru_proj_kernel,
        out_shape=(jax.ShapeDtypeStruct((T, B, H), F32),      # projected output, time-major
                   jax.ShapeDtypeStruct((2, B, H), F32)),     # final hidden [fwd, bwd]
        in_specs=[_VMEM] * 14,
        out_specs=(_VMEM, _VMEM),
        scratch_shapes=[pltpu.VMEM((T, B, 3 * H), F32),       # precomputed input gates (fwd)
                        pltpu.VMEM((T, B, 3 * H), F32),       # precomputed input gates (bwd)
                        pltpu.VMEM((T, B, H), F32),           # raw fwd hidden sequence
                        pltpu.VMEM((T, B, H), F32)],          # raw bwd hidden sequence
    )(x_tbe, h0_f, h0_b, wif, whf, bif, bhnf, wib, whb, bib, bhnb, wpf, wpb, bp)


def entailment_forward(params, doc, qry, dm, qm):
    del dm  # unused in the original forward as well
    B = doc.shape[0]
    H = params["Wu"][0].shape[0]

    # Embed (dropout in eval mode -> identity).
    d_emb = jnp.take(params["W_emb"], doc, axis=0)            # (B, Td, E)
    q_emb = jnp.take(params["W_emb"], qry, axis=0)            # (B, Tq, E)
    d_tbe = jnp.transpose(d_emb, (1, 0, 2))                   # time-major for the GRU kernel
    q_tbe = jnp.transpose(q_emb, (1, 0, 2))

    # Fused GRU parameter forms.
    qf = prepare_gru(params["q_gru_f"])
    qb = prepare_gru(params["q_gru_b"])
    df = prepare_gru(params["d_gru_f"])
    db = prepare_gru(params["d_gru_b"])
    wq, bq = params["linear_q"]
    wd, bd = params["linear_d"]
    proj_q = (wq[:H], wq[H:], bq)                             # split 2H->H weight by direction
    proj_d = (wd[:H], wd[H:], bd)

    # Encoder: q_gru (h0 = zeros) then d_gru seeded with q_gru's final hidden.
    zeros = jnp.zeros((B, H), F32)
    qry_h_tm, q_hid = pallas_bigru_proj(q_tbe, zeros, zeros, qf, qb, proj_q)   # (Tq, B, H)
    doc_h_tm, _ = pallas_bigru_proj(d_tbe, q_hid[0], q_hid[1], df, db, proj_d)  # (Td, B, H)

    qry_h = jnp.transpose(qry_h_tm, (1, 0, 2))                # (B, Tq, H) for attention
    Tq = qry_h.shape[1]

    # Loop-invariant InitPrev pieces (tiny, done once in glue):
    #   Wv(ones(Tq,H)) is the same row repeated -> sum(Wv,0)+bv ; scramble precontracted.
    vr_row = jnp.sum(params["Wv"][0], axis=0, keepdims=True) + params["Wv"][1]   # (1, H)
    smat3 = make_scramble3(Tq, H)                                                # (Tq, H, H)
    qry_sc = jnp.einsum("bqh,qhk->bqk", qry_h, smat3)                            # (B, Tq, H)
    bhr = params["Wh"][1] + params["Wr"][1]                   # fold bh + br into doc context

    out = pl.pallas_call(
        _attention_output_kernel,
        out_shape=jax.ShapeDtypeStruct((B, 3), F32),
        in_specs=[_VMEM] * 24,
        out_specs=_VMEM,
        scratch_shapes=[pltpu.VMEM(doc_h_tm.shape, F32)],     # precomputed doc@Wh + bh + br
    )(doc_h_tm, qry_h, qry_sc, qm, vr_row,
      params["Wu"][0], params["Wu"][1], params["Wy"][0], params["Wy"][1],
      params["lin_init"][0], params["lin_init"][1],
      params["Wh"][0], bhr, params["Wr"][0],
      params["lin_attn"][0], params["lin_attn"][1], params["Wt"][0], params["Wt"][1],
      params["Wp"][0], params["Wp"][1], params["Wx"][0], params["Wx"][1],
      params["lin_out"][0], params["lin_out"][1])
    return out


# ----------------------------------------------------------------------------
# Demo
# ----------------------------------------------------------------------------
if __name__ == "__main__":
    vocab_size, embed_dim, hidden_dim = 50, 16, 32
    B, Td, Tq = 2, 6, 8

    key = jax.random.PRNGKey(0)
    k_params, k_doc, k_qry = jax.random.split(key, 3)
    params = init_params(k_params, vocab_size, embed_dim, hidden_dim)

    doc = jax.random.randint(k_doc, (B, Td), 0, vocab_size, dtype=jnp.int32)
    qry = jax.random.randint(k_qry, (B, Tq), 0, vocab_size, dtype=jnp.int32)
    dm = jnp.ones((B, Td), F32)                  # unused by the forward pass
    qm = jnp.ones((B, Tq), F32).at[1, -1].set(0.0)

    fwd = jax.jit(entailment_forward)
    out = fwd(params, doc, qry, dm, qm)
    jax.block_until_ready(out)
    assert out.shape == (B, 3) and out.dtype == jnp.float32
    assert bool(jnp.all(jnp.isfinite(out)))
    print("KERNEL_OK")
</pallas_src>

<mosaic_0001>
module attributes {stable_mosaic.version = 11 : i64} {
  func.func @_bigru_proj_kernel(%arg0: memref<8x2x16xf32, #tpu.memory_space<vmem>>, %arg1: memref<2x32xf32, #tpu.memory_space<vmem>>, %arg2: memref<2x32xf32, #tpu.memory_space<vmem>>, %arg3: memref<16x96xf32, #tpu.memory_space<vmem>>, %arg4: memref<32x96xf32, #tpu.memory_space<vmem>>, %arg5: memref<1x96xf32, #tpu.memory_space<vmem>>, %arg6: memref<1x32xf32, #tpu.memory_space<vmem>>, %arg7: memref<16x96xf32, #tpu.memory_space<vmem>>, %arg8: memref<32x96xf32, #tpu.memory_space<vmem>>, %arg9: memref<1x96xf32, #tpu.memory_space<vmem>>, %arg10: memref<1x32xf32, #tpu.memory_space<vmem>>, %arg11: memref<32x32xf32, #tpu.memory_space<vmem>>, %arg12: memref<32x32xf32, #tpu.memory_space<vmem>>, %arg13: memref<1x32xf32, #tpu.memory_space<vmem>>, %arg14: memref<8x2x32xf32, #tpu.memory_space<vmem>>, %arg15: memref<2x2x32xf32, #tpu.memory_space<vmem>>, %arg16: memref<8x2x96xf32, #tpu.memory_space<vmem>>, %arg17: memref<8x2x96xf32, #tpu.memory_space<vmem>>, %arg18: memref<8x2x32xf32, #tpu.memory_space<vmem>>, %arg19: memref<8x2x32xf32, #tpu.memory_space<vmem>>) attributes {dimension_semantics = [], scalar_prefetch = 0 : i64, scratch_operands = 4 : i64, tpu.core_type = #tpu.core_type<tc>} {
    %c0 = arith.constant 0 : index
    %c0_0 = arith.constant 0 : index
    %c0_1 = arith.constant 0 : index
    %0 = vector.load %arg0[%c0, %c0_0, %c0_1] : memref<8x2x16xf32, #tpu.memory_space<vmem>>, vector<8x2x16xf32>
    %1 = vector.shape_cast %0 : vector<8x2x16xf32> to vector<16x16xf32>
    %c0_2 = arith.constant 0 : index
    %c0_3 = arith.constant 0 : index
    %2 = vector.load %arg3[%c0_2, %c0_3] : memref<16x96xf32, #tpu.memory_space<vmem>>, vector<16x96xf32>
    %cst = arith.constant dense<0.000000e+00> : vector<16x96xf32>
    %3 = tpu.matmul %1, %2, %cst {dimension_numbers = #tpu.dot_dimension_numbers<[1], [0], [0], [1], [0, 0, 1, 1], [], []>} : vector<16x16xf32>, vector<16x96xf32>, vector<16x96xf32> -> vector<16x96xf32>
    %c0_4 = arith.constant 0 : index
    %c0_5 = arith.constant 0 : index
    %4 = vector.load %arg5[%c0_4, %c0_5] : memref<1x96xf32, #tpu.memory_space<vmem>>, vector<1x96xf32>
    %5 = vector.broadcast %4 : vector<1x96xf32> to vector<16x96xf32>
    %6 = arith.addf %3, %5 : vector<16x96xf32>
    %7 = vector.shape_cast %6 : vector<16x96xf32> to vector<8x2x96xf32>
    %c0_6 = arith.constant 0 : index
    %c0_7 = arith.constant 0 : index
    %c0_8 = arith.constant 0 : index
    %8 = vector.load %arg16[%c0_6, %c0_7, %c0_8] : memref<8x2x96xf32, #tpu.memory_space<vmem>>, vector<8x2x96xf32>
    tpu.vector_store %arg16[%c0_6, %c0_7, %c0_8], %7 {strides = array<i32>} : memref<8x2x96xf32, #tpu.memory_space<vmem>>, vector<8x2x96xf32>,
    %c0_9 = arith.constant 0 : index
    %c0_10 = arith.constant 0 : index
    %9 = vector.load %arg7[%c0_9, %c0_10] : memref<16x96xf32, #tpu.memory_space<vmem>>, vector<16x96xf32>
    %cst_11 = arith.constant dense<0.000000e+00> : vector<16x96xf32>
    %10 = tpu.matmul %1, %9, %cst_11 {dimension_numbers = #tpu.dot_dimension_numbers<[1], [0], [0], [1], [0, 0, 1, 1], [], []>} : vector<16x16xf32>, vector<16x96xf32>, vector<16x96xf32> -> vector<16x96xf32>
    %c0_12 = arith.constant 0 : index
    %c0_13 = arith.constant 0 : index
    %11 = vector.load %arg9[%c0_12, %c0_13] : memref<1x96xf32, #tpu.memory_space<vmem>>, vector<1x96xf32>
    %12 = vector.broadcast %11 : vector<1x96xf32> to vector<16x96xf32>
    %13 = arith.addf %10, %12 : vector<16x96xf32>
    %14 = vector.shape_cast %13 : vector<16x96xf32> to vector<8x2x96xf32>
    %c0_14 = arith.constant 0 : index
    %c0_15 = arith.constant 0 : index
    %c0_16 = arith.constant 0 : index
    %15 = vector.load %arg17[%c0_14, %c0_15, %c0_16] : memref<8x2x96xf32, #tpu.memory_space<vmem>>, vector<8x2x96xf32>
    tpu.vector_store %arg17[%c0_14, %c0_15, %c0_16], %14 {strides = array<i32>} : memref<8x2x96xf32, #tpu.memory_space<vmem>>, vector<8x2x96xf32>,
    %c0_17 = arith.constant 0 : index
    %c0_18 = arith.constant 0 : index
    %16 = vector.load %arg4[%c0_17, %c0_18] : memref<32x96xf32, #tpu.memory_space<vmem>>, vector<32x96xf32>
    %c0_19 = arith.constant 0 : index
    %c0_20 = arith.constant 0 : index
    %17 = vector.load %arg8[%c0_19, %c0_20] : memref<32x96xf32, #tpu.memory_space<vmem>>, vector<32x96xf32>
    %c0_21 = arith.constant 0 : index
    %c0_22 = arith.constant 0 : index
    %18 = vector.load %arg6[%c0_21, %c0_22] : memref<1x32xf32, #tpu.memory_space<vmem>>, vector<1x32xf32>
    %19 = vector.shape_cast %18 : vector<1x32xf32> to vector<1x32xf32>
    %20 = vector.broadcast %19 : vector<1x32xf32> to vector<2x32xf32>
    %c0_23 = arith.constant 0 : index
    %c0_24 = arith.constant 0 : index
    %21 = vector.load %arg10[%c0_23, %c0_24] : memref<1x32xf32, #tpu.memory_space<vmem>>, vector<1x32xf32>
    %22 = vector.shape_cast %21 : vector<1x32xf32> to vector<1x32xf32>
    %23 = vector.broadcast %22 : vector<1x32xf32> to vector<2x32xf32>
    %c0_25 = arith.constant 0 : index
    %c0_26 = arith.constant 0 : index
    %24 = vector.load %arg1[%c0_25, %c0_26] : memref<2x32xf32, #tpu.memory_space<vmem>>, vector<2x32xf32>
    %c0_27 = arith.constant 0 : index
    %c0_28 = arith.constant 0 : index
    %25 = vector.load %arg2[%c0_27, %c0_28] : memref<2x32xf32, #tpu.memory_space<vmem>>, vector<2x32xf32>
    %c0_i32 = arith.constant 0 : i32
    %c8_i32 = arith.constant 8 : i32
    %26 = arith.addi %c0_i32, %c8_i32 : i32
    %c1_i32 = arith.constant 1 : i32
    %27:2 = scf.for %arg20 = %c0_i32 to %26 step %c1_i32 iter_args(%arg21 = %24, %arg22 = %25) -> (vector<2x32xf32>, vector<2x32xf32>)  : i32 {
      %c7_i32 = arith.constant 7 : i32
      %48 = arith.subi %c7_i32, %arg20 : i32
      %49 = arith.index_cast %arg20 : i32 to index
      %c0_52 = arith.constant 0 : index
      %c0_53 = arith.constant 0 : index
      %50 = vector.load %arg16[%49, %c0_52, %c0_53] : memref<8x2x96xf32, #tpu.memory_space<vmem>>, vector<1x2x96xf32>
      %51 = vector.shape_cast %50 : vector<1x2x96xf32> to vector<2x96xf32>
      %cst_54 = arith.constant dense<0.000000e+00> : vector<2x96xf32>
      %52 = tpu.matmul %arg21, %16, %cst_54 {dimension_numbers = #tpu.dot_dimension_numbers<[1], [0], [0], [1], [0, 0, 1, 1], [], []>} : vector<2x32xf32>, vector<32x96xf32>, vector<2x96xf32> -> vector<2x96xf32>
      %53 = vector.extract_strided_slice %51 {offsets = [0, 0], sizes = [2, 32], strides = [1, 1]} : vector<2x96xf32> to vector<2x32xf32>
      %54 = vector.extract_strided_slice %52 {offsets = [0, 0], sizes = [2, 32], strides = [1, 1]} : vector<2x96xf32> to vector<2x32xf32>
      %55 = arith.addf %53, %54 : vector<2x32xf32>
      %56 = arith.negf %55 : vector<2x32xf32>
      %57 = math.exp %56 : vector<2x32xf32>
      %cst_55 = arith.constant 1.000000e+00 : f32
      %58 = vector.broadcast %cst_55 : f32 to vector<2x32xf32>
      %59 = arith.addf %58, %57 : vector<2x32xf32>
      %60 = arith.divf %58, %59 : vector<2x32xf32>
      %61 = vector.extract_strided_slice %51 {offsets = [0, 32], sizes = [2, 32], strides = [1, 1]} : vector<2x96xf32> to vector<2x32xf32>
      %62 = vector.extract_strided_slice %52 {offsets = [0, 32], sizes = [2, 32], strides = [1, 1]} : vector<2x96xf32> to vector<2x32xf32>
      %63 = arith.addf %61, %62 : vector<2x32xf32>
      %64 = arith.negf %63 : vector<2x32xf32>
      %65 = math.exp %64 : vector<2x32xf32>
      %cst_56 = arith.constant 1.000000e+00 : f32
      %66 = vector.broadcast %cst_56 : f32 to vector<2x32xf32>
      %67 = arith.addf %66, %65 : vector<2x32xf32>
      %68 = arith.divf %66, %67 : vector<2x32xf32>
      %69 = vector.extract_strided_slice %51 {offsets = [0, 64], sizes = [2, 32], strides = [1, 1]} : vector<2x96xf32> to vector<2x32xf32>
      %70 = vector.extract_strided_slice %52 {offsets = [0, 64], sizes = [2, 32], strides = [1, 1]} : vector<2x96xf32> to vector<2x32xf32>
      %71 = arith.addf %70, %20 : vector<2x32xf32>
      %72 = arith.mulf %60, %71 : vector<2x32xf32>
      %73 = arith.addf %69, %72 : vector<2x32xf32>
      %74 = math.tanh %73 : vector<2x32xf32>
      %cst_57 = arith.constant 1.000000e+00 : f32
      %75 = vector.broadcast %cst_57 : f32 to vector<2x32xf32>
      %76 = arith.subf %75, %68 : vector<2x32xf32>
      %77 = arith.mulf %76, %74 : vector<2x32xf32>
      %78 = arith.mulf %68, %arg21 : vector<2x32xf32>
      %79 = arith.addf %77, %78 : vector<2x32xf32>
      %80 = arith.index_cast %48 : i32 to index
      %c0_58 = arith.constant 0 : index
      %c0_59 = arith.constant 0 : index
      %81 = vector.load %arg17[%80, %c0_58, %c0_59] : memref<8x2x96xf32, #tpu.memory_space<vmem>>, vector<1x2x96xf32>
      %82 = vector.shape_cast %81 : vector<1x2x96xf32> to vector<2x96xf32>
      %cst_60 = arith.constant dense<0.000000e+00> : vector<2x96xf32>
      %83 = tpu.matmul %arg22, %17, %cst_60 {dimension_numbers = #tpu.dot_dimension_numbers<[1], [0], [0], [1], [0, 0, 1, 1], [], []>} : vector<2x32xf32>, vector<32x96xf32>, vector<2x96xf32> -> vector<2x96xf32>
      %84 = vector.extract_strided_slice %82 {offsets = [0, 0], sizes = [2, 32], strides = [1, 1]} : vector<2x96xf32> to vector<2x32xf32>
      %85 = vector.extract_strided_slice %83 {offsets = [0, 0], sizes = [2, 32], strides = [1, 1]} : vector<2x96xf32> to vector<2x32xf32>
      %86 = arith.addf %84, %85 : vector<2x32xf32>
      %87 = arith.negf %86 : vector<2x32xf32>
      %88 = math.exp %87 : vector<2x32xf32>
      %cst_61 = arith.constant 1.000000e+00 : f32
      %89 = vector.broadcast %cst_61 : f32 to vector<2x32xf32>
      %90 = arith.addf %89, %88 : vector<2x32xf32>
      %91 = arith.divf %89, %90 : vector<2x32xf32>
      %92 = vector.extract_strided_slice %82 {offsets = [0, 32], sizes = [2, 32], strides = [1, 1]} : vector<2x96xf32> to vector<2x32xf32>
      %93 = vector.extract_strided_slice %83 {offsets = [0, 32], sizes = [2, 32], strides = [1, 1]} : vector<2x96xf32> to vector<2x32xf32>
      %94 = arith.addf %92, %93 : vector<2x32xf32>
      %95 = arith.negf %94 : vector<2x32xf32>
      %96 = math.exp %95 : vector<2x32xf32>
      %cst_62 = arith.constant 1.000000e+00 : f32
      %97 = vector.broadcast %cst_62 : f32 to vector<2x32xf32>
      %98 = arith.addf %97, %96 : vector<2x32xf32>
      %99 = arith.divf %97, %98 : vector<2x32xf32>
      %100 = vector.extract_strided_slice %82 {offsets = [0, 64], sizes = [2, 32], strides = [1, 1]} : vector<2x96xf32> to vector<2x32xf32>
      %101 = vector.extract_strided_slice %83 {offsets = [0, 64], sizes = [2, 32], strides = [1, 1]} : vector<2x96xf32> to vector<2x32xf32>
      %102 = arith.addf %101, %23 : vector<2x32xf32>
      %103 = arith.mulf %91, %102 : vector<2x32xf32>
      %104 = arith.addf %100, %103 : vector<2x32xf32>
      %105 = math.tanh %104 : vector<2x32xf32>
      %cst_63 = arith.constant 1.000000e+00 : f32
      %106 = vector.broadcast %cst_63 : f32 to vector<2x32xf32>
      %107 = arith.subf %106, %99 : vector<2x32xf32>
      %108 = arith.mulf %107, %105 : vector<2x32xf32>
      %109 = arith.mulf %99, %arg22 : vector<2x32xf32>
      %110 = arith.addf %108, %109 : vector<2x32xf32>
      %111 = arith.index_cast %arg20 : i32 to index
      %c0_64 = arith.constant 0 : index
      %c0_65 = arith.constant 0 : index
      %112 = vector.load %arg18[%111, %c0_64, %c0_65] : memref<8x2x32xf32, #tpu.memory_space<vmem>>, vector<1x2x32xf32>
      %113 = vector.shape_cast %112 : vector<1x2x32xf32> to vector<2x32xf32>
      %114 = vector.shape_cast %79 : vector<2x32xf32> to vector<1x2x32xf32>
      tpu.vector_store %arg18[%111, %c0_64, %c0_65], %114 {strides = array<i32>} : memref<8x2x32xf32, #tpu.memory_space<vmem>>, vector<1x2x32xf32>,
      %115 = arith.index_cast %48 : i32 to index
      %c0_66 = arith.constant 0 : index
      %c0_67 = arith.constant 0 : index
      %116 = vector.load %arg19[%115, %c0_66, %c0_67] : memref<8x2x32xf32, #tpu.memory_space<vmem>>, vector<1x2x32xf32>
      %117 = vector.shape_cast %116 : vector<1x2x32xf32> to vector<2x32xf32>
      %118 = vector.shape_cast %110 : vector<2x32xf32> to vector<1x2x32xf32>
      tpu.vector_store %arg19[%115, %c0_66, %c0_67], %118 {strides = array<i32>} : memref<8x2x32xf32, #tpu.memory_space<vmem>>, vector<1x2x32xf32>,
      scf.yield %79, %110 : vector<2x32xf32>, vector<2x32xf32>
    }
    %c8_i32_29 = arith.constant 8 : i32
    %c0_30 = arith.constant 0 : index
    %c0_31 = arith.constant 0 : index
    %c0_32 = arith.constant 0 : index
    %28 = vector.load %arg15[%c0_30, %c0_31, %c0_32] : memref<2x2x32xf32, #tpu.memory_space<vmem>>, vector<1x2x32xf32>
    %29 = vector.shape_cast %28 : vector<1x2x32xf32> to vector<2x32xf32>
    %30 = vector.shape_cast %27#0 : vector<2x32xf32> to vector<1x2x32xf32>
    tpu.vector_store %arg15[%c0_30, %c0_31, %c0_32], %30 {strides = array<i32>} : memref<2x2x32xf32, #tpu.memory_space<vmem>>, vector<1x2x32xf32>,
    %c1 = arith.constant 1 : index
    %c0_33 = arith.constant 0 : index
    %c0_34 = arith.constant 0 : index
    %31 = vector.load %arg15[%c1, %c0_33, %c0_34] : memref<2x2x32xf32, #tpu.memory_space<vmem>>, vector<1x2x32xf32>
    %32 = vector.shape_cast %31 : vector<1x2x32xf32> to vector<2x32xf32>
    %33 = vector.shape_cast %27#1 : vector<2x32xf32> to vector<1x2x32xf32>
    tpu.vector_store %arg15[%c1, %c0_33, %c0_34], %33 {strides = array<i32>} : memref<2x2x32xf32, #tpu.memory_space<vmem>>, vector<1x2x32xf32>,
    %c0_35 = arith.constant 0 : index
    %c0_36 = arith.constant 0 : index
    %c0_37 = arith.constant 0 : index
    %34 = vector.load %arg18[%c0_35, %c0_36, %c0_37] : memref<8x2x32xf32, #tpu.memory_space<vmem>>, vector<8x2x32xf32>
    %35 = vector.shape_cast %34 : vector<8x2x32xf32> to vector<16x32xf32>
    %c0_38 = arith.constant 0 : index
    %c0_39 = arith.constant 0 : index
    %36 = vector.load %arg11[%c0_38, %c0_39] : memref<32x32xf32, #tpu.memory_space<vmem>>, vector<32x32xf32>
    %cst_40 = arith.constant dense<0.000000e+00> : vector<16x32xf32>
    %37 = tpu.matmul %35, %36, %cst_40 {dimension_numbers = #tpu.dot_dimension_numbers<[1], [0], [0], [1], [0, 0, 1, 1], [], []>} : vector<16x32xf32>, vector<32x32xf32>, vector<16x32xf32> -> vector<16x32xf32>
    %c0_41 = arith.constant 0 : index
    %c0_42 = arith.constant 0 : index
    %c0_43 = arith.constant 0 : index
    %38 = vector.load %arg19[%c0_41, %c0_42, %c0_43] : memref<8x2x32xf32, #tpu.memory_space<vmem>>, vector<8x2x32xf32>
    %39 = vector.shape_cast %38 : vector<8x2x32xf32> to vector<16x32xf32>
    %c0_44 = arith.constant 0 : index
    %c0_45 = arith.constant 0 : index
    %40 = vector.load %arg12[%c0_44, %c0_45] : memref<32x32xf32, #tpu.memory_space<vmem>>, vector<32x32xf32>
    %cst_46 = arith.constant dense<0.000000e+00> : vector<16x32xf32>
    %41 = tpu.matmul %39, %40, %cst_46 {dimension_numbers = #tpu.dot_dimension_numbers<[1], [0], [0], [1], [0, 0, 1, 1], [], []>} : vector<16x32xf32>, vector<32x32xf32>, vector<16x32xf32> -> vector<16x32xf32>
    %42 = arith.addf %37, %41 : vector<16x32xf32>
    %c0_47 = arith.constant 0 : index
    %c0_48 = arith.constant 0 : index
    %43 = vector.load %arg13[%c0_47, %c0_48] : memref<1x32xf32, #tpu.memory_space<vmem>>, vector<1x32xf32>
    %44 = vector.broadcast %43 : vector<1x32xf32> to vector<16x32xf32>
    %45 = arith.addf %42, %44 : vector<16x32xf32>
    %46 = vector.shape_cast %45 : vector<16x32xf32> to vector<8x2x32xf32>
    %c0_49 = arith.constant 0 : index
    %c0_50 = arith.constant 0 : index
    %c0_51 = arith.constant 0 : index
    %47 = vector.load %arg14[%c0_49, %c0_50, %c0_51] : memref<8x2x32xf32, #tpu.memory_space<vmem>>, vector<8x2x32xf32>
    tpu.vector_store %arg14[%c0_49, %c0_50, %c0_51], %46 {strides = array<i32>} : memref<8x2x32xf32, #tpu.memory_space<vmem>>, vector<8x2x32xf32>,
    return
  }
}

module attributes {stable_mosaic.version = 11 : i64} {
  func.func @_bigru_proj_kernel(%arg0: memref<6x2x16xf32, #tpu.memory_space<vmem>>, %arg1: memref<2x32xf32, #tpu.memory_space<vmem>>, %arg2: memref<2x32xf32, #tpu.memory_space<vmem>>, %arg3: memref<16x96xf32, #tpu.memory_space<vmem>>, %arg4: memref<32x96xf32, #tpu.memory_space<vmem>>, %arg5: memref<1x96xf32, #tpu.memory_space<vmem>>, %arg6: memref<1x32xf32, #tpu.memory_space<vmem>>, %arg7: memref<16x96xf32, #tpu.memory_space<vmem>>, %arg8: memref<32x96xf32, #tpu.memory_space<vmem>>, %arg9: memref<1x96xf32, #tpu.memory_space<vmem>>, %arg10: memref<1x32xf32, #tpu.memory_space<vmem>>, %arg11: memref<32x32xf32, #tpu.memory_space<vmem>>, %arg12: memref<32x32xf32, #tpu.memory_space<vmem>>, %arg13: memref<1x32xf32, #tpu.memory_space<vmem>>, %arg14: memref<6x2x32xf32, #tpu.memory_space<vmem>>, %arg15: memref<2x2x32xf32, #tpu.memory_space<vmem>>, %arg16: memref<6x2x96xf32, #tpu.memory_space<vmem>>, %arg17: memref<6x2x96xf32, #tpu.memory_space<vmem>>, %arg18: memref<6x2x32xf32, #tpu.memory_space<vmem>>, %arg19: memref<6x2x32xf32, #tpu.memory_space<vmem>>) attributes {dimension_semantics = [], scalar_prefetch = 0 : i64, scratch_operands = 4 : i64, tpu.core_type = #tpu.core_type<tc>} {
    %c0 = arith.constant 0 : index
    %c0_0 = arith.constant 0 : index
    %c0_1 = arith.constant 0 : index
    %0 = vector.load %arg0[%c0, %c0_0, %c0_1] : memref<6x2x16xf32, #tpu.memory_space<vmem>>, vector<6x2x16xf32>
    %1 = vector.shape_cast %0 : vector<6x2x16xf32> to vector<12x16xf32>
    %c0_2 = arith.constant 0 : index
    %c0_3 = arith.constant 0 : index
    %2 = vector.load %arg3[%c0_2, %c0_3] : memref<16x96xf32, #tpu.memory_space<vmem>>, vector<16x96xf32>
    %cst = arith.constant dense<0.000000e+00> : vector<12x96xf32>
    %3 = tpu.matmul %1, %2, %cst {dimension_numbers = #tpu.dot_dimension_numbers<[1], [0], [0], [1], [0, 0, 1, 1], [], []>} : vector<12x16xf32>, vector<16x96xf32>, vector<12x96xf32> -> vector<12x96xf32>
    %c0_4 = arith.constant 0 : index
    %c0_5 = arith.constant 0 : index
    %4 = vector.load %arg5[%c0_4, %c0_5] : memref<1x96xf32, #tpu.memory_space<vmem>>, vector<1x96xf32>
    %5 = vector.broadcast %4 : vector<1x96xf32> to vector<12x96xf32>
    %6 = arith.addf %3, %5 : vector<12x96xf32>
    %7 = vector.shape_cast %6 : vector<12x96xf32> to vector<6x2x96xf32>
    %c0_6 = arith.constant 0 : index
    %c0_7 = arith.constant 0 : index
    %c0_8 = arith.constant 0 : index
    %8 = vector.load %arg16[%c0_6, %c0_7, %c0_8] : memref<6x2x96xf32, #tpu.memory_space<vmem>>, vector<6x2x96xf32>
    tpu.vector_store %arg16[%c0_6, %c0_7, %c0_8], %7 {strides = array<i32>} : memref<6x2x96xf32, #tpu.memory_space<vmem>>, vector<6x2x96xf32>,
    %c0_9 = arith.constant 0 : index
    %c0_10 = arith.constant 0 : index
    %9 = vector.load %arg7[%c0_9, %c0_10] : memref<16x96xf32, #tpu.memory_space<vmem>>, vector<16x96xf32>
    %cst_11 = arith.constant dense<0.000000e+00> : vector<12x96xf32>
    %10 = tpu.matmul %1, %9, %cst_11 {dimension_numbers = #tpu.dot_dimension_numbers<[1], [0], [0], [1], [0, 0, 1, 1], [], []>} : vector<12x16xf32>, vector<16x96xf32>, vector<12x96xf32> -> vector<12x96xf32>
    %c0_12 = arith.constant 0 : index
    %c0_13 = arith.constant 0 : index
    %11 = vector.load %arg9[%c0_12, %c0_13] : memref<1x96xf32, #tpu.memory_space<vmem>>, vector<1x96xf32>
    %12 = vector.broadcast %11 : vector<1x96xf32> to vector<12x96xf32>
    %13 = arith.addf %10, %12 : vector<12x96xf32>
    %14 = vector.shape_cast %13 : vector<12x96xf32> to vector<6x2x96xf32>
    %c0_14 = arith.constant 0 : index
    %c0_15 = arith.constant 0 : index
    %c0_16 = arith.constant 0 : index
    %15 = vector.load %arg17[%c0_14, %c0_15, %c0_16] : memref<6x2x96xf32, #tpu.memory_space<vmem>>, vector<6x2x96xf32>
    tpu.vector_store %arg17[%c0_14, %c0_15, %c0_16], %14 {strides = array<i32>} : memref<6x2x96xf32, #tpu.memory_space<vmem>>, vector<6x2x96xf32>,
    %c0_17 = arith.constant 0 : index
    %c0_18 = arith.constant 0 : index
    %16 = vector.load %arg4[%c0_17, %c0_18] : memref<32x96xf32, #tpu.memory_space<vmem>>, vector<32x96xf32>
    %c0_19 = arith.constant 0 : index
    %c0_20 = arith.constant 0 : index
    %17 = vector.load %arg8[%c0_19, %c0_20] : memref<32x96xf32, #tpu.memory_space<vmem>>, vector<32x96xf32>
    %c0_21 = arith.constant 0 : index
    %c0_22 = arith.constant 0 : index
    %18 = vector.load %arg6[%c0_21, %c0_22] : memref<1x32xf32, #tpu.memory_space<vmem>>, vector<1x32xf32>
    %19 = vector.shape_cast %18 : vector<1x32xf32> to vector<1x32xf32>
    %20 = vector.broadcast %19 : vector<1x32xf32> to vector<2x32xf32>
    %c0_23 = arith.constant 0 : index
    %c0_24 = arith.constant 0 : index
    %21 = vector.load %arg10[%c0_23, %c0_24] : memref<1x32xf32, #tpu.memory_space<vmem>>, vector<1x32xf32>
    %22 = vector.shape_cast %21 : vector<1x32xf32> to vector<1x32xf32>
    %23 = vector.broadcast %22 : vector<1x32xf32> to vector<2x32xf32>
    %c0_25 = arith.constant 0 : index
    %c0_26 = arith.constant 0 : index
    %24 = vector.load %arg1[%c0_25, %c0_26] : memref<2x32xf32, #tpu.memory_space<vmem>>, vector<2x32xf32>
    %c0_27 = arith.constant 0 : index
    %c0_28 = arith.constant 0 : index
    %25 = vector.load %arg2[%c0_27, %c0_28] : memref<2x32xf32, #tpu.memory_space<vmem>>, vector<2x32xf32>
    %c0_i32 = arith.constant 0 : i32
    %c6_i32 = arith.constant 6 : i32
    %26 = arith.addi %c0_i32, %c6_i32 : i32
    %c1_i32 = arith.constant 1 : i32
    %27:2 = scf.for %arg20 = %c0_i32 to %26 step %c1_i32 iter_args(%arg21 = %24, %arg22 = %25) -> (vector<2x32xf32>, vector<2x32xf32>)  : i32 {
      %c5_i32 = arith.constant 5 : i32
      %48 = arith.subi %c5_i32, %arg20 : i32
      %49 = arith.index_cast %arg20 : i32 to index
      %c0_52 = arith.constant 0 : index
      %c0_53 = arith.constant 0 : index
      %50 = vector.load %arg16[%49, %c0_52, %c0_53] : memref<6x2x96xf32, #tpu.memory_space<vmem>>, vector<1x2x96xf32>
      %51 = vector.shape_cast %50 : vector<1x2x96xf32> to vector<2x96xf32>
      %cst_54 = arith.constant dense<0.000000e+00> : vector<2x96xf32>
      %52 = tpu.matmul %arg21, %16, %cst_54 {dimension_numbers = #tpu.dot_dimension_numbers<[1], [0], [0], [1], [0, 0, 1, 1], [], []>} : vector<2x32xf32>, vector<32x96xf32>, vector<2x96xf32> -> vector<2x96xf32>
      %53 = vector.extract_strided_slice %51 {offsets = [0, 0], sizes = [2, 32], strides = [1, 1]} : vector<2x96xf32> to vector<2x32xf32>
      %54 = vector.extract_strided_slice %52 {offsets = [0, 0], sizes = [2, 32], strides = [1, 1]} : vector<2x96xf32> to vector<2x32xf32>
      %55 = arith.addf %53, %54 : vector<2x32xf32>
      %56 = arith.negf %55 : vector<2x32xf32>
      %57 = math.exp %56 : vector<2x32xf32>
      %cst_55 = arith.constant 1.000000e+00 : f32
      %58 = vector.broadcast %cst_55 : f32 to vector<2x32xf32>
      %59 = arith.addf %58, %57 : vector<2x32xf32>
      %60 = arith.divf %58, %59 : vector<2x32xf32>
      %61 = vector.extract_strided_slice %51 {offsets = [0, 32], sizes = [2, 32], strides = [1, 1]} : vector<2x96xf32> to vector<2x32xf32>
      %62 = vector.extract_strided_slice %52 {offsets = [0, 32], sizes = [2, 32], strides = [1, 1]} : vector<2x96xf32> to vector<2x32xf32>
      %63 = arith.addf %61, %62 : vector<2x32xf32>
      %64 = arith.negf %63 : vector<2x32xf32>
      %65 = math.exp %64 : vector<2x32xf32>
      %cst_56 = arith.constant 1.000000e+00 : f32
      %66 = vector.broadcast %cst_56 : f32 to vector<2x32xf32>
      %67 = arith.addf %66, %65 : vector<2x32xf32>
      %68 = arith.divf %66, %67 : vector<2x32xf32>
      %69 = vector.extract_strided_slice %51 {offsets = [0, 64], sizes = [2, 32], strides = [1, 1]} : vector<2x96xf32> to vector<2x32xf32>
      %70 = vector.extract_strided_slice %52 {offsets = [0, 64], sizes = [2, 32], strides = [1, 1]} : vector<2x96xf32> to vector<2x32xf32>
      %71 = arith.addf %70, %20 : vector<2x32xf32>
      %72 = arith.mulf %60, %71 : vector<2x32xf32>
      %73 = arith.addf %69, %72 : vector<2x32xf32>
      %74 = math.tanh %73 : vector<2x32xf32>
      %cst_57 = arith.constant 1.000000e+00 : f32
      %75 = vector.broadcast %cst_57 : f32 to vector<2x32xf32>
      %76 = arith.subf %75, %68 : vector<2x32xf32>
      %77 = arith.mulf %76, %74 : vector<2x32xf32>
      %78 = arith.mulf %68, %arg21 : vector<2x32xf32>
      %79 = arith.addf %77, %78 : vector<2x32xf32>
      %80 = arith.index_cast %48 : i32 to index
      %c0_58 = arith.constant 0 : index
      %c0_59 = arith.constant 0 : index
      %81 = vector.load %arg17[%80, %c0_58, %c0_59] : memref<6x2x96xf32, #tpu.memory_space<vmem>>, vector<1x2x96xf32>
      %82 = vector.shape_cast %81 : vector<1x2x96xf32> to vector<2x96xf32>
      %cst_60 = arith.constant dense<0.000000e+00> : vector<2x96xf32>
      %83 = tpu.matmul %arg22, %17, %cst_60 {dimension_numbers = #tpu.dot_dimension_numbers<[1], [0], [0], [1], [0, 0, 1, 1], [], []>} : vector<2x32xf32>, vector<32x96xf32>, vector<2x96xf32> -> vector<2x96xf32>
      %84 = vector.extract_strided_slice %82 {offsets = [0, 0], sizes = [2, 32], strides = [1, 1]} : vector<2x96xf32> to vector<2x32xf32>
      %85 = vector.extract_strided_slice %83 {offsets = [0, 0], sizes = [2, 32], strides = [1, 1]} : vector<2x96xf32> to vector<2x32xf32>
      %86 = arith.addf %84, %85 : vector<2x32xf32>
      %87 = arith.negf %86 : vector<2x32xf32>
      %88 = math.exp %87 : vector<2x32xf32>
      %cst_61 = arith.constant 1.000000e+00 : f32
      %89 = vector.broadcast %cst_61 : f32 to vector<2x32xf32>
      %90 = arith.addf %89, %88 : vector<2x32xf32>
      %91 = arith.divf %89, %90 : vector<2x32xf32>
      %92 = vector.extract_strided_slice %82 {offsets = [0, 32], sizes = [2, 32], strides = [1, 1]} : vector<2x96xf32> to vector<2x32xf32>
      %93 = vector.extract_strided_slice %83 {offsets = [0, 32], sizes = [2, 32], strides = [1, 1]} : vector<2x96xf32> to vector<2x32xf32>
      %94 = arith.addf %92, %93 : vector<2x32xf32>
      %95 = arith.negf %94 : vector<2x32xf32>
      %96 = math.exp %95 : vector<2x32xf32>
      %cst_62 = arith.constant 1.000000e+00 : f32
      %97 = vector.broadcast %cst_62 : f32 to vector<2x32xf32>
      %98 = arith.addf %97, %96 : vector<2x32xf32>
      %99 = arith.divf %97, %98 : vector<2x32xf32>
      %100 = vector.extract_strided_slice %82 {offsets = [0, 64], sizes = [2, 32], strides = [1, 1]} : vector<2x96xf32> to vector<2x32xf32>
      %101 = vector.extract_strided_slice %83 {offsets = [0, 64], sizes = [2, 32], strides = [1, 1]} : vector<2x96xf32> to vector<2x32xf32>
      %102 = arith.addf %101, %23 : vector<2x32xf32>
      %103 = arith.mulf %91, %102 : vector<2x32xf32>
      %104 = arith.addf %100, %103 : vector<2x32xf32>
      %105 = math.tanh %104 : vector<2x32xf32>
      %cst_63 = arith.constant 1.000000e+00 : f32
      %106 = vector.broadcast %cst_63 : f32 to vector<2x32xf32>
      %107 = arith.subf %106, %99 : vector<2x32xf32>
      %108 = arith.mulf %107, %105 : vector<2x32xf32>
      %109 = arith.mulf %99, %arg22 : vector<2x32xf32>
      %110 = arith.addf %108, %109 : vector<2x32xf32>
      %111 = arith.index_cast %arg20 : i32 to index
      %c0_64 = arith.constant 0 : index
      %c0_65 = arith.constant 0 : index
      %112 = vector.load %arg18[%111, %c0_64, %c0_65] : memref<6x2x32xf32, #tpu.memory_space<vmem>>, vector<1x2x32xf32>
      %113 = vector.shape_cast %112 : vector<1x2x32xf32> to vector<2x32xf32>
      %114 = vector.shape_cast %79 : vector<2x32xf32> to vector<1x2x32xf32>
      tpu.vector_store %arg18[%111, %c0_64, %c0_65], %114 {strides = array<i32>} : memref<6x2x32xf32, #tpu.memory_space<vmem>>, vector<1x2x32xf32>,
      %115 = arith.index_cast %48 : i32 to index
      %c0_66 = arith.constant 0 : index
      %c0_67 = arith.constant 0 : index
      %116 = vector.load %arg19[%115, %c0_66, %c0_67] : memref<6x2x32xf32, #tpu.memory_space<vmem>>, vector<1x2x32xf32>
      %117 = vector.shape_cast %116 : vector<1x2x32xf32> to vector<2x32xf32>
      %118 = vector.shape_cast %110 : vector<2x32xf32> to vector<1x2x32xf32>
      tpu.vector_store %arg19[%115, %c0_66, %c0_67], %118 {strides = array<i32>} : memref<6x2x32xf32, #tpu.memory_space<vmem>>, vector<1x2x32xf32>,
      scf.yield %79, %110 : vector<2x32xf32>, vector<2x32xf32>
    }
    %c6_i32_29 = arith.constant 6 : i32
    %c0_30 = arith.constant 0 : index
    %c0_31 = arith.constant 0 : index
    %c0_32 = arith.constant 0 : index
    %28 = vector.load %arg15[%c0_30, %c0_31, %c0_32] : memref<2x2x32xf32, #tpu.memory_space<vmem>>, vector<1x2x32xf32>
    %29 = vector.shape_cast %28 : vector<1x2x32xf32> to vector<2x32xf32>
    %30 = vector.shape_cast %27#0 : vector<2x32xf32> to vector<1x2x32xf32>
    tpu.vector_store %arg15[%c0_30, %c0_31, %c0_32], %30 {strides = array<i32>} : memref<2x2x32xf32, #tpu.memory_space<vmem>>, vector<1x2x32xf32>,
    %c1 = arith.constant 1 : index
    %c0_33 = arith.constant 0 : index
    %c0_34 = arith.constant 0 : index
    %31 = vector.load %arg15[%c1, %c0_33, %c0_34] : memref<2x2x32xf32, #tpu.memory_space<vmem>>, vector<1x2x32xf32>
    %32 = vector.shape_cast %31 : vector<1x2x32xf32> to vector<2x32xf32>
    %33 = vector.shape_cast %27#1 : vector<2x32xf32> to vector<1x2x32xf32>
    tpu.vector_store %arg15[%c1, %c0_33, %c0_34], %33 {strides = array<i32>} : memref<2x2x32xf32, #tpu.memory_space<vmem>>, vector<1x2x32xf32>,
    %c0_35 = arith.constant 0 : index
    %c0_36 = arith.constant 0 : index
    %c0_37 = arith.constant 0 : index
    %34 = vector.load %arg18[%c0_35, %c0_36, %c0_37] : memref<6x2x32xf32, #tpu.memory_space<vmem>>, vector<6x2x32xf32>
    %35 = vector.shape_cast %34 : vector<6x2x32xf32> to vector<12x32xf32>
    %c0_38 = arith.constant 0 : index
    %c0_39 = arith.constant 0 : index
    %36 = vector.load %arg11[%c0_38, %c0_39] : memref<32x32xf32, #tpu.memory_space<vmem>>, vector<32x32xf32>
    %cst_40 = arith.constant dense<0.000000e+00> : vector<12x32xf32>
    %37 = tpu.matmul %35, %36, %cst_40 {dimension_numbers = #tpu.dot_dimension_numbers<[1], [0], [0], [1], [0, 0, 1, 1], [], []>} : vector<12x32xf32>, vector<32x32xf32>, vector<12x32xf32> -> vector<12x32xf32>
    %c0_41 = arith.constant 0 : index
    %c0_42 = arith.constant 0 : index
    %c0_43 = arith.constant 0 : index
    %38 = vector.load %arg19[%c0_41, %c0_42, %c0_43] : memref<6x2x32xf32, #tpu.memory_space<vmem>>, vector<6x2x32xf32>
    %39 = vector.shape_cast %38 : vector<6x2x32xf32> to vector<12x32xf32>
    %c0_44 = arith.constant 0 : index
    %c0_45 = arith.constant 0 : index
    %40 = vector.load %arg12[%c0_44, %c0_45] : memref<32x32xf32, #tpu.memory_space<vmem>>, vector<32x32xf32>
    %cst_46 = arith.constant dense<0.000000e+00> : vector<12x32xf32>
    %41 = tpu.matmul %39, %40, %cst_46 {dimension_numbers = #tpu.dot_dimension_numbers<[1], [0], [0], [1], [0, 0, 1, 1], [], []>} : vector<12x32xf32>, vector<32x32xf32>, vector<12x32xf32> -> vector<12x32xf32>
    %42 = arith.addf %37, %41 : vector<12x32xf32>
    %c0_47 = arith.constant 0 : index
    %c0_48 = arith.constant 0 : index
    %43 = vector.load %arg13[%c0_47, %c0_48] : memref<1x32xf32, #tpu.memory_space<vmem>>, vector<1x32xf32>
    %44 = vector.broadcast %43 : vector<1x32xf32> to vector<12x32xf32>
    %45 = arith.addf %42, %44 : vector<12x32xf32>
    %46 = vector.shape_cast %45 : vector<12x32xf32> to vector<6x2x32xf32>
    %c0_49 = arith.constant 0 : index
    %c0_50 = arith.constant 0 : index
    %c0_51 = arith.constant 0 : index
    %47 = vector.load %arg14[%c0_49, %c0_50, %c0_51] : memref<6x2x32xf32, #tpu.memory_space<vmem>>, vector<6x2x32xf32>
    tpu.vector_store %arg14[%c0_49, %c0_50, %c0_51], %46 {strides = array<i32>} : memref<6x2x32xf32, #tpu.memory_space<vmem>>, vector<6x2x32xf32>,
    return
  }
}

module attributes {stable_mosaic.version = 11 : i64} {
  func.func @_attention_output_kernel(%arg0: memref<6x2x32xf32, #tpu.memory_space<vmem>>, %arg1: memref<2x8x32xf32, #tpu.memory_space<vmem>>, %arg2: memref<2x8x32xf32, #tpu.memory_space<vmem>>, %arg3: memref<2x8xf32, #tpu.memory_space<vmem>>, %arg4: memref<1x32xf32, #tpu.memory_space<vmem>>, %arg5: memref<32x32xf32, #tpu.memory_space<vmem>>, %arg6: memref<1x32xf32, #tpu.memory_space<vmem>>, %arg7: memref<32x32xf32, #tpu.memory_space<vmem>>, %arg8: memref<1x32xf32, #tpu.memory_space<vmem>>, %arg9: memref<1x32xf32, #tpu.memory_space<vmem>>, %arg10: memref<1x1xf32, #tpu.memory_space<vmem>>, %arg11: memref<32x32xf32, #tpu.memory_space<vmem>>, %arg12: memref<1x32xf32, #tpu.memory_space<vmem>>, %arg13: memref<32x32xf32, #tpu.memory_space<vmem>>, %arg14: memref<1x32xf32, #tpu.memory_space<vmem>>, %arg15: memref<1x1xf32, #tpu.memory_space<vmem>>, %arg16: memref<32x32xf32, #tpu.memory_space<vmem>>, %arg17: memref<1x32xf32, #tpu.memory_space<vmem>>, %arg18: memref<32x32xf32, #tpu.memory_space<vmem>>, %arg19: memref<1x32xf32, #tpu.memory_space<vmem>>, %arg20: memref<32x32xf32, #tpu.memory_space<vmem>>, %arg21: memref<1x32xf32, #tpu.memory_space<vmem>>, %arg22: memref<32x3xf32, #tpu.memory_space<vmem>>, %arg23: memref<1x3xf32, #tpu.memory_space<vmem>>, %arg24: memref<2x3xf32, #tpu.memory_space<vmem>>, %arg25: memref<6x2x32xf32, #tpu.memory_space<vmem>>) attributes {dimension_semantics = [], scalar_prefetch = 0 : i64, scratch_operands = 1 : i64, tpu.core_type = #tpu.core_type<tc>} {
    %c0 = arith.constant 0 : index
    %c0_0 = arith.constant 0 : index
    %0 = vector.load %arg3[%c0, %c0_0] : memref<2x8xf32, #tpu.memory_space<vmem>>, vector<2x8xf32>
    %c0_1 = arith.constant 0 : index
    %c0_2 = arith.constant 0 : index
    %c0_3 = arith.constant 0 : index
    %1 = vector.load %arg1[%c0_1, %c0_2, %c0_3] : memref<2x8x32xf32, #tpu.memory_space<vmem>>, vector<2x8x32xf32>
    %2 = vector.shape_cast %1 : vector<2x8x32xf32> to vector<16x32xf32>
    %c0_4 = arith.constant 0 : index
    %c0_5 = arith.constant 0 : index
    %3 = vector.load %arg5[%c0_4, %c0_5] : memref<32x32xf32, #tpu.memory_space<vmem>>, vector<32x32xf32>
    %cst = arith.constant dense<0.000000e+00> : vector<16x32xf32>
    %4 = tpu.matmul %2, %3, %cst {dimension_numbers = #tpu.dot_dimension_numbers<[1], [0], [0], [1], [0, 0, 1, 1], [], []>} : vector<16x32xf32>, vector<32x32xf32>, vector<16x32xf32> -> vector<16x32xf32>
    %c0_6 = arith.constant 0 : index
    %c0_7 = arith.constant 0 : index
    %5 = vector.load %arg6[%c0_6, %c0_7] : memref<1x32xf32, #tpu.memory_space<vmem>>, vector<1x32xf32>
    %6 = vector.broadcast %5 : vector<1x32xf32> to vector<16x32xf32>
    %7 = arith.addf %4, %6 : vector<16x32xf32>
    %8 = vector.shape_cast %7 : vector<16x32xf32> to vector<2x8x32xf32>
    %c0_8 = arith.constant 0 : index
    %c0_9 = arith.constant 0 : index
    %9 = vector.load %arg7[%c0_8, %c0_9] : memref<32x32xf32, #tpu.memory_space<vmem>>, vector<32x32xf32>
    %cst_10 = arith.constant dense<0.000000e+00> : vector<16x32xf32>
    %10 = tpu.matmul %2, %9, %cst_10 {dimension_numbers = #tpu.dot_dimension_numbers<[1], [0], [0], [1], [0, 0, 1, 1], [], []>} : vector<16x32xf32>, vector<32x32xf32>, vector<16x32xf32> -> vector<16x32xf32>
    %c0_11 = arith.constant 0 : index
    %c0_12 = arith.constant 0 : index
    %11 = vector.load %arg8[%c0_11, %c0_12] : memref<1x32xf32, #tpu.memory_space<vmem>>, vector<1x32xf32>
    %12 = vector.broadcast %11 : vector<1x32xf32> to vector<16x32xf32>
    %13 = arith.addf %10, %12 : vector<16x32xf32>
    %14 = vector.shape_cast %13 : vector<16x32xf32> to vector<2x8x32xf32>
    %c0_13 = arith.constant 0 : index
    %c0_14 = arith.constant 0 : index
    %c0_15 = arith.constant 0 : index
    %15 = vector.load %arg0[%c0_13, %c0_14, %c0_15] : memref<6x2x32xf32, #tpu.memory_space<vmem>>, vector<6x2x32xf32>
    %16 = vector.shape_cast %15 : vector<6x2x32xf32> to vector<12x32xf32>
    %c0_16 = arith.constant 0 : index
    %c0_17 = arith.constant 0 : index
    %17 = vector.load %arg11[%c0_16, %c0_17] : memref<32x32xf32, #tpu.memory_space<vmem>>, vector<32x32xf32>
    %cst_18 = arith.constant dense<0.000000e+00> : vector<12x32xf32>
    %18 = tpu.matmul %16, %17, %cst_18 {dimension_numbers = #tpu.dot_dimension_numbers<[1], [0], [0], [1], [0, 0, 1, 1], [], []>} : vector<12x32xf32>, vector<32x32xf32>, vector<12x32xf32> -> vector<12x32xf32>
    %c0_19 = arith.constant 0 : index
    %c0_20 = arith.constant 0 : index
    %19 = vector.load %arg12[%c0_19, %c0_20] : memref<1x32xf32, #tpu.memory_space<vmem>>, vector<1x32xf32>
    %20 = vector.broadcast %19 : vector<1x32xf32> to vector<12x32xf32>
    %21 = arith.addf %18, %20 : vector<12x32xf32>
    %22 = vector.shape_cast %21 : vector<12x32xf32> to vector<6x2x32xf32>
    %c0_21 = arith.constant 0 : index
    %c0_22 = arith.constant 0 : index
    %c0_23 = arith.constant 0 : index
    %23 = vector.load %arg25[%c0_21, %c0_22, %c0_23] : memref<6x2x32xf32, #tpu.memory_space<vmem>>, vector<6x2x32xf32>
    tpu.vector_store %arg25[%c0_21, %c0_22, %c0_23], %22 {strides = array<i32>} : memref<6x2x32xf32, #tpu.memory_space<vmem>>, vector<6x2x32xf32>,
    %c0_24 = arith.constant 0 : index
    %c0_25 = arith.constant 0 : index
    %24 = vector.load %arg9[%c0_24, %c0_25] : memref<1x32xf32, #tpu.memory_space<vmem>>, vector<1x32xf32>
    %25 = vector.shape_cast %24 : vector<1x32xf32> to vector<1x1x32xf32>
    %26 = vector.broadcast %25 : vector<1x1x32xf32> to vector<2x8x32xf32>
    %c0_26 = arith.constant 0 : index
    %c0_27 = arith.constant 0 : index
    %27 = vector.load %arg14[%c0_26, %c0_27] : memref<1x32xf32, #tpu.memory_space<vmem>>, vector<1x32xf32>
    %28 = vector.shape_cast %27 : vector<1x32xf32> to vector<1x1x32xf32>
    %29 = vector.broadcast %28 : vector<1x1x32xf32> to vector<2x8x32xf32>
    %c0_28 = arith.constant 0 : index
    %c0_29 = arith.constant 0 : index
    %30 = vector.load %arg10[%c0_28, %c0_29] : memref<1x1xf32, #tpu.memory_space<vmem>>, vector<1x1xf32>
    %c0_30 = arith.constant 0 : index
    %c0_31 = arith.constant 0 : index
    %31 = vector.load %arg15[%c0_30, %c0_31] : memref<1x1xf32, #tpu.memory_space<vmem>>, vector<1x1xf32>
    %c0_32 = arith.constant 0 : index
    %c0_33 = arith.constant 0 : index
    %32 = vector.load %arg4[%c0_32, %c0_33] : memref<1x32xf32, #tpu.memory_space<vmem>>, vector<1x32xf32>
    %33 = vector.shape_cast %32 : vector<1x32xf32> to vector<1x1x32xf32>
    %34 = vector.broadcast %33 : vector<1x1x32xf32> to vector<2x8x32xf32>
    %35 = arith.addf %8, %34 : vector<2x8x32xf32>
    %36 = math.tanh %35 : vector<2x8x32xf32>
    %37 = arith.mulf %36, %26 : vector<2x8x32xf32>
    %cst_34 = arith.constant dense<0.000000e+00> : vector<2x8xf32>
    %38 = vector.multi_reduction <add>, %37, %cst_34 [2] : vector<2x8x32xf32> to vector<2x8xf32>
    %39 = vector.broadcast %30 : vector<1x1xf32> to vector<2x8xf32>
    %40 = arith.addf %38, %39 : vector<2x8xf32>
    %cst_35 = arith.constant dense<0xFF800000> : vector<2xf32>
    %41 = vector.multi_reduction <maximumf>, %40, %cst_35 [1] : vector<2x8xf32> to vector<2xf32>
    %42 = vector.shape_cast %41 : vector<2xf32> to vector<2x1xf32>
    %43 = vector.broadcast %42 : vector<2x1xf32> to vector<2x8xf32>
    %44 = arith.subf %40, %43 : vector<2x8xf32>
    %45 = math.exp %44 : vector<2x8xf32>
    %cst_36 = arith.constant dense<0.000000e+00> : vector<2xf32>
    %46 = vector.multi_reduction <add>, %45, %cst_36 [1] : vector<2x8xf32> to vector<2xf32>
    %47 = vector.shape_cast %46 : vector<2xf32> to vector<2x1xf32>
    %48 = tpu.reciprocal %47 {approx = true} : vector<2x1xf32> -> vector<2x1xf32>
    %49 = vector.broadcast %48 : vector<2x1xf32> to vector<2x8xf32>
    %50 = arith.mulf %45, %49 : vector<2x8xf32>
    %51 = arith.mulf %50, %0 : vector<2x8xf32>
    %cst_37 = arith.constant dense<0.000000e+00> : vector<2xf32>
    %52 = vector.multi_reduction <add>, %51, %cst_37 [1] : vector<2x8xf32> to vector<2xf32>
    %53 = vector.shape_cast %52 : vector<2xf32> to vector<2x1xf32>
    %54 = tpu.reciprocal %53 {approx = true} : vector<2x1xf32> -> vector<2x1xf32>
    %55 = vector.broadcast %54 : vector<2x1xf32> to vector<2x8xf32>
    %56 = arith.mulf %51, %55 : vector<2x8xf32>
    %57 = vector.shape_cast %56 : vector<2x8xf32> to vector<2x8x1xf32>
    %c0_38 = arith.constant 0 : index
    %c0_39 = arith.constant 0 : index
    %c0_40 = arith.constant 0 : index
    %58 = vector.load %arg2[%c0_38, %c0_39, %c0_40] : memref<2x8x32xf32, #tpu.memory_space<vmem>>, vector<2x8x32xf32>
    %59 = vector.broadcast %57 : vector<2x8x1xf32> to vector<2x8x32xf32>
    %60 = arith.mulf %59, %58 : vector<2x8x32xf32>
    %cst_41 = arith.constant dense<0.000000e+00> : vector<2x32xf32>
    %61 = vector.multi_reduction <add>, %60, %cst_41 [1] : vector<2x8x32xf32> to vector<2x32xf32>
    %c0_42 = arith.constant 0 : index
    %c0_43 = arith.constant 0 : index
    %62 = vector.load %arg13[%c0_42, %c0_43] : memref<32x32xf32, #tpu.memory_space<vmem>>, vector<32x32xf32>
    %c0_44 = arith.constant 0 : index
    %c0_45 = arith.constant 0 : index
    %63 = vector.load %arg16[%c0_44, %c0_45] : memref<32x32xf32, #tpu.memory_space<vmem>>, vector<32x32xf32>
    %c0_46 = arith.constant 0 : index
    %c0_47 = arith.constant 0 : index
    %64 = vector.load %arg17[%c0_46, %c0_47] : memref<1x32xf32, #tpu.memory_space<vmem>>, vector<1x32xf32>
    %65 = vector.shape_cast %64 : vector<1x32xf32> to vector<1x32xf32>
    %66 = vector.broadcast %65 : vector<1x32xf32> to vector<2x32xf32>
    %c0_i32 = arith.constant 0 : i32
    %c6_i32 = arith.constant 6 : i32
    %67 = arith.addi %c0_i32, %c6_i32 : i32
    %c1_i32 = arith.constant 1 : i32
    %68 = scf.for %arg26 = %c0_i32 to %67 step %c1_i32 iter_args(%arg27 = %61) -> (vector<2x32xf32>)  : i32 {
      %89 = arith.index_cast %arg26 : i32 to index
      %c0_68 = arith.constant 0 : index
      %c0_69 = arith.constant 0 : index
      %90 = vector.load %arg25[%89, %c0_68, %c0_69] : memref<6x2x32xf32, #tpu.memory_space<vmem>>, vector<1x2x32xf32>
      %91 = vector.shape_cast %90 : vector<1x2x32xf32> to vector<2x32xf32>
      %cst_70 = arith.constant dense<0.000000e+00> : vector<2x32xf32>
      %92 = tpu.matmul %arg27, %62, %cst_70 {dimension_numbers = #tpu.dot_dimension_numbers<[1], [0], [0], [1], [0, 0, 1, 1], [], []>} : vector<2x32xf32>, vector<32x32xf32>, vector<2x32xf32> -> vector<2x32xf32>
      %93 = arith.addf %91, %92 : vector<2x32xf32>
      %94 = vector.shape_cast %93 : vector<2x32xf32> to vector<2x1x32xf32>
      %95 = vector.broadcast %94 : vector<2x1x32xf32> to vector<2x8x32xf32>
      %96 = arith.addf %14, %95 : vector<2x8x32xf32>
      %97 = math.tanh %96 : vector<2x8x32xf32>
      %98 = arith.mulf %97, %29 : vector<2x8x32xf32>
      %cst_71 = arith.constant dense<0.000000e+00> : vector<2x8xf32>
      %99 = vector.multi_reduction <add>, %98, %cst_71 [2] : vector<2x8x32xf32> to vector<2x8xf32>
      %100 = vector.broadcast %31 : vector<1x1xf32> to vector<2x8xf32>
      %101 = arith.addf %99, %100 : vector<2x8xf32>
      %cst_72 = arith.constant dense<0xFF800000> : vector<2xf32>
      %102 = vector.multi_reduction <maximumf>, %101, %cst_72 [1] : vector<2x8xf32> to vector<2xf32>
      %103 = vector.shape_cast %102 : vector<2xf32> to vector<2x1xf32>
      %104 = vector.broadcast %103 : vector<2x1xf32> to vector<2x8xf32>
      %105 = arith.subf %101, %104 : vector<2x8xf32>
      %106 = math.exp %105 : vector<2x8xf32>
      %cst_73 = arith.constant dense<0.000000e+00> : vector<2xf32>
      %107 = vector.multi_reduction <add>, %106, %cst_73 [1] : vector<2x8xf32> to vector<2xf32>
      %108 = vector.shape_cast %107 : vector<2xf32> to vector<2x1xf32>
      %109 = tpu.reciprocal %108 {approx = true} : vector<2x1xf32> -> vector<2x1xf32>
      %110 = vector.broadcast %109 : vector<2x1xf32> to vector<2x8xf32>
      %111 = arith.mulf %106, %110 : vector<2x8xf32>
      %112 = arith.mulf %111, %0 : vector<2x8xf32>
      %cst_74 = arith.constant dense<0.000000e+00> : vector<2xf32>
      %113 = vector.multi_reduction <add>, %112, %cst_74 [1] : vector<2x8xf32> to vector<2xf32>
      %114 = vector.shape_cast %113 : vector<2xf32> to vector<2x1xf32>
      %115 = tpu.reciprocal %114 {approx = true} : vector<2x1xf32> -> vector<2x1xf32>
      %116 = vector.broadcast %115 : vector<2x1xf32> to vector<2x8xf32>
      %117 = arith.mulf %112, %116 : vector<2x8xf32>
      %118 = vector.shape_cast %117 : vector<2x8xf32> to vector<2x8x1xf32>
      %119 = vector.broadcast %118 : vector<2x8x1xf32> to vector<2x8x32xf32>
      %120 = arith.mulf %119, %1 : vector<2x8x32xf32>
      %cst_75 = arith.constant dense<0.000000e+00> : vector<2x32xf32>
      %121 = vector.multi_reduction <add>, %120, %cst_75 [1] : vector<2x8x32xf32> to vector<2x32xf32>
      %cst_76 = arith.constant dense<0.000000e+00> : vector<2x32xf32>
      %122 = tpu.matmul %arg27, %63, %cst_76 {dimension_numbers = #tpu.dot_dimension_numbers<[1], [0], [0], [1], [0, 0, 1, 1], [], []>} : vector<2x32xf32>, vector<32x32xf32>, vector<2x32xf32> -> vector<2x32xf32>
      %123 = arith.addf %122, %66 : vector<2x32xf32>
      %124 = math.tanh %123 : vector<2x32xf32>
      %125 = arith.addf %121, %124 : vector<2x32xf32>
      scf.yield %125 : vector<2x32xf32>
    }
    %c6_i32_48 = arith.constant 6 : i32
    %c5 = arith.constant 5 : index
    %c0_49 = arith.constant 0 : index
    %c0_50 = arith.constant 0 : index
    %69 = vector.load %arg0[%c5, %c0_49, %c0_50] : memref<6x2x32xf32, #tpu.memory_space<vmem>>, vector<1x2x32xf32>
    %70 = vector.shape_cast %69 : vector<1x2x32xf32> to vector<2x32xf32>
    %c0_51 = arith.constant 0 : index
    %c0_52 = arith.constant 0 : index
    %71 = vector.load %arg18[%c0_51, %c0_52] : memref<32x32xf32, #tpu.memory_space<vmem>>, vector<32x32xf32>
    %cst_53 = arith.constant dense<0.000000e+00> : vector<2x32xf32>
    %72 = tpu.matmul %68, %71, %cst_53 {dimension_numbers = #tpu.dot_dimension_numbers<[1], [0], [0], [1], [0, 0, 1, 1], [], []>} : vector<2x32xf32>, vector<32x32xf32>, vector<2x32xf32> -> vector<2x32xf32>
    %c0_54 = arith.constant 0 : index
    %c0_55 = arith.constant 0 : index
    %73 = vector.load %arg19[%c0_54, %c0_55] : memref<1x32xf32, #tpu.memory_space<vmem>>, vector<1x32xf32>
    %74 = vector.broadcast %73 : vector<1x32xf32> to vector<2x32xf32>
    %75 = arith.addf %72, %74 : vector<2x32xf32>
    %c0_56 = arith.constant 0 : index
    %c0_57 = arith.constant 0 : index
    %76 = vector.load %arg20[%c0_56, %c0_57] : memref<32x32xf32, #tpu.memory_space<vmem>>, vector<32x32xf32>
    %cst_58 = arith.constant dense<0.000000e+00> : vector<2x32xf32>
    %77 = tpu.matmul %70, %76, %cst_58 {dimension_numbers = #tpu.dot_dimension_numbers<[1], [0], [0], [1], [0, 0, 1, 1], [], []>} : vector<2x32xf32>, vector<32x32xf32>, vector<2x32xf32> -> vector<2x32xf32>
    %78 = arith.addf %75, %77 : vector<2x32xf32>
    %c0_59 = arith.constant 0 : index
    %c0_60 = arith.constant 0 : index
    %79 = vector.load %arg21[%c0_59, %c0_60] : memref<1x32xf32, #tpu.memory_space<vmem>>, vector<1x32xf32>
    %80 = vector.broadcast %79 : vector<1x32xf32> to vector<2x32xf32>
    %81 = arith.addf %78, %80 : vector<2x32xf32>
    %82 = math.tanh %81 : vector<2x32xf32>
    %c0_61 = arith.constant 0 : index
    %c0_62 = arith.constant 0 : index
    %83 = vector.load %arg22[%c0_61, %c0_62] : memref<32x3xf32, #tpu.memory_space<vmem>>, vector<32x3xf32>
    %cst_63 = arith.constant dense<0.000000e+00> : vector<2x3xf32>
    %84 = tpu.matmul %82, %83, %cst_63 {dimension_numbers = #tpu.dot_dimension_numbers<[1], [0], [0], [1], [0, 0, 1, 1], [], []>} : vector<2x32xf32>, vector<32x3xf32>, vector<2x3xf32> -> vector<2x3xf32>
    %c0_64 = arith.constant 0 : index
    %c0_65 = arith.constant 0 : index
    %85 = vector.load %arg23[%c0_64, %c0_65] : memref<1x3xf32, #tpu.memory_space<vmem>>, vector<1x3xf32>
    %86 = vector.broadcast %85 : vector<1x3xf32> to vector<2x3xf32>
    %87 = arith.addf %84, %86 : vector<2x3xf32>
    %c0_66 = arith.constant 0 : index
    %c0_67 = arith.constant 0 : index
    %88 = vector.load %arg24[%c0_66, %c0_67] : memref<2x3xf32, #tpu.memory_space<vmem>>, vector<2x3xf32>
    tpu.vector_store %arg24[%c0_66, %c0_67], %87 {strides = array<i32>} : memref<2x3xf32, #tpu.memory_space<vmem>>, vector<2x3xf32>,
    return
  }
}

</mosaic_0001>

<llo_original>
// kernel: entailment_forward.3
$region0: #{entailment_forward.3}
  #allocation0 [shape = 'u32[]', space=smem, size = 0x4, offset = 0x4, fixed_abs, tag = 'smem constant byte address 0x4 - core index']
  #allocation1 [shape = 'u32[144,128]{1,0:T(1,128)}', space=vmem, size = 0x12000, scoped, tag = 'internal scratch']
  #allocation2 [shape = 'f32[8,2,96]{2,1,0:T(2,128)}', space=vmem, size = 0x2000, scoped, tag = 'scratch operand']
  #allocation3 [shape = 'f32[8,2,96]{2,1,0:T(2,128)}', space=vmem, size = 0x2000, scoped, tag = 'scratch operand']
  #allocation4 [shape = 'f32[8,2,32]{2,1,0:T(2,128)}', space=vmem, size = 0x2000, scoped, tag = 'scratch operand']
  #allocation5 [shape = 'f32[8,2,32]{2,1,0:T(2,128)}', space=vmem, size = 0x2000, scoped, tag = 'scratch operand']
  %s0 = inlined_call_operand.vmem [shape: f32[8,2,16], index: 0, kind: input, shape index: {}]
  %s1 = inlined_call_operand.vmem [shape: f32[2,32], index: 1, kind: input, shape index: {}, may-alias: {1,2}]
  %s2 = inlined_call_operand.vmem [shape: f32[2,32], index: 2, kind: input, shape index: {}, may-alias: {1,2}]
  %s3 = inlined_call_operand.vmem [shape: f32[16,96], index: 3, kind: input, shape index: {}]
  %s4 = inlined_call_operand.vmem [shape: f32[32,96], index: 4, kind: input, shape index: {}]
  %s5 = inlined_call_operand.vmem [shape: f32[1,96], index: 5, kind: input, shape index: {}]
  %s6 = inlined_call_operand.vmem [shape: f32[1,32], index: 6, kind: input, shape index: {}]
  %s7 = inlined_call_operand.vmem [shape: f32[16,96], index: 7, kind: input, shape index: {}]
  %s8 = inlined_call_operand.vmem [shape: f32[32,96], index: 8, kind: input, shape index: {}]
  %s9 = inlined_call_operand.vmem [shape: f32[1,96], index: 9, kind: input, shape index: {}]
  %s10 = inlined_call_operand.vmem [shape: f32[1,32], index: 10, kind: input, shape index: {}]
  %s11 = inlined_call_operand.vmem [shape: f32[32,32], index: 11, kind: input, shape index: {}]
  %s12 = inlined_call_operand.vmem [shape: f32[32,32], index: 12, kind: input, shape index: {}]
  %s13 = inlined_call_operand.vmem [shape: f32[1,32], index: 13, kind: input, shape index: {}]
  %s14 = inlined_call_operand.vmem [shape: f32[8,2,32], index: 14, kind: output, shape index: {0}]
  %s15 = inlined_call_operand.vmem [shape: f32[2,2,32], index: 15, kind: output, shape index: {1}]
  %16 = xla_tuple %s14, %s15
  %s17 = sld [smem:[#allocation0]]
  $region81: #{entailment_forward.3} parent=0
    _
  %s19 = ssub.s32 1, %s17
  %s20 = scalar_select 0, %s19, %s17
  // Predicated region
  $region2: #{entailment_forward.3} parent=0 // pred_check
    _
  $region3: #{entailment_forward.3} parent=0 // pred_check_branch
    %22 = sbr.rel (0) target = $region5
  $region4: #{entailment_forward.3} parent=0 // pred_region
    _
  $region5: #{entailment_forward.3} parent=0 // pred_fallthru
    _
  // Predicated region
  $region6: #{entailment_forward.3} parent=0 // pred_check
    _
  $region7: #{entailment_forward.3} parent=0 // pred_check_branch
    %24 = sbr.rel (0) target = $region9
  $region8: #{entailment_forward.3} parent=0 // pred_region
    _
  $region9: #{entailment_forward.3} parent=0 // pred_fallthru
    _
  // Predicated region
  $region10: #{entailment_forward.3} parent=0 // pred_check
    _
  $region11: #{entailment_forward.3} parent=0 // pred_check_branch
    %26 = sbr.rel (0) target = $region13
  $region12: #{entailment_forward.3} parent=0 // pred_region
    _
  $region13: #{entailment_forward.3} parent=0 // pred_fallthru
    _
  // Predicated region
  $region14: #{entailment_forward.3} parent=0 // pred_check
    _
  $region15: #{entailment_forward.3} parent=0 // pred_check_branch
    %28 = sbr.rel (0) target = $region17
  $region16: #{entailment_forward.3} parent=0 // pred_region
    _
  $region17: #{entailment_forward.3} parent=0 // pred_fallthru
    _
  // Predicated region
  $region18: #{entailment_forward.3} parent=0 // pred_check
    _
  $region19: #{entailment_forward.3} parent=0 // pred_check_branch
    %30 = sbr.rel (0) target = $region21
  $region20: #{entailment_forward.3} parent=0 // pred_region
    _
  $region21: #{entailment_forward.3} parent=0 // pred_fallthru
    _
  // Predicated region
  $region22: #{entailment_forward.3} parent=0 // pred_check
    _
  $region23: #{entailment_forward.3} parent=0 // pred_check_branch
    %32 = sbr.rel (0) target = $region25
  $region24: #{entailment_forward.3} parent=0 // pred_region
    _
  $region25: #{entailment_forward.3} parent=0 // pred_fallthru
    _
  // Predicated region
  $region26: #{entailment_forward.3} parent=0 // pred_check
    _
  $region27: #{entailment_forward.3} parent=0 // pred_check_branch
    %34 = sbr.rel (0) target = $region29
  $region28: #{entailment_forward.3} parent=0 // pred_region
    _
  $region29: #{entailment_forward.3} parent=0 // pred_fallthru
    _
  // Predicated region
  $region30: #{entailment_forward.3} parent=0 // pred_check
    _
  $region31: #{entailment_forward.3} parent=0 // pred_check_branch
    %36 = sbr.rel (0) target = $region33
  $region32: #{entailment_forward.3} parent=0 // pred_region
    _
  $region33: #{entailment_forward.3} parent=0 // pred_fallthru
    _
  // Predicated region
  $region34: #{entailment_forward.3} parent=0 // pred_check
    _
  $region35: #{entailment_forward.3} parent=0 // pred_check_branch
    %38 = sbr.rel (0) target = $region37
  $region36: #{entailment_forward.3} parent=0 // pred_region
    _
  $region37: #{entailment_forward.3} parent=0 // pred_fallthru
    _
  // Predicated region
  $region38: #{entailment_forward.3} parent=0 // pred_check
    _
  $region39: #{entailment_forward.3} parent=0 // pred_check_branch
    %40 = sbr.rel (0) target = $region41
  $region40: #{entailment_forward.3} parent=0 // pred_region
    _
  $region41: #{entailment_forward.3} parent=0 // pred_fallthru
    _
  // Predicated region
  $region42: #{entailment_forward.3} parent=0 // pred_check
    _
  $region43: #{entailment_forward.3} parent=0 // pred_check_branch
    %42 = sbr.rel (0) target = $region45
  $region44: #{entailment_forward.3} parent=0 // pred_region
    _
  $region45: #{entailment_forward.3} parent=0 // pred_fallthru
    _
  // Predicated region
  $region46: #{entailment_forward.3} parent=0 // pred_check
    _
  $region47: #{entailment_forward.3} parent=0 // pred_check_branch
    %44 = sbr.rel (0) target = $region49
  $region48: #{entailment_forward.3} parent=0 // pred_region
    _
  $region49: #{entailment_forward.3} parent=0 // pred_fallthru
    _
  // Predicated region
  $region50: #{entailment_forward.3} parent=0 // pred_check
    _
  $region51: #{entailment_forward.3} parent=0 // pred_check_branch
    %46 = sbr.rel (0) target = $region53
  $region52: #{entailment_forward.3} parent=0 // pred_region
    _
  $region53: #{entailment_forward.3} parent=0 // pred_fallthru
    _
  // Predicated region
  $region54: #{entailment_forward.3} parent=0 // pred_check
    _
  $region55: #{entailment_forward.3} parent=0 // pred_check_branch
    %48 = sbr.rel (0) target = $region57
  $region56: #{entailment_forward.3} parent=0 // pred_region
    _
  $region57: #{entailment_forward.3} parent=0 // pred_fallthru
    _
  %v49 = vld [vmem:[%s0] sm:$0x3]
  %v50 = vld [vmem:[%s0 + $0x2] sm:$0x3]
  %v51 = vld [vmem:[%s0 + $0x4] sm:$0x3]
  %v52 = vld [vmem:[%s0 + $0x6] sm:$0x3]
  %v53 = vld [vmem:[%s0 + $0x8] sm:$0x3]
  %v54 = vld [vmem:[%s0 + $0xa] sm:$0x3]
  %v55 = vld [vmem:[%s0 + $0xc] sm:$0x3]
  %v56 = vld [vmem:[%s0 + $0xe] sm:$0x3]
  %v57 = vld [vmem:[%s3] sm:$0xff]
  %v58 = vld [vmem:[%s3 + $0x8] sm:$0xff]
  %v59 = vld [vmem:[%s5] sm:$0x1]
  %v61 = vlaneseq
  %v62 = vshrl.u32 %v61, 7
  %v63 = vsub.s32 0, %v62
  %v64 = vrot.slane %v59, %v63
  %v74 = vcombine.low %v49, %v50
  %v75 = vcombine.low %v51, %v52
  %v77 = vunpack.c.l.s4 1983009808
  %v78 = vunpack.c.0.s8 %v77
  %v79 = vlaneseq
  %v80 = vshrl.u32 %v79, 7
  %v81 = vsub.s32 %v78, %v80
  %v82 = vrot.slane %v74, %v81
  %v84 = vunpack.c.l.s4 1983009808
  %v85 = vunpack.c.0.s8 %v84
  %v86 = vlaneseq
  %v87 = vshrl.u32 %v86, 7
  %v88 = vsub.s32 %v85, %v87
  %v89 = vrot.slane %v75, %v88
  %v90 = vcombine.low %v82, %v89
  %v91 = vcombine.low %v53, %v54
  %v92 = vcombine.low %v55, %v56
  %v94 = vunpack.c.l.s4 1983009808
  %v95 = vunpack.c.0.s8 %v94
  %v96 = vlaneseq
  %v97 = vshrl.u32 %v96, 7
  %v98 = vsub.s32 %v95, %v97
  %v99 = vrot.slane %v91, %v98
  %v101 = vunpack.c.l.s4 1983009808
  %v102 = vunpack.c.0.s8 %v101
  %v103 = vlaneseq
  %v104 = vshrl.u32 %v103, 7
  %v105 = vsub.s32 %v102, %v104
  %v106 = vrot.slane %v92, %v105
  %v107 = vcombine.low %v99, %v106
  %vm108 = vcmask 130048
  %v109 = vsel %vm108, %v90, 0
  %v111 = vsel %vm108, %v107, 0
  %113 = vmatprep.subr.mxu0 0.0
  %114 = vmatpush1.msra.mxu0 %v57
  %115 = vmatprep.subr.mxu0 0.0
  %116 = vmatpush1.msra.mxu0 %v58
  %117 = vmatprep.subr.mxu0 0.0
  %118 = vmatpush1.msra.mxu0 0.0
  %119 = vmatprep.subr.mxu0 0.0
  %120 = vmatpush1.msra.mxu0 0.0
  %121 = vmatprep.subr.mxu0 0.0
  %122 = vmatpush1.msra.mxu0 0.0
  %123 = vmatprep.subr.mxu0 0.0
  %124 = vmatpush1.msra.mxu0 0.0
  %125 = vmatprep.subr.mxu0 0.0
  %126 = vmatpush1.msra.mxu0 0.0
  %127 = vmatprep.subr.mxu0 0.0
  %128 = vmatpush1.msra.mxu0 0.0
  %129 = vmatprep.subr.mxu0 0.0
  %130 = vmatpush1.msra.mxu0 0.0
  %131 = vmatprep.subr.mxu0 0.0
  %132 = vmatpush1.msra.mxu0 0.0
  %133 = vmatprep.subr.mxu0 0.0
  %134 = vmatpush1.msra.mxu0 0.0
  %135 = vmatprep.subr.mxu0 0.0
  %136 = vmatpush1.msra.mxu0 0.0
  %137 = vmatprep.subr.mxu0 0.0
  %138 = vmatpush1.msra.mxu0 0.0
  %139 = vmatprep.subr.mxu0 0.0
  %140 = vmatpush1.msra.mxu0 0.0
  %141 = vmatprep.subr.mxu0 0.0
  %142 = vmatpush1.msra.mxu0 0.0
  %143 = vmatprep.subr.mxu0 0.0
  %144 = vmatpush1.msra.mxu0 0.0
  %145 = vmatprep.subr.mxu0 0.0
  %146 = vmatpush1.msra.mxu0 0.0
  %147 = vmatprep.subr.mxu0 0.0
  %148 = vmatpush1.msra.mxu0 0.0
  %149 = vmatprep.subr.mxu0 0.0
  %150 = vmatpush1.msra.mxu0 0.0
  %151 = vmatprep.subr.mxu0 0.0
  %152 = vmatpush1.msra.mxu0 0.0
  %153 = vmatprep.subr.mxu0 0.0
  %154 = vmatpush1.msra.mxu0 0.0
  %155 = vmatprep.subr.mxu0 0.0
  %156 = vmatpush1.msra.mxu0 0.0
  %157 = vmatprep.subr.mxu0 0.0
  %158 = vmatpush1.msra.mxu0 0.0
  %159 = vmatprep.subr.mxu0 0.0
  %160 = vmatpush1.msra.mxu0 0.0
  %161 = vmatprep.subr.mxu0 0.0
  %162 = vmatpush1.msra.mxu0 0.0
  %163 = vmatprep.subr.mxu0 0.0
  %164 = vmatpush1.msra.mxu0 0.0
  %165 = vmatprep.subr.mxu0 0.0
  %166 = vmatpush1.msra.mxu0 0.0
  %167 = vmatprep.subr.mxu0 0.0
  %168 = vmatpush1.msra.mxu0 0.0
  %169 = vmatprep.subr.mxu0 0.0
  %170 = vmatpush1.msra.mxu0 0.0
  %171 = vmatprep.subr.mxu0 0.0
  %172 = vmatpush1.msra.mxu0 0.0
  %173 = vmatprep.subr.mxu0 0.0
  %174 = vmatpush1.msra.mxu0 0.0
  %175 = vmatprep.subr.mxu0 0.0
  %176 = vmatpush1.msra.mxu0 0.0
  %177 = vmatprep.mubr.f32.mxu0 0.0
  %178 = vmatmul.mubr.f32.gmra.mrb[0].mxu0 %v109
  %v179 = vpop.f32.mrb[0].mxu0
  %v180 = vadd.f32 %v64, %v179
  %v181 = vpop.f32.mrb[0].mxu0
  %182 = vmatprep.mubr.f32.mxu0 0.0
  %183 = vmatmul.mubr.f32.gmra.mrb[0].mxu0 %v111
  %v184 = vpop.f32.mrb[0].mxu0
  %v185 = vadd.f32 %v64, %v184
  %v186 = vpop.f32.mrb[0].mxu0
  %187 = vdwg.mxu0
  %v190 = vcombine.high %v180, %v180
  %v192 = vunpack.c.l.s4 1983009808
  %v193 = vunpack.c.0.s8 %v192
  %v194 = vlaneseq
  %v195 = vshrl.u32 %v194, 7
  %v196 = vsub.s32 %v193, %v195
  %v197 = vrot.slane %v180, %v196
  %v199 = vunpack.c.l.s4 1983009808
  %v200 = vunpack.c.0.s8 %v199
  %v201 = vlaneseq
  %v202 = vshrl.u32 %v201, 7
  %v203 = vsub.s32 %v200, %v202
  %v204 = vrot.slane %v190, %v203
  %v205 = vcombine.high %v197, %v197
  %v206 = vcombine.high %v204, %v204
  %v207 = vcombine.high %v185, %v185
  %v209 = vunpack.c.l.s4 1983009808
  %v210 = vunpack.c.0.s8 %v209
  %v211 = vlaneseq
  %v212 = vshrl.u32 %v211, 7
  %v213 = vsub.s32 %v210, %v212
  %v214 = vrot.slane %v185, %v213
  %v216 = vunpack.c.l.s4 1983009808
  %v217 = vunpack.c.0.s8 %v216
  %v218 = vlaneseq
  %v219 = vshrl.u32 %v218, 7
  %v220 = vsub.s32 %v217, %v219
  %v221 = vrot.slane %v207, %v220
  %v222 = vcombine.high %v214, %v214
  %v223 = vcombine.high %v221, %v221
  %vm232 = vcmask 779264
  %233 = vst.msk [vmem:[#allocation2] sm:$0x3] %vm232, %v197
  %234 = vst.msk [vmem:[#allocation2 + $0x2] sm:$0x3] %vm232, %v205
  %235 = vst.msk [vmem:[#allocation2 + $0x4] sm:$0x3] %vm232, %v204
  %236 = vst.msk [vmem:[#allocation2 + $0x6] sm:$0x3] %vm232, %v206
  %237 = vst.msk [vmem:[#allocation2 + $0x8] sm:$0x3] %vm232, %v214
  %238 = vst.msk [vmem:[#allocation2 + $0xa] sm:$0x3] %vm232, %v222
  %239 = vst.msk [vmem:[#allocation2 + $0xc] sm:$0x3] %vm232, %v221
  %240 = vst.msk [vmem:[#allocation2 + $0xe] sm:$0x3] %vm232, %v223
  %v241 = vld [vmem:[%s7] sm:$0xff]
  %v242 = vld [vmem:[%s7 + $0x8] sm:$0xff]
  %v243 = vld [vmem:[%s9] sm:$0x1]
  %v245 = vlaneseq
  %v246 = vshrl.u32 %v245, 7
  %v247 = vsub.s32 0, %v246
  %v248 = vrot.slane %v243, %v247
  %250 = vmatprep.subr.mxu0 0.0
  %251 = vmatpush1.msra.mxu0 %v241
  %252 = vmatprep.subr.mxu0 0.0
  %253 = vmatpush1.msra.mxu0 %v242
  %254 = vmatprep.subr.mxu0 0.0
  %255 = vmatpush1.msra.mxu0 0.0
  %256 = vmatprep.subr.mxu0 0.0
  %257 = vmatpush1.msra.mxu0 0.0
  %258 = vmatprep.subr.mxu0 0.0
  %259 = vmatpush1.msra.mxu0 0.0
  %260 = vmatprep.subr.mxu0 0.0
  %261 = vmatpush1.msra.mxu0 0.0
  %262 = vmatprep.subr.mxu0 0.0
  %263 = vmatpush1.msra.mxu0 0.0
  %264 = vmatprep.subr.mxu0 0.0
  %265 = vmatpush1.msra.mxu0 0.0
  %266 = vmatprep.subr.mxu0 0.0
  %267 = vmatpush1.msra.mxu0 0.0
  %268 = vmatprep.subr.mxu0 0.0
  %269 = vmatpush1.msra.mxu0 0.0
  %270 = vmatprep.subr.mxu0 0.0
  %271 = vmatpush1.msra.mxu0 0.0
  %272 = vmatprep.subr.mxu0 0.0
  %273 = vmatpush1.msra.mxu0 0.0
  %274 = vmatprep.subr.mxu0 0.0
  %275 = vmatpush1.msra.mxu0 0.0
  %276 = vmatprep.subr.mxu0 0.0
  %277 = vmatpush1.msra.mxu0 0.0
  %278 = vmatprep.subr.mxu0 0.0
  %279 = vmatpush1.msra.mxu0 0.0
  %280 = vmatprep.subr.mxu0 0.0
  %281 = vmatpush1.msra.mxu0 0.0
  %282 = vmatprep.subr.mxu0 0.0
  %283 = vmatpush1.msra.mxu0 0.0
  %284 = vmatprep.subr.mxu0 0.0
  %285 = vmatpush1.msra.mxu0 0.0
  %286 = vmatprep.subr.mxu0 0.0
  %287 = vmatpush1.msra.mxu0 0.0
  %288 = vmatprep.subr.mxu0 0.0
  %289 = vmatpush1.msra.mxu0 0.0
  %290 = vmatprep.subr.mxu0 0.0
  %291 = vmatpush1.msra.mxu0 0.0
  %292 = vmatprep.subr.mxu0 0.0
  %293 = vmatpush1.msra.mxu0 0.0
  %294 = vmatprep.subr.mxu0 0.0
  %295 = vmatpush1.msra.mxu0 0.0
  %296 = vmatprep.subr.mxu0 0.0
  %297 = vmatpush1.msra.mxu0 0.0
  %298 = vmatprep.subr.mxu0 0.0
  %299 = vmatpush1.msra.mxu0 0.0
  %300 = vmatprep.subr.mxu0 0.0
  %301 = vmatpush1.msra.mxu0 0.0
  %302 = vmatprep.subr.mxu0 0.0
  %303 = vmatpush1.msra.mxu0 0.0
  %304 = vmatprep.subr.mxu0 0.0
  %305 = vmatpush1.msra.mxu0 0.0
  %306 = vmatprep.subr.mxu0 0.0
  %307 = vmatpush1.msra.mxu0 0.0
  %308 = vmatprep.subr.mxu0 0.0
  %309 = vmatpush1.msra.mxu0 0.0
  %310 = vmatprep.subr.mxu0 0.0
  %311 = vmatpush1.msra.mxu0 0.0
  %312 = vmatprep.subr.mxu0 0.0
  %313 = vmatpush1.msra.mxu0 0.0
  %314 = vmatprep.mubr.f32.mxu0 0.0
  %315 = vmatmul.mubr.f32.gmra.mrb[0].mxu0 %v109
  %v316 = vpop.f32.mrb[0].mxu0
  %v317 = vadd.f32 %v248, %v316
  %v318 = vpop.f32.mrb[0].mxu0
  %319 = vmatprep.mubr.f32.mxu0 0.0
  %320 = vmatmul.mubr.f32.gmra.mrb[0].mxu0 %v111
  %v321 = vpop.f32.mrb[0].mxu0
  %v322 = vadd.f32 %v248, %v321
  %v323 = vpop.f32.mrb[0].mxu0
  %324 = vdwg.mxu0
  %v327 = vcombine.high %v317, %v317
  %v329 = vunpack.c.l.s4 1983009808
  %v330 = vunpack.c.0.s8 %v329
  %v331 = vlaneseq
  %v332 = vshrl.u32 %v331, 7
  %v333 = vsub.s32 %v330, %v332
  %v334 = vrot.slane %v317, %v333
  %v336 = vunpack.c.l.s4 1983009808
  %v337 = vunpack.c.0.s8 %v336
  %v338 = vlaneseq
  %v339 = vshrl.u32 %v338, 7
  %v340 = vsub.s32 %v337, %v339
  %v341 = vrot.slane %v327, %v340
  %v342 = vcombine.high %v334, %v334
  %v343 = vcombine.high %v341, %v341
  %v344 = vcombine.high %v322, %v322
  %v346 = vunpack.c.l.s4 1983009808
  %v347 = vunpack.c.0.s8 %v346
  %v348 = vlaneseq
  %v349 = vshrl.u32 %v348, 7
  %v350 = vsub.s32 %v347, %v349
  %v351 = vrot.slane %v322, %v350
  %v353 = vunpack.c.l.s4 1983009808
  %v354 = vunpack.c.0.s8 %v353
  %v355 = vlaneseq
  %v356 = vshrl.u32 %v355, 7
  %v357 = vsub.s32 %v354, %v356
  %v358 = vrot.slane %v344, %v357
  %v359 = vcombine.high %v351, %v351
  %v360 = vcombine.high %v358, %v358
  %369 = vst.msk [vmem:[#allocation3] sm:$0x3] %vm232, %v334
  %370 = vst.msk [vmem:[#allocation3 + $0x2] sm:$0x3] %vm232, %v342
  %371 = vst.msk [vmem:[#allocation3 + $0x4] sm:$0x3] %vm232, %v341
  %372 = vst.msk [vmem:[#allocation3 + $0x6] sm:$0x3] %vm232, %v343
  %373 = vst.msk [vmem:[#allocation3 + $0x8] sm:$0x3] %vm232, %v351
  %374 = vst.msk [vmem:[#allocation3 + $0xa] sm:$0x3] %vm232, %v359
  %375 = vst.msk [vmem:[#allocation3 + $0xc] sm:$0x3] %vm232, %v358
  %376 = vst.msk [vmem:[#allocation3 + $0xe] sm:$0x3] %vm232, %v360
  %v377 = vld [vmem:[%s4] sm:$0xff]
  %v378 = vld [vmem:[%s4 + $0x8] sm:$0xff]
  %v379 = vld [vmem:[%s4 + $0x10] sm:$0xff]
  %v380 = vld [vmem:[%s4 + $0x18] sm:$0xff]
  %v381 = vld [vmem:[%s8] sm:$0xff]
  %v382 = vld [vmem:[%s8 + $0x8] sm:$0xff]
  %v383 = vld [vmem:[%s8 + $0x10] sm:$0xff]
  %v384 = vld [vmem:[%s8 + $0x18] sm:$0xff]
  %v385 = vld [vmem:[%s6] sm:$0x1]
  %v387 = vlaneseq
  %v388 = vshrl.u32 %v387, 7
  %v389 = vsub.s32 0, %v388
  %v390 = vrot.slane %v385, %v389
  %v391 = vld [vmem:[%s10] sm:$0x1]
  %v393 = vlaneseq
  %v394 = vshrl.u32 %v393, 7
  %v395 = vsub.s32 0, %v394
  %v396 = vrot.slane %v391, %v395
  %v397 = vld [vmem:[%s1] sm:$0x3]
  %v398 = vld [vmem:[%s2] sm:$0x3]
  loop: start=0, step=1, limit=8
  $region58: #{entailment_forward.3} parent=0 // loop_pre_header
    _
  $region59: #{entailment_forward.3} parent=0 // loop_header
    %s400 = sphi 0, %s404
    %p401 = scmp.ge.s32.totalorder %s400, 8
    %v405 = vphi %v397, %v629
    %v406 = vphi %v398, %v636
  $region60: #{entailment_forward.3} parent=0 // loop_header_branch
    %403 = sbr.rel (%p401) target = $region64
  $region61: #{entailment_forward.3} parent=0 // loop_body
    %s407 = ssub.s32 7, %s400
    %s408 = smul.u32 %s400, 2
    %s409 = scalar_lea.vmem [#allocation2], %s408
    %v410 = vld [vmem:[%s409] sm:$0x3]
    %vm411 = vcmask 261120
    %v413 = vsel %vm411, %v405, 0
    %415 = vmatprep.subr.mxu0 0.0
    %416 = vmatpush1.msra.mxu0 %v377
    %417 = vmatprep.subr.mxu0 0.0
    %418 = vmatpush1.msra.mxu0 %v378
    %419 = vmatprep.subr.mxu0 0.0
    %420 = vmatpush1.msra.mxu0 %v379
    %421 = vmatprep.subr.mxu0 0.0
    %422 = vmatpush1.msra.mxu0 %v380
    %423 = vmatprep.subr.mxu0 0.0
    %424 = vmatpush1.msra.mxu0 0.0
    %425 = vmatprep.subr.mxu0 0.0
    %426 = vmatpush1.msra.mxu0 0.0
    %427 = vmatprep.subr.mxu0 0.0
    %428 = vmatpush1.msra.mxu0 0.0
    %429 = vmatprep.subr.mxu0 0.0
    %430 = vmatpush1.msra.mxu0 0.0
    %431 = vmatprep.subr.mxu0 0.0
    %432 = vmatpush1.msra.mxu0 0.0
    %433 = vmatprep.subr.mxu0 0.0
    %434 = vmatpush1.msra.mxu0 0.0
    %435 = vmatprep.subr.mxu0 0.0
    %436 = vmatpush1.msra.mxu0 0.0
    %437 = vmatprep.subr.mxu0 0.0
    %438 = vmatpush1.msra.mxu0 0.0
    %439 = vmatprep.subr.mxu0 0.0
    %440 = vmatpush1.msra.mxu0 0.0
    %441 = vmatprep.subr.mxu0 0.0
    %442 = vmatpush1.msra.mxu0 0.0
    %443 = vmatprep.subr.mxu0 0.0
    %444 = vmatpush1.msra.mxu0 0.0
    %445 = vmatprep.subr.mxu0 0.0
    %446 = vmatpush1.msra.mxu0 0.0
    %447 = vmatprep.subr.mxu0 0.0
    %448 = vmatpush1.msra.mxu0 0.0
    %449 = vmatprep.subr.mxu0 0.0
    %450 = vmatpush1.msra.mxu0 0.0
    %451 = vmatprep.subr.mxu0 0.0
    %452 = vmatpush1.msra.mxu0 0.0
    %453 = vmatprep.subr.mxu0 0.0
    %454 = vmatpush1.msra.mxu0 0.0
    %455 = vmatprep.subr.mxu0 0.0
    %456 = vmatpush1.msra.mxu0 0.0
    %457 = vmatprep.subr.mxu0 0.0
    %458 = vmatpush1.msra.mxu0 0.0
    %459 = vmatprep.subr.mxu0 0.0
    %460 = vmatpush1.msra.mxu0 0.0
    %461 = vmatprep.subr.mxu0 0.0
    %462 = vmatpush1.msra.mxu0 0.0
    %463 = vmatprep.subr.mxu0 0.0
    %464 = vmatpush1.msra.mxu0 0.0
    %465 = vmatprep.subr.mxu0 0.0
    %466 = vmatpush1.msra.mxu0 0.0
    %467 = vmatprep.subr.mxu0 0.0
    %468 = vmatpush1.msra.mxu0 0.0
    %469 = vmatprep.subr.mxu0 0.0
    %470 = vmatpush1.msra.mxu0 0.0
    %471 = vmatprep.subr.mxu0 0.0
    %472 = vmatpush1.msra.mxu0 0.0
    %473 = vmatprep.subr.mxu0 0.0
    %474 = vmatpush1.msra.mxu0 0.0
    %475 = vmatprep.subr.mxu0 0.0
    %476 = vmatpush1.msra.mxu0 0.0
    %477 = vmatprep.subr.mxu0 0.0
    %478 = vmatpush1.msra.mxu0 0.0
    %479 = vmatprep.mubr.f32.mxu0 0.0
    %480 = vmatmul.mubr.f32.gmra.mrb[0].mxu0 %v413
    %v481 = vpop.f32.mrb[0].mxu0
    %v482 = vadd.f32 0.0, %v481
    %v483 = vpop.f32.mrb[0].mxu0
    %484 = vdwg.mxu0
    %v485 = vadd.f32 %v410, %v482
    %v486 = vxor.u32 %v485, 2147483648
    %v487 = vmul.f32 %v486, 1.442695
    %v488 = vpow.pop %v487
    %v489 = vadd.f32 %v488, 1.0
    %v490 = vrcp.pop %v489
    %v491 = vmul.f32 1.0, %v490
    %492 = vrot.lane.b32.xlu0 %v390, 64
    %v493 = vpop.permute.xlu0 %492
    %v495 = vadd.f32 %v482, %v493
    %497 = vrot.lane.b32.xlu0 %v495, 64
    %v498 = vpop.permute.xlu0 %497
    %v500 = vmul.f32 %v491, %v498
    %502 = vrot.lane.b32.xlu0 %v500, 64
    %v503 = vpop.permute.xlu0 %502
    %v505 = vadd.f32 %v410, %v503
    %v506 = vtanh.pop %v505
    %v507 = vsub.f32 1.0, %v491
    %509 = vrot.lane.b32.xlu0 %v506, 96
    %v510 = vpop.permute.xlu0 %509
    %v512 = vmul.f32 %v507, %v510
    %513 = vrot.lane.b32.xlu0 %v405, 32
    %v514 = vpop.permute.xlu0 %513
    %v516 = vmul.f32 %v491, %v514
    %v517 = vadd.f32 %v512, %v516
    %s518 = smul.u32 %s407, 2
    %s519 = scalar_lea.vmem [#allocation3], %s518
    %v520 = vld [vmem:[%s519] sm:$0x3]
    %v522 = vsel %vm411, %v406, 0
    %524 = vmatprep.subr.mxu0 0.0
    %525 = vmatpush1.msra.mxu0 %v381
    %526 = vmatprep.subr.mxu0 0.0
    %527 = vmatpush1.msra.mxu0 %v382
    %528 = vmatprep.subr.mxu0 0.0
    %529 = vmatpush1.msra.mxu0 %v383
    %530 = vmatprep.subr.mxu0 0.0
    %531 = vmatpush1.msra.mxu0 %v384
    %532 = vmatprep.subr.mxu0 0.0
    %533 = vmatpush1.msra.mxu0 0.0
    %534 = vmatprep.subr.mxu0 0.0
    %535 = vmatpush1.msra.mxu0 0.0
    %536 = vmatprep.subr.mxu0 0.0
    %537 = vmatpush1.msra.mxu0 0.0
    %538 = vmatprep.subr.mxu0 0.0
    %539 = vmatpush1.msra.mxu0 0.0
    %540 = vmatprep.subr.mxu0 0.0
    %541 = vmatpush1.msra.mxu0 0.0
    %542 = vmatprep.subr.mxu0 0.0
    %543 = vmatpush1.msra.mxu0 0.0
    %544 = vmatprep.subr.mxu0 0.0
    %545 = vmatpush1.msra.mxu0 0.0
    %546 = vmatprep.subr.mxu0 0.0
    %547 = vmatpush1.msra.mxu0 0.0
    %548 = vmatprep.subr.mxu0 0.0
    %549 = vmatpush1.msra.mxu0 0.0
    %550 = vmatprep.subr.mxu0 0.0
    %551 = vmatpush1.msra.mxu0 0.0
    %552 = vmatprep.subr.mxu0 0.0
    %553 = vmatpush1.msra.mxu0 0.0
    %554 = vmatprep.subr.mxu0 0.0
    %555 = vmatpush1.msra.mxu0 0.0
    %556 = vmatprep.subr.mxu0 0.0
    %557 = vmatpush1.msra.mxu0 0.0
    %558 = vmatprep.subr.mxu0 0.0
    %559 = vmatpush1.msra.mxu0 0.0
    %560 = vmatprep.subr.mxu0 0.0
    %561 = vmatpush1.msra.mxu0 0.0
    %562 = vmatprep.subr.mxu0 0.0
    %563 = vmatpush1.msra.mxu0 0.0
    %564 = vmatprep.subr.mxu0 0.0
    %565 = vmatpush1.msra.mxu0 0.0
    %566 = vmatprep.subr.mxu0 0.0
    %567 = vmatpush1.msra.mxu0 0.0
    %568 = vmatprep.subr.mxu0 0.0
    %569 = vmatpush1.msra.mxu0 0.0
    %570 = vmatprep.subr.mxu0 0.0
    %571 = vmatpush1.msra.mxu0 0.0
    %572 = vmatprep.subr.mxu0 0.0
    %573 = vmatpush1.msra.mxu0 0.0
    %574 = vmatprep.subr.mxu0 0.0
    %575 = vmatpush1.msra.mxu0 0.0
    %576 = vmatprep.subr.mxu0 0.0
    %577 = vmatpush1.msra.mxu0 0.0
    %578 = vmatprep.subr.mxu0 0.0
    %579 = vmatpush1.msra.mxu0 0.0
    %580 = vmatprep.subr.mxu0 0.0
    %581 = vmatpush1.msra.mxu0 0.0
    %582 = vmatprep.subr.mxu0 0.0
    %583 = vmatpush1.msra.mxu0 0.0
    %584 = vmatprep.subr.mxu0 0.0
    %585 = vmatpush1.msra.mxu0 0.0
    %586 = vmatprep.subr.mxu0 0.0
    %587 = vmatpush1.msra.mxu0 0.0
    %588 = vmatprep.mubr.f32.mxu0 0.0
    %589 = vmatmul.mubr.f32.gmra.mrb[0].mxu0 %v522
    %v590 = vpop.f32.mrb[0].mxu0
    %v591 = vadd.f32 0.0, %v590
    %v592 = vpop.f32.mrb[0].mxu0
    %593 = vdwg.mxu0
    %v594 = vadd.f32 %v520, %v591
    %v595 = vxor.u32 %v594, 2147483648
    %v596 = vmul.f32 %v595, 1.442695
    %v597 = vpow.pop %v596
    %v598 = vadd.f32 %v597, 1.0
    %v599 = vrcp.pop %v598
    %v600 = vmul.f32 1.0, %v599
    %601 = vrot.lane.b32.xlu0 %v396, 64
    %v602 = vpop.permute.xlu0 %601
    %v604 = vadd.f32 %v591, %v602
    %606 = vrot.lane.b32.xlu0 %v604, 64
    %v607 = vpop.permute.xlu0 %606
    %v609 = vmul.f32 %v600, %v607
    %611 = vrot.lane.b32.xlu0 %v609, 64
    %v612 = vpop.permute.xlu0 %611
    %v614 = vadd.f32 %v520, %v612
    %v615 = vtanh.pop %v614
    %v616 = vsub.f32 1.0, %v600
    %618 = vrot.lane.b32.xlu0 %v615, 96
    %v619 = vpop.permute.xlu0 %618
    %v621 = vmul.f32 %v616, %v619
    %622 = vrot.lane.b32.xlu0 %v406, 32
    %v623 = vpop.permute.xlu0 %622
    %v625 = vmul.f32 %v600, %v623
    %v626 = vadd.f32 %v621, %v625
    %628 = vrot.lane.b32.xlu0 %v517, 96
    %v629 = vpop.permute.xlu0 %628
    %s631 = scalar_lea.vmem [#allocation4], %s408
    %vm632 = vcmask 254976
    %633 = vst.msk [vmem:[%s631] sm:$0x3] %vm632, %v629
    %635 = vrot.lane.b32.xlu0 %v626, 96
    %v636 = vpop.permute.xlu0 %635
    %s638 = scalar_lea.vmem [#allocation5], %s518
    %639 = vst.msk [vmem:[%s638] sm:$0x3] %vm632, %v636
  $region62: #{entailment_forward.3} parent=0 // loop_footer
    %s404 = sadd.s32 1, %s400
  $region63: #{entailment_forward.3} parent=0 // loop_footer_branch
    %399 = sbr.rel target = $region59
  $region64: #{entailment_forward.3} parent=0 // loop_exit
    _
  %vm640 = vcmask 254976
  %641 = vst.msk [vmem:[%s15] sm:$0x3] %vm640, %v405
  %s642 = scalar_lea.vmem %s15, 2
  %643 = vst.msk [vmem:[%s642] sm:$0x3] %vm640, %v406
  %v644 = vld [vmem:[#allocation4] sm:$0x3]
  %v645 = vld [vmem:[#allocation4 + $0x2] sm:$0x3]
  %v646 = vld [vmem:[#allocation4 + $0x4] sm:$0x3]
  %v647 = vld [vmem:[#allocation4 + $0x6] sm:$0x3]
  %v648 = vld [vmem:[#allocation4 + $0x8] sm:$0x3]
  %v649 = vld [vmem:[#allocation4 + $0xa] sm:$0x3]
  %v650 = vld [vmem:[#allocation4 + $0xc] sm:$0x3]
  %v651 = vld [vmem:[#allocation4 + $0xe] sm:$0x3]
  %v652 = vld [vmem:[%s11] sm:$0xff]
  %v653 = vld [vmem:[%s11 + $0x8] sm:$0xff]
  %v654 = vld [vmem:[%s11 + $0x10] sm:$0xff]
  %v655 = vld [vmem:[%s11 + $0x18] sm:$0xff]
  %v656 = vld [vmem:[#allocation5] sm:$0x3]
  %v657 = vld [vmem:[#allocation5 + $0x2] sm:$0x3]
  %v658 = vld [vmem:[#allocation5 + $0x4] sm:$0x3]
  %v659 = vld [vmem:[#allocation5 + $0x6] sm:$0x3]
  %v660 = vld [vmem:[#allocation5 + $0x8] sm:$0x3]
  %v661 = vld [vmem:[#allocation5 + $0xa] sm:$0x3]
  %v662 = vld [vmem:[#allocation5 + $0xc] sm:$0x3]
  %v663 = vld [vmem:[#allocation5 + $0xe] sm:$0x3]
  %v664 = vld [vmem:[%s12] sm:$0xff]
  %v665 = vld [vmem:[%s12 + $0x8] sm:$0xff]
  %v666 = vld [vmem:[%s12 + $0x10] sm:$0xff]
  %v667 = vld [vmem:[%s12 + $0x18] sm:$0xff]
  %v676 = vcombine.low %v656, %v657
  %v677 = vcombine.low %v658, %v659
  %v679 = vunpack.c.l.s4 1983009808
  %v680 = vunpack.c.0.s8 %v679
  %v681 = vlaneseq
  %v682 = vshrl.u32 %v681, 7
  %v683 = vsub.s32 %v680, %v682
  %v684 = vrot.slane %v676, %v683
  %v686 = vunpack.c.l.s4 1983009808
  %v687 = vunpack.c.0.s8 %v686
  %v688 = vlaneseq
  %v689 = vshrl.u32 %v688, 7
  %v690 = vsub.s32 %v687, %v689
  %v691 = vrot.slane %v677, %v690
  %v692 = vcombine.low %v684, %v691
  %v693 = vcombine.low %v660, %v661
  %v694 = vcombine.low %v662, %v663
  %v696 = vunpack.c.l.s4 1983009808
  %v697 = vunpack.c.0.s8 %v696
  %v698 = vlaneseq
  %v699 = vshrl.u32 %v698, 7
  %v700 = vsub.s32 %v697, %v699
  %v701 = vrot.slane %v693, %v700
  %v703 = vunpack.c.l.s4 1983009808
  %v704 = vunpack.c.0.s8 %v703
  %v705 = vlaneseq
  %v706 = vshrl.u32 %v705, 7
  %v707 = vsub.s32 %v704, %v706
  %v708 = vrot.slane %v694, %v707
  %v709 = vcombine.low %v701, %v708
  %vm710 = vcmask 261120
  %v711 = vsel %vm710, %v692, 0
  %v713 = vsel %vm710, %v709, 0
  %715 = vmatprep.subr.mxu0 0.0
  %716 = vmatpush1.msra.mxu0 %v664
  %717 = vmatprep.subr.mxu0 0.0
  %718 = vmatpush1.msra.mxu0 %v665
  %719 = vmatprep.subr.mxu0 0.0
  %720 = vmatpush1.msra.mxu0 %v666
  %721 = vmatprep.subr.mxu0 0.0
  %722 = vmatpush1.msra.mxu0 %v667
  %723 = vmatprep.subr.mxu0 0.0
  %724 = vmatpush1.msra.mxu0 0.0
  %725 = vmatprep.subr.mxu0 0.0
  %726 = vmatpush1.msra.mxu0 0.0
  %727 = vmatprep.subr.mxu0 0.0
  %728 = vmatpush1.msra.mxu0 0.0
  %729 = vmatprep.subr.mxu0 0.0
  %730 = vmatpush1.msra.mxu0 0.0
  %731 = vmatprep.subr.mxu0 0.0
  %732 = vmatpush1.msra.mxu0 0.0
  %733 = vmatprep.subr.mxu0 0.0
  %734 = vmatpush1.msra.mxu0 0.0
  %735 = vmatprep.subr.mxu0 0.0
  %736 = vmatpush1.msra.mxu0 0.0
  %737 = vmatprep.subr.mxu0 0.0
  %738 = vmatpush1.msra.mxu0 0.0
  %739 = vmatprep.subr.mxu0 0.0
  %740 = vmatpush1.msra.mxu0 0.0
  %741 = vmatprep.subr.mxu0 0.0
  %742 = vmatpush1.msra.mxu0 0.0
  %743 = vmatprep.subr.mxu0 0.0
  %744 = vmatpush1.msra.mxu0 0.0
  %745 = vmatprep.subr.mxu0 0.0
  %746 = vmatpush1.msra.mxu0 0.0
  %747 = vmatprep.subr.mxu0 0.0
  %748 = vmatpush1.msra.mxu0 0.0
  %749 = vmatprep.subr.mxu0 0.0
  %750 = vmatpush1.msra.mxu0 0.0
  %751 = vmatprep.subr.mxu0 0.0
  %752 = vmatpush1.msra.mxu0 0.0
  %753 = vmatprep.subr.mxu0 0.0
  %754 = vmatpush1.msra.mxu0 0.0
  %755 = vmatprep.subr.mxu0 0.0
  %756 = vmatpush1.msra.mxu0 0.0
  %757 = vmatprep.subr.mxu0 0.0
  %758 = vmatpush1.msra.mxu0 0.0
  %759 = vmatprep.subr.mxu0 0.0
  %760 = vmatpush1.msra.mxu0 0.0
  %761 = vmatprep.subr.mxu0 0.0
  %762 = vmatpush1.msra.mxu0 0.0
  %763 = vmatprep.subr.mxu0 0.0
  %764 = vmatpush1.msra.mxu0 0.0
  %765 = vmatprep.subr.mxu0 0.0
  %766 = vmatpush1.msra.mxu0 0.0
  %767 = vmatprep.subr.mxu0 0.0
  %768 = vmatpush1.msra.mxu0 0.0
  %769 = vmatprep.subr.mxu0 0.0
  %770 = vmatpush1.msra.mxu0 0.0
  %771 = vmatprep.subr.mxu0 0.0
  %772 = vmatpush1.msra.mxu0 0.0
  %773 = vmatprep.subr.mxu0 0.0
  %774 = vmatpush1.msra.mxu0 0.0
  %775 = vmatprep.subr.mxu0 0.0
  %776 = vmatpush1.msra.mxu0 0.0
  %777 = vmatprep.subr.mxu0 0.0
  %778 = vmatpush1.msra.mxu0 0.0
  %779 = vmatprep.mubr.f32.mxu0 0.0
  %780 = vmatmul.mubr.f32.gmra.mrb[0].mxu0 %v711
  %v781 = vpop.f32.mrb[0].mxu0
  %v782 = vadd.f32 0.0, %v781
  %v783 = vpop.f32.mrb[0].mxu0
  %784 = vmatprep.mubr.f32.mxu0 0.0
  %785 = vmatmul.mubr.f32.gmra.mrb[0].mxu0 %v713
  %v786 = vpop.f32.mrb[0].mxu0
  %v787 = vadd.f32 0.0, %v786
  %v788 = vpop.f32.mrb[0].mxu0
  %789 = vdwg.mxu0
  %v798 = vcombine.low %v644, %v645
  %v799 = vcombine.low %v646, %v647
  %v801 = vunpack.c.l.s4 1983009808
  %v802 = vunpack.c.0.s8 %v801
  %v803 = vlaneseq
  %v804 = vshrl.u32 %v803, 7
  %v805 = vsub.s32 %v802, %v804
  %v806 = vrot.slane %v798, %v805
  %v808 = vunpack.c.l.s4 1983009808
  %v809 = vunpack.c.0.s8 %v808
  %v810 = vlaneseq
  %v811 = vshrl.u32 %v810, 7
  %v812 = vsub.s32 %v809, %v811
  %v813 = vrot.slane %v799, %v812
  %v814 = vcombine.low %v806, %v813
  %v815 = vcombine.low %v648, %v649
  %v816 = vcombine.low %v650, %v651
  %v818 = vunpack.c.l.s4 1983009808
  %v819 = vunpack.c.0.s8 %v818
  %v820 = vlaneseq
  %v821 = vshrl.u32 %v820, 7
  %v822 = vsub.s32 %v819, %v821
  %v823 = vrot.slane %v815, %v822
  %v825 = vunpack.c.l.s4 1983009808
  %v826 = vunpack.c.0.s8 %v825
  %v827 = vlaneseq
  %v828 = vshrl.u32 %v827, 7
  %v829 = vsub.s32 %v826, %v828
  %v830 = vrot.slane %v816, %v829
  %v831 = vcombine.low %v823, %v830
  %v832 = vsel %vm710, %v814, 0
  %v834 = vsel %vm710, %v831, 0
  %836 = vmatprep.subr.mxu0 0.0
  %837 = vmatpush1.msra.mxu0 %v652
  %838 = vmatprep.subr.mxu0 0.0
  %839 = vmatpush1.msra.mxu0 %v653
  %840 = vmatprep.subr.mxu0 0.0
  %841 = vmatpush1.msra.mxu0 %v654
  %842 = vmatprep.subr.mxu0 0.0
  %843 = vmatpush1.msra.mxu0 %v655
  %844 = vmatprep.subr.mxu0 0.0
  %845 = vmatpush1.msra.mxu0 0.0
  %846 = vmatprep.subr.mxu0 0.0
  %847 = vmatpush1.msra.mxu0 0.0
  %848 = vmatprep.subr.mxu0 0.0
  %849 = vmatpush1.msra.mxu0 0.0
  %850 = vmatprep.subr.mxu0 0.0
  %851 = vmatpush1.msra.mxu0 0.0
  %852 = vmatprep.subr.mxu0 0.0
  %853 = vmatpush1.msra.mxu0 0.0
  %854 = vmatprep.subr.mxu0 0.0
  %855 = vmatpush1.msra.mxu0 0.0
  %856 = vmatprep.subr.mxu0 0.0
  %857 = vmatpush1.msra.mxu0 0.0
  %858 = vmatprep.subr.mxu0 0.0
  %859 = vmatpush1.msra.mxu0 0.0
  %860 = vmatprep.subr.mxu0 0.0
  %861 = vmatpush1.msra.mxu0 0.0
  %862 = vmatprep.subr.mxu0 0.0
  %863 = vmatpush1.msra.mxu0 0.0
  %864 = vmatprep.subr.mxu0 0.0
  %865 = vmatpush1.msra.mxu0 0.0
  %866 = vmatprep.subr.mxu0 0.0
  %867 = vmatpush1.msra.mxu0 0.0
  %868 = vmatprep.subr.mxu0 0.0
  %869 = vmatpush1.msra.mxu0 0.0
  %870 = vmatprep.subr.mxu0 0.0
  %871 = vmatpush1.msra.mxu0 0.0
  %872 = vmatprep.subr.mxu0 0.0
  %873 = vmatpush1.msra.mxu0 0.0
  %874 = vmatprep.subr.mxu0 0.0
  %875 = vmatpush1.msra.mxu0 0.0
  %876 = vmatprep.subr.mxu0 0.0
  %877 = vmatpush1.msra.mxu0 0.0
  %878 = vmatprep.subr.mxu0 0.0
  %879 = vmatpush1.msra.mxu0 0.0
  %880 = vmatprep.subr.mxu0 0.0
  %881 = vmatpush1.msra.mxu0 0.0
  %882 = vmatprep.subr.mxu0 0.0
  %883 = vmatpush1.msra.mxu0 0.0
  %884 = vmatprep.subr.mxu0 0.0
  %885 = vmatpush1.msra.mxu0 0.0
  %886 = vmatprep.subr.mxu0 0.0
  %887 = vmatpush1.msra.mxu0 0.0
  %888 = vmatprep.subr.mxu0 0.0
  %889 = vmatpush1.msra.mxu0 0.0
  %890 = vmatprep.subr.mxu0 0.0
  %891 = vmatpush1.msra.mxu0 0.0
  %892 = vmatprep.subr.mxu0 0.0
  %893 = vmatpush1.msra.mxu0 0.0
  %894 = vmatprep.subr.mxu0 0.0
  %895 = vmatpush1.msra.mxu0 0.0
  %896 = vmatprep.subr.mxu0 0.0
  %897 = vmatpush1.msra.mxu0 0.0
  %898 = vmatprep.subr.mxu0 0.0
  %899 = vmatpush1.msra.mxu0 0.0
  %900 = vmatprep.mubr.f32.mxu0 0.0
  %901 = vmatmul.mubr.f32.gmra.mrb[0].mxu0 %v832
  %v902 = vpop.f32.mrb[0].mxu0
  %v903 = vadd.f32 %v782, %v902
  %v904 = vpop.f32.mrb[0].mxu0
  %905 = vmatprep.mubr.f32.mxu0 0.0
  %906 = vmatmul.mubr.f32.gmra.mrb[0].mxu0 %v834
  %v907 = vpop.f32.mrb[0].mxu0
  %v908 = vadd.f32 %v787, %v907
  %v909 = vpop.f32.mrb[0].mxu0
  %910 = vdwg.mxu0
  %v911 = vld [vmem:[%s13] sm:$0x1]
  %v913 = vlaneseq
  %v914 = vshrl.u32 %v913, 7
  %v915 = vsub.s32 0, %v914
  %v916 = vrot.slane %v911, %v915
  %v918 = vadd.f32 %v903, %v916
  %v919 = vadd.f32 %v908, %v916
  %v922 = vcombine.high %v918, %v918
  %v924 = vunpack.c.l.s4 1983009808
  %v925 = vunpack.c.0.s8 %v924
  %v926 = vlaneseq
  %v927 = vshrl.u32 %v926, 7
  %v928 = vsub.s32 %v925, %v927
  %v929 = vrot.slane %v918, %v928
  %v931 = vunpack.c.l.s4 1983009808
  %v932 = vunpack.c.0.s8 %v931
  %v933 = vlaneseq
  %v934 = vshrl.u32 %v933, 7
  %v935 = vsub.s32 %v932, %v934
  %v936 = vrot.slane %v922, %v935
  %v937 = vcombine.high %v929, %v929
  %v938 = vcombine.high %v936, %v936
  %v939 = vcombine.high %v919, %v919
  %v941 = vunpack.c.l.s4 1983009808
  %v942 = vunpack.c.0.s8 %v941
  %v943 = vlaneseq
  %v944 = vshrl.u32 %v943, 7
  %v945 = vsub.s32 %v942, %v944
  %v946 = vrot.slane %v919, %v945
  %v948 = vunpack.c.l.s4 1983009808
  %v949 = vunpack.c.0.s8 %v948
  %v950 = vlaneseq
  %v951 = vshrl.u32 %v950, 7
  %v952 = vsub.s32 %v949, %v951
  %v953 = vrot.slane %v939, %v952
  %v954 = vcombine.high %v946, %v946
  %v955 = vcombine.high %v953, %v953
  %964 = vst.msk [vmem:[%s14] sm:$0x3] %vm640, %v929
  %965 = vst.msk [vmem:[%s14 + $0x2] sm:$0x3] %vm640, %v937
  %966 = vst.msk [vmem:[%s14 + $0x4] sm:$0x3] %vm640, %v936
  %967 = vst.msk [vmem:[%s14 + $0x6] sm:$0x3] %vm640, %v938
  %968 = vst.msk [vmem:[%s14 + $0x8] sm:$0x3] %vm640, %v946
  %969 = vst.msk [vmem:[%s14 + $0xa] sm:$0x3] %vm640, %v954
  %970 = vst.msk [vmem:[%s14 + $0xc] sm:$0x3] %vm640, %v953
  %971 = vst.msk [vmem:[%s14 + $0xe] sm:$0x3] %vm640, %v955
  // Predicated region
  $region65: #{entailment_forward.3} parent=0 // pred_check
    _
  $region66: #{entailment_forward.3} parent=0 // pred_check_branch
    %973 = sbr.rel (0) target = $region68
  $region67: #{entailment_forward.3} parent=0 // pred_region
    _
  $region68: #{entailment_forward.3} parent=0 // pred_fallthru
    _
  // Predicated region
  $region69: #{entailment_forward.3} parent=0 // pred_check
    _
  $region70: #{entailment_forward.3} parent=0 // pred_check_branch
    %975 = sbr.rel (0) target = $region72
  $region71: #{entailment_forward.3} parent=0 // pred_region
    _
  $region72: #{entailment_forward.3} parent=0 // pred_fallthru
    _
  // Predicated region
  $region73: #{entailment_forward.3} parent=0 // pred_check
    _
  $region74: #{entailment_forward.3} parent=0 // pred_check_branch
    %977 = sbr.rel (0) target = $region76
  $region75: #{entailment_forward.3} parent=0 // pred_region
    _
  $region76: #{entailment_forward.3} parent=0 // pred_fallthru
    _
  // Predicated region
  $region77: #{entailment_forward.3} parent=0 // pred_check
    _
  $region78: #{entailment_forward.3} parent=0 // pred_check_branch
    %979 = sbr.rel (0) target = $region80
  $region79: #{entailment_forward.3} parent=0 // pred_region
    _
  $region80: #{entailment_forward.3} parent=0 // pred_fallthru
    _

// kernel: entailment_forward.4
$region0: #{entailment_forward.4}
  #allocation0 [shape = 'u32[]', space=smem, size = 0x4, offset = 0x4, fixed_abs, tag = 'smem constant byte address 0x4 - core index']
  #allocation1 [shape = 'u32[144,128]{1,0:T(1,128)}', space=vmem, size = 0x12000, scoped, tag = 'internal scratch']
  #allocation2 [shape = 'f32[6,2,96]{2,1,0:T(2,128)}', space=vmem, size = 0x1800, scoped, tag = 'scratch operand']
  #allocation3 [shape = 'f32[6,2,96]{2,1,0:T(2,128)}', space=vmem, size = 0x1800, scoped, tag = 'scratch operand']
  #allocation4 [shape = 'f32[6,2,32]{2,1,0:T(2,128)}', space=vmem, size = 0x1800, scoped, tag = 'scratch operand']
  #allocation5 [shape = 'f32[6,2,32]{2,1,0:T(2,128)}', space=vmem, size = 0x1800, scoped, tag = 'scratch operand']
  %s0 = inlined_call_operand.vmem [shape: f32[6,2,16], index: 0, kind: input, shape index: {}]
  %s1 = inlined_call_operand.vmem [shape: f32[2,32], index: 1, kind: input, shape index: {}]
  %s2 = inlined_call_operand.vmem [shape: f32[2,32], index: 2, kind: input, shape index: {}]
  %s3 = inlined_call_operand.vmem [shape: f32[16,96], index: 3, kind: input, shape index: {}]
  %s4 = inlined_call_operand.vmem [shape: f32[32,96], index: 4, kind: input, shape index: {}]
  %s5 = inlined_call_operand.vmem [shape: f32[1,96], index: 5, kind: input, shape index: {}]
  %s6 = inlined_call_operand.vmem [shape: f32[1,32], index: 6, kind: input, shape index: {}]
  %s7 = inlined_call_operand.vmem [shape: f32[16,96], index: 7, kind: input, shape index: {}]
  %s8 = inlined_call_operand.vmem [shape: f32[32,96], index: 8, kind: input, shape index: {}]
  %s9 = inlined_call_operand.vmem [shape: f32[1,96], index: 9, kind: input, shape index: {}]
  %s10 = inlined_call_operand.vmem [shape: f32[1,32], index: 10, kind: input, shape index: {}]
  %s11 = inlined_call_operand.vmem [shape: f32[32,32], index: 11, kind: input, shape index: {}]
  %s12 = inlined_call_operand.vmem [shape: f32[32,32], index: 12, kind: input, shape index: {}]
  %s13 = inlined_call_operand.vmem [shape: f32[1,32], index: 13, kind: input, shape index: {}]
  %s14 = inlined_call_operand.vmem [shape: f32[6,2,32], index: 14, kind: output, shape index: {0}]
  %s15 = inlined_call_operand.hbm [shape: f32[2,2,32], index: 15, kind: output, shape index: {1}]
  %16 = xla_tuple %s14, %s15
  %s17 = sld [smem:[#allocation0]]
  $region81: #{entailment_forward.4} parent=0
    _
  %s19 = ssub.s32 1, %s17
  %s20 = scalar_select 0, %s19, %s17
  $region1: #{entailment_forward.4} parent=0
    #allocation6 [shape = 'u8[2048]{0}', space=vmem, size = 0x800, scoped, tag = 'output window, operand 1, single buffered']
    #allocation7 [shape = 's32[1]{0}', space=sflag, size = 0x4, scoped, tag = 'scoped memory for entailment_forward.4']
    %21 = vsyncpa [#allocation7], 0
    // Predicated region
    $region2: #{entailment_forward.4} parent=1 // pred_check
      _
    $region3: #{entailment_forward.4} parent=1 // pred_check_branch
      %23 = sbr.rel (0) target = $region5
    $region4: #{entailment_forward.4} parent=1 // pred_region
      _
    $region5: #{entailment_forward.4} parent=1 // pred_fallthru
      _
    // Predicated region
    $region6: #{entailment_forward.4} parent=1 // pred_check
      _
    $region7: #{entailment_forward.4} parent=1 // pred_check_branch
      %25 = sbr.rel (0) target = $region9
    $region8: #{entailment_forward.4} parent=1 // pred_region
      _
    $region9: #{entailment_forward.4} parent=1 // pred_fallthru
      _
    // Predicated region
    $region10: #{entailment_forward.4} parent=1 // pred_check
      _
    $region11: #{entailment_forward.4} parent=1 // pred_check_branch
      %27 = sbr.rel (0) target = $region13
    $region12: #{entailment_forward.4} parent=1 // pred_region
      _
    $region13: #{entailment_forward.4} parent=1 // pred_fallthru
      _
    // Predicated region
    $region14: #{entailment_forward.4} parent=1 // pred_check
      _
    $region15: #{entailment_forward.4} parent=1 // pred_check_branch
      %29 = sbr.rel (0) target = $region17
    $region16: #{entailment_forward.4} parent=1 // pred_region
      _
    $region17: #{entailment_forward.4} parent=1 // pred_fallthru
      _
    // Predicated region
    $region18: #{entailment_forward.4} parent=1 // pred_check
      _
    $region19: #{entailment_forward.4} parent=1 // pred_check_branch
      %31 = sbr.rel (0) target = $region21
    $region20: #{entailment_forward.4} parent=1 // pred_region
      _
    $region21: #{entailment_forward.4} parent=1 // pred_fallthru
      _
    // Predicated region
    $region22: #{entailment_forward.4} parent=1 // pred_check
      _
    $region23: #{entailment_forward.4} parent=1 // pred_check_branch
      %33 = sbr.rel (0) target = $region25
    $region24: #{entailment_forward.4} parent=1 // pred_region
      _
    $region25: #{entailment_forward.4} parent=1 // pred_fallthru
      _
    // Predicated region
    $region26: #{entailment_forward.4} parent=1 // pred_check
      _
    $region27: #{entailment_forward.4} parent=1 // pred_check_branch
      %35 = sbr.rel (0) target = $region29
    $region28: #{entailment_forward.4} parent=1 // pred_region
      _
    $region29: #{entailment_forward.4} parent=1 // pred_fallthru
      _
    // Predicated region
    $region30: #{entailment_forward.4} parent=1 // pred_check
      _
    $region31: #{entailment_forward.4} parent=1 // pred_check_branch
      %37 = sbr.rel (0) target = $region33
    $region32: #{entailment_forward.4} parent=1 // pred_region
      _
    $region33: #{entailment_forward.4} parent=1 // pred_fallthru
      _
    // Predicated region
    $region34: #{entailment_forward.4} parent=1 // pred_check
      _
    $region35: #{entailment_forward.4} parent=1 // pred_check_branch
      %39 = sbr.rel (0) target = $region37
    $region36: #{entailment_forward.4} parent=1 // pred_region
      _
    $region37: #{entailment_forward.4} parent=1 // pred_fallthru
      _
    // Predicated region
    $region38: #{entailment_forward.4} parent=1 // pred_check
      _
    $region39: #{entailment_forward.4} parent=1 // pred_check_branch
      %41 = sbr.rel (0) target = $region41
    $region40: #{entailment_forward.4} parent=1 // pred_region
      _
    $region41: #{entailment_forward.4} parent=1 // pred_fallthru
      _
    // Predicated region
    $region42: #{entailment_forward.4} parent=1 // pred_check
      _
    $region43: #{entailment_forward.4} parent=1 // pred_check_branch
      %43 = sbr.rel (0) target = $region45
    $region44: #{entailment_forward.4} parent=1 // pred_region
      _
    $region45: #{entailment_forward.4} parent=1 // pred_fallthru
      _
    // Predicated region
    $region46: #{entailment_forward.4} parent=1 // pred_check
      _
    $region47: #{entailment_forward.4} parent=1 // pred_check_branch
      %45 = sbr.rel (0) target = $region49
    $region48: #{entailment_forward.4} parent=1 // pred_region
      _
    $region49: #{entailment_forward.4} parent=1 // pred_fallthru
      _
    // Predicated region
    $region50: #{entailment_forward.4} parent=1 // pred_check
      _
    $region51: #{entailment_forward.4} parent=1 // pred_check_branch
      %47 = sbr.rel (0) target = $region53
    $region52: #{entailment_forward.4} parent=1 // pred_region
      _
    $region53: #{entailment_forward.4} parent=1 // pred_fallthru
      _
    // Predicated region
    $region54: #{entailment_forward.4} parent=1 // pred_check
      _
    $region55: #{entailment_forward.4} parent=1 // pred_check_branch
      %49 = sbr.rel (0) target = $region57
    $region56: #{entailment_forward.4} parent=1 // pred_region
      _
    $region57: #{entailment_forward.4} parent=1 // pred_fallthru
      _
    %v50 = vld [vmem:[%s0] sm:$0x3]
    %v51 = vld [vmem:[%s0 + $0x2] sm:$0x3]
    %v52 = vld [vmem:[%s0 + $0x4] sm:$0x3]
    %v53 = vld [vmem:[%s0 + $0x6] sm:$0x3]
    %v54 = vld [vmem:[%s0 + $0x8] sm:$0x3]
    %v55 = vld [vmem:[%s0 + $0xa] sm:$0x3]
    %v56 = vld [vmem:[%s3] sm:$0xff]
    %v57 = vld [vmem:[%s3 + $0x8] sm:$0xff]
    %v58 = vld [vmem:[%s5] sm:$0x1]
    %v60 = vlaneseq
    %v61 = vshrl.u32 %v60, 7
    %v62 = vsub.s32 0, %v61
    %v63 = vrot.slane %v58, %v62
    %v71 = vcombine.low %v50, %v51
    %v72 = vcombine.low %v52, %v53
    %v74 = vunpack.c.l.s4 1983009808
    %v75 = vunpack.c.0.s8 %v74
    %v76 = vlaneseq
    %v77 = vshrl.u32 %v76, 7
    %v78 = vsub.s32 %v75, %v77
    %v79 = vrot.slane %v71, %v78
    %v81 = vunpack.c.l.s4 1983009808
    %v82 = vunpack.c.0.s8 %v81
    %v83 = vlaneseq
    %v84 = vshrl.u32 %v83, 7
    %v85 = vsub.s32 %v82, %v84
    %v86 = vrot.slane %v72, %v85
    %v87 = vcombine.low %v79, %v86
    %v88 = vcombine.low %v54, %v55
    %v90 = vunpack.c.l.s4 1983009808
    %v91 = vunpack.c.0.s8 %v90
    %v92 = vlaneseq
    %v93 = vshrl.u32 %v92, 7
    %v94 = vsub.s32 %v91, %v93
    %v95 = vrot.slane %v88, %v94
    %vm96 = vcmask 130048
    %v97 = vsel %vm96, %v87, 0
    %v99 = vsel %vm96, %v95, 0
    %101 = vmatprep.subr.mxu0 0.0
    %102 = vmatpush1.msra.mxu0 %v56
    %103 = vmatprep.subr.mxu0 0.0
    %104 = vmatpush1.msra.mxu0 %v57
    %105 = vmatprep.subr.mxu0 0.0
    %106 = vmatpush1.msra.mxu0 0.0
    %107 = vmatprep.subr.mxu0 0.0
    %108 = vmatpush1.msra.mxu0 0.0
    %109 = vmatprep.subr.mxu0 0.0
    %110 = vmatpush1.msra.mxu0 0.0
    %111 = vmatprep.subr.mxu0 0.0
    %112 = vmatpush1.msra.mxu0 0.0
    %113 = vmatprep.subr.mxu0 0.0
    %114 = vmatpush1.msra.mxu0 0.0
    %115 = vmatprep.subr.mxu0 0.0
    %116 = vmatpush1.msra.mxu0 0.0
    %117 = vmatprep.subr.mxu0 0.0
    %118 = vmatpush1.msra.mxu0 0.0
    %119 = vmatprep.subr.mxu0 0.0
    %120 = vmatpush1.msra.mxu0 0.0
    %121 = vmatprep.subr.mxu0 0.0
    %122 = vmatpush1.msra.mxu0 0.0
    %123 = vmatprep.subr.mxu0 0.0
    %124 = vmatpush1.msra.mxu0 0.0
    %125 = vmatprep.subr.mxu0 0.0
    %126 = vmatpush1.msra.mxu0 0.0
    %127 = vmatprep.subr.mxu0 0.0
    %128 = vmatpush1.msra.mxu0 0.0
    %129 = vmatprep.subr.mxu0 0.0
    %130 = vmatpush1.msra.mxu0 0.0
    %131 = vmatprep.subr.mxu0 0.0
    %132 = vmatpush1.msra.mxu0 0.0
    %133 = vmatprep.subr.mxu0 0.0
    %134 = vmatpush1.msra.mxu0 0.0
    %135 = vmatprep.subr.mxu0 0.0
    %136 = vmatpush1.msra.mxu0 0.0
    %137 = vmatprep.subr.mxu0 0.0
    %138 = vmatpush1.msra.mxu0 0.0
    %139 = vmatprep.subr.mxu0 0.0
    %140 = vmatpush1.msra.mxu0 0.0
    %141 = vmatprep.subr.mxu0 0.0
    %142 = vmatpush1.msra.mxu0 0.0
    %143 = vmatprep.subr.mxu0 0.0
    %144 = vmatpush1.msra.mxu0 0.0
    %145 = vmatprep.subr.mxu0 0.0
    %146 = vmatpush1.msra.mxu0 0.0
    %147 = vmatprep.subr.mxu0 0.0
    %148 = vmatpush1.msra.mxu0 0.0
    %149 = vmatprep.subr.mxu0 0.0
    %150 = vmatpush1.msra.mxu0 0.0
    %151 = vmatprep.subr.mxu0 0.0
    %152 = vmatpush1.msra.mxu0 0.0
    %153 = vmatprep.subr.mxu0 0.0
    %154 = vmatpush1.msra.mxu0 0.0
    %155 = vmatprep.subr.mxu0 0.0
    %156 = vmatpush1.msra.mxu0 0.0
    %157 = vmatprep.subr.mxu0 0.0
    %158 = vmatpush1.msra.mxu0 0.0
    %159 = vmatprep.subr.mxu0 0.0
    %160 = vmatpush1.msra.mxu0 0.0
    %161 = vmatprep.subr.mxu0 0.0
    %162 = vmatpush1.msra.mxu0 0.0
    %163 = vmatprep.subr.mxu0 0.0
    %164 = vmatpush1.msra.mxu0 0.0
    %165 = vmatprep.mubr.f32.mxu0 0.0
    %166 = vmatmul.mubr.f32.gmra.mrb[0].mxu0 %v97
    %v167 = vpop.f32.mrb[0].mxu0
    %v168 = vadd.f32 %v63, %v167
    %v169 = vpop.f32.mrb[0].mxu0
    %170 = vmatprep.mubr.f32.mxu0 0.0
    %171 = vmatmul.mubr.f32.gmra.mrb[0].mxu0 %v99
    %v172 = vpop.f32.mrb[0].mxu0
    %v173 = vadd.f32 %v63, %v172
    %v174 = vpop.f32.mrb[0].mxu0
    %175 = vdwg.mxu0
    %v178 = vcombine.high %v168, %v168
    %v180 = vunpack.c.l.s4 1983009808
    %v181 = vunpack.c.0.s8 %v180
    %v182 = vlaneseq
    %v183 = vshrl.u32 %v182, 7
    %v184 = vsub.s32 %v181, %v183
    %v185 = vrot.slane %v168, %v184
    %v187 = vunpack.c.l.s4 1983009808
    %v188 = vunpack.c.0.s8 %v187
    %v189 = vlaneseq
    %v190 = vshrl.u32 %v189, 7
    %v191 = vsub.s32 %v188, %v190
    %v192 = vrot.slane %v178, %v191
    %v193 = vcombine.high %v185, %v185
    %v194 = vcombine.high %v192, %v192
    %v196 = vunpack.c.l.s4 1983009808
    %v197 = vunpack.c.0.s8 %v196
    %v198 = vlaneseq
    %v199 = vshrl.u32 %v198, 7
    %v200 = vsub.s32 %v197, %v199
    %v201 = vrot.slane %v173, %v200
    %v202 = vcombine.high %v201, %v201
    %vm209 = vcmask 779264
    %210 = vst.msk [vmem:[#allocation2] sm:$0x3] %vm209, %v185
    %211 = vst.msk [vmem:[#allocation2 + $0x2] sm:$0x3] %vm209, %v193
    %212 = vst.msk [vmem:[#allocation2 + $0x4] sm:$0x3] %vm209, %v192
    %213 = vst.msk [vmem:[#allocation2 + $0x6] sm:$0x3] %vm209, %v194
    %214 = vst.msk [vmem:[#allocation2 + $0x8] sm:$0x3] %vm209, %v201
    %215 = vst.msk [vmem:[#allocation2 + $0xa] sm:$0x3] %vm209, %v202
    %v216 = vld [vmem:[%s7] sm:$0xff]
    %v217 = vld [vmem:[%s7 + $0x8] sm:$0xff]
    %v218 = vld [vmem:[%s9] sm:$0x1]
    %v220 = vlaneseq
    %v221 = vshrl.u32 %v220, 7
    %v222 = vsub.s32 0, %v221
    %v223 = vrot.slane %v218, %v222
    %225 = vmatprep.subr.mxu0 0.0
    %226 = vmatpush1.msra.mxu0 %v216
    %227 = vmatprep.subr.mxu0 0.0
    %228 = vmatpush1.msra.mxu0 %v217
    %229 = vmatprep.subr.mxu0 0.0
    %230 = vmatpush1.msra.mxu0 0.0
    %231 = vmatprep.subr.mxu0 0.0
    %232 = vmatpush1.msra.mxu0 0.0
    %233 = vmatprep.subr.mxu0 0.0
    %234 = vmatpush1.msra.mxu0 0.0
    %235 = vmatprep.subr.mxu0 0.0
    %236 = vmatpush1.msra.mxu0 0.0
    %237 = vmatprep.subr.mxu0 0.0
    %238 = vmatpush1.msra.mxu0 0.0
    %239 = vmatprep.subr.mxu0 0.0
    %240 = vmatpush1.msra.mxu0 0.0
    %241 = vmatprep.subr.mxu0 0.0
    %242 = vmatpush1.msra.mxu0 0.0
    %243 = vmatprep.subr.mxu0 0.0
    %244 = vmatpush1.msra.mxu0 0.0
    %245 = vmatprep.subr.mxu0 0.0
    %246 = vmatpush1.msra.mxu0 0.0
    %247 = vmatprep.subr.mxu0 0.0
    %248 = vmatpush1.msra.mxu0 0.0
    %249 = vmatprep.subr.mxu0 0.0
    %250 = vmatpush1.msra.mxu0 0.0
    %251 = vmatprep.subr.mxu0 0.0
    %252 = vmatpush1.msra.mxu0 0.0
    %253 = vmatprep.subr.mxu0 0.0
    %254 = vmatpush1.msra.mxu0 0.0
    %255 = vmatprep.subr.mxu0 0.0
    %256 = vmatpush1.msra.mxu0 0.0
    %257 = vmatprep.subr.mxu0 0.0
    %258 = vmatpush1.msra.mxu0 0.0
    %259 = vmatprep.subr.mxu0 0.0
    %260 = vmatpush1.msra.mxu0 0.0
    %261 = vmatprep.subr.mxu0 0.0
    %262 = vmatpush1.msra.mxu0 0.0
    %263 = vmatprep.subr.mxu0 0.0
    %264 = vmatpush1.msra.mxu0 0.0
    %265 = vmatprep.subr.mxu0 0.0
    %266 = vmatpush1.msra.mxu0 0.0
    %267 = vmatprep.subr.mxu0 0.0
    %268 = vmatpush1.msra.mxu0 0.0
    %269 = vmatprep.subr.mxu0 0.0
    %270 = vmatpush1.msra.mxu0 0.0
    %271 = vmatprep.subr.mxu0 0.0
    %272 = vmatpush1.msra.mxu0 0.0
    %273 = vmatprep.subr.mxu0 0.0
    %274 = vmatpush1.msra.mxu0 0.0
    %275 = vmatprep.subr.mxu0 0.0
    %276 = vmatpush1.msra.mxu0 0.0
    %277 = vmatprep.subr.mxu0 0.0
    %278 = vmatpush1.msra.mxu0 0.0
    %279 = vmatprep.subr.mxu0 0.0
    %280 = vmatpush1.msra.mxu0 0.0
    %281 = vmatprep.subr.mxu0 0.0
    %282 = vmatpush1.msra.mxu0 0.0
    %283 = vmatprep.subr.mxu0 0.0
    %284 = vmatpush1.msra.mxu0 0.0
    %285 = vmatprep.subr.mxu0 0.0
    %286 = vmatpush1.msra.mxu0 0.0
    %287 = vmatprep.subr.mxu0 0.0
    %288 = vmatpush1.msra.mxu0 0.0
    %289 = vmatprep.mubr.f32.mxu0 0.0
    %290 = vmatmul.mubr.f32.gmra.mrb[0].mxu0 %v97
    %v291 = vpop.f32.mrb[0].mxu0
    %v292 = vadd.f32 %v223, %v291
    %v293 = vpop.f32.mrb[0].mxu0
    %294 = vmatprep.mubr.f32.mxu0 0.0
    %295 = vmatmul.mubr.f32.gmra.mrb[0].mxu0 %v99
    %v296 = vpop.f32.mrb[0].mxu0
    %v297 = vadd.f32 %v223, %v296
    %v298 = vpop.f32.mrb[0].mxu0
    %299 = vdwg.mxu0
    %v302 = vcombine.high %v292, %v292
    %v304 = vunpack.c.l.s4 1983009808
    %v305 = vunpack.c.0.s8 %v304
    %v306 = vlaneseq
    %v307 = vshrl.u32 %v306, 7
    %v308 = vsub.s32 %v305, %v307
    %v309 = vrot.slane %v292, %v308
    %v311 = vunpack.c.l.s4 1983009808
    %v312 = vunpack.c.0.s8 %v311
    %v313 = vlaneseq
    %v314 = vshrl.u32 %v313, 7
    %v315 = vsub.s32 %v312, %v314
    %v316 = vrot.slane %v302, %v315
    %v317 = vcombine.high %v309, %v309
    %v318 = vcombine.high %v316, %v316
    %v320 = vunpack.c.l.s4 1983009808
    %v321 = vunpack.c.0.s8 %v320
    %v322 = vlaneseq
    %v323 = vshrl.u32 %v322, 7
    %v324 = vsub.s32 %v321, %v323
    %v325 = vrot.slane %v297, %v324
    %v326 = vcombine.high %v325, %v325
    %333 = vst.msk [vmem:[#allocation3] sm:$0x3] %vm209, %v309
    %334 = vst.msk [vmem:[#allocation3 + $0x2] sm:$0x3] %vm209, %v317
    %335 = vst.msk [vmem:[#allocation3 + $0x4] sm:$0x3] %vm209, %v316
    %336 = vst.msk [vmem:[#allocation3 + $0x6] sm:$0x3] %vm209, %v318
    %337 = vst.msk [vmem:[#allocation3 + $0x8] sm:$0x3] %vm209, %v325
    %338 = vst.msk [vmem:[#allocation3 + $0xa] sm:$0x3] %vm209, %v326
    %v339 = vld [vmem:[%s4] sm:$0xff]
    %v340 = vld [vmem:[%s4 + $0x8] sm:$0xff]
    %v341 = vld [vmem:[%s4 + $0x10] sm:$0xff]
    %v342 = vld [vmem:[%s4 + $0x18] sm:$0xff]
    %v343 = vld [vmem:[%s8] sm:$0xff]
    %v344 = vld [vmem:[%s8 + $0x8] sm:$0xff]
    %v345 = vld [vmem:[%s8 + $0x10] sm:$0xff]
    %v346 = vld [vmem:[%s8 + $0x18] sm:$0xff]
    %v347 = vld [vmem:[%s6] sm:$0x1]
    %v349 = vlaneseq
    %v350 = vshrl.u32 %v349, 7
    %v351 = vsub.s32 0, %v350
    %v352 = vrot.slane %v347, %v351
    %v353 = vld [vmem:[%s10] sm:$0x1]
    %v355 = vlaneseq
    %v356 = vshrl.u32 %v355, 7
    %v357 = vsub.s32 0, %v356
    %v358 = vrot.slane %v353, %v357
    %v359 = vld [vmem:[%s1] sm:$0x3]
    %v360 = vld [vmem:[%s2] sm:$0x3]
    loop: start=0, step=1, limit=6
    $region58: #{entailment_forward.4} parent=1 // loop_pre_header
      _
    $region59: #{entailment_forward.4} parent=1 // loop_header
      %s362 = sphi 0, %s366
      %p363 = scmp.ge.s32.totalorder %s362, 6
      %v367 = vphi %v359, %v591
      %v368 = vphi %v360, %v598
    $region60: #{entailment_forward.4} parent=1 // loop_header_branch
      %365 = sbr.rel (%p363) target = $region64
    $region61: #{entailment_forward.4} parent=1 // loop_body
      %s369 = ssub.s32 5, %s362
      %s370 = smul.u32 %s362, 2
      %s371 = scalar_lea.vmem [#allocation2], %s370
      %v372 = vld [vmem:[%s371] sm:$0x3]
      %vm373 = vcmask 261120
      %v375 = vsel %vm373, %v367, 0
      %377 = vmatprep.subr.mxu0 0.0
      %378 = vmatpush1.msra.mxu0 %v339
      %379 = vmatprep.subr.mxu0 0.0
      %380 = vmatpush1.msra.mxu0 %v340
      %381 = vmatprep.subr.mxu0 0.0
      %382 = vmatpush1.msra.mxu0 %v341
      %383 = vmatprep.subr.mxu0 0.0
      %384 = vmatpush1.msra.mxu0 %v342
      %385 = vmatprep.subr.mxu0 0.0
      %386 = vmatpush1.msra.mxu0 0.0
      %387 = vmatprep.subr.mxu0 0.0
      %388 = vmatpush1.msra.mxu0 0.0
      %389 = vmatprep.subr.mxu0 0.0
      %390 = vmatpush1.msra.mxu0 0.0
      %391 = vmatprep.subr.mxu0 0.0
      %392 = vmatpush1.msra.mxu0 0.0
      %393 = vmatprep.subr.mxu0 0.0
      %394 = vmatpush1.msra.mxu0 0.0
      %395 = vmatprep.subr.mxu0 0.0
      %396 = vmatpush1.msra.mxu0 0.0
      %397 = vmatprep.subr.mxu0 0.0
      %398 = vmatpush1.msra.mxu0 0.0
      %399 = vmatprep.subr.mxu0 0.0
      %400 = vmatpush1.msra.mxu0 0.0
      %401 = vmatprep.subr.mxu0 0.0
      %402 = vmatpush1.msra.mxu0 0.0
      %403 = vmatprep.subr.mxu0 0.0
      %404 = vmatpush1.msra.mxu0 0.0
      %405 = vmatprep.subr.mxu0 0.0
      %406 = vmatpush1.msra.mxu0 0.0
      %407 = vmatprep.subr.mxu0 0.0
      %408 = vmatpush1.msra.mxu0 0.0
      %409 = vmatprep.subr.mxu0 0.0
      %410 = vmatpush1.msra.mxu0 0.0
      %411 = vmatprep.subr.mxu0 0.0
      %412 = vmatpush1.msra.mxu0 0.0
      %413 = vmatprep.subr.mxu0 0.0
      %414 = vmatpush1.msra.mxu0 0.0
      %415 = vmatprep.subr.mxu0 0.0
      %416 = vmatpush1.msra.mxu0 0.0
      %417 = vmatprep.subr.mxu0 0.0
      %418 = vmatpush1.msra.mxu0 0.0
      %419 = vmatprep.subr.mxu0 0.0
      %420 = vmatpush1.msra.mxu0 0.0
      %421 = vmatprep.subr.mxu0 0.0
      %422 = vmatpush1.msra.mxu0 0.0
      %423 = vmatprep.subr.mxu0 0.0
      %424 = vmatpush1.msra.mxu0 0.0
      %425 = vmatprep.subr.mxu0 0.0
      %426 = vmatpush1.msra.mxu0 0.0
      %427 = vmatprep.subr.mxu0 0.0
      %428 = vmatpush1.msra.mxu0 0.0
      %429 = vmatprep.subr.mxu0 0.0
      %430 = vmatpush1.msra.mxu0 0.0
      %431 = vmatprep.subr.mxu0 0.0
      %432 = vmatpush1.msra.mxu0 0.0
      %433 = vmatprep.subr.mxu0 0.0
      %434 = vmatpush1.msra.mxu0 0.0
      %435 = vmatprep.subr.mxu0 0.0
      %436 = vmatpush1.msra.mxu0 0.0
      %437 = vmatprep.subr.mxu0 0.0
      %438 = vmatpush1.msra.mxu0 0.0
      %439 = vmatprep.subr.mxu0 0.0
      %440 = vmatpush1.msra.mxu0 0.0
      %441 = vmatprep.mubr.f32.mxu0 0.0
      %442 = vmatmul.mubr.f32.gmra.mrb[0].mxu0 %v375
      %v443 = vpop.f32.mrb[0].mxu0
      %v444 = vadd.f32 0.0, %v443
      %v445 = vpop.f32.mrb[0].mxu0
      %446 = vdwg.mxu0
      %v447 = vadd.f32 %v372, %v444
      %v448 = vxor.u32 %v447, 2147483648
      %v449 = vmul.f32 %v448, 1.442695
      %v450 = vpow.pop %v449
      %v451 = vadd.f32 %v450, 1.0
      %v452 = vrcp.pop %v451
      %v453 = vmul.f32 1.0, %v452
      %454 = vrot.lane.b32.xlu0 %v352, 64
      %v455 = vpop.permute.xlu0 %454
      %v457 = vadd.f32 %v444, %v455
      %459 = vrot.lane.b32.xlu0 %v457, 64
      %v460 = vpop.permute.xlu0 %459
      %v462 = vmul.f32 %v453, %v460
      %464 = vrot.lane.b32.xlu0 %v462, 64
      %v465 = vpop.permute.xlu0 %464
      %v467 = vadd.f32 %v372, %v465
      %v468 = vtanh.pop %v467
      %v469 = vsub.f32 1.0, %v453
      %471 = vrot.lane.b32.xlu0 %v468, 96
      %v472 = vpop.permute.xlu0 %471
      %v474 = vmul.f32 %v469, %v472
      %475 = vrot.lane.b32.xlu0 %v367, 32
      %v476 = vpop.permute.xlu0 %475
      %v478 = vmul.f32 %v453, %v476
      %v479 = vadd.f32 %v474, %v478
      %s480 = smul.u32 %s369, 2
      %s481 = scalar_lea.vmem [#allocation3], %s480
      %v482 = vld [vmem:[%s481] sm:$0x3]
      %v484 = vsel %vm373, %v368, 0
      %486 = vmatprep.subr.mxu0 0.0
      %487 = vmatpush1.msra.mxu0 %v343
      %488 = vmatprep.subr.mxu0 0.0
      %489 = vmatpush1.msra.mxu0 %v344
      %490 = vmatprep.subr.mxu0 0.0
      %491 = vmatpush1.msra.mxu0 %v345
      %492 = vmatprep.subr.mxu0 0.0
      %493 = vmatpush1.msra.mxu0 %v346
      %494 = vmatprep.subr.mxu0 0.0
      %495 = vmatpush1.msra.mxu0 0.0
      %496 = vmatprep.subr.mxu0 0.0
      %497 = vmatpush1.msra.mxu0 0.0
      %498 = vmatprep.subr.mxu0 0.0
      %499 = vmatpush1.msra.mxu0 0.0
      %500 = vmatprep.subr.mxu0 0.0
      %501 = vmatpush1.msra.mxu0 0.0
      %502 = vmatprep.subr.mxu0 0.0
      %503 = vmatpush1.msra.mxu0 0.0
      %504 = vmatprep.subr.mxu0 0.0
      %505 = vmatpush1.msra.mxu0 0.0
      %506 = vmatprep.subr.mxu0 0.0
      %507 = vmatpush1.msra.mxu0 0.0
      %508 = vmatprep.subr.mxu0 0.0
      %509 = vmatpush1.msra.mxu0 0.0
      %510 = vmatprep.subr.mxu0 0.0
      %511 = vmatpush1.msra.mxu0 0.0
      %512 = vmatprep.subr.mxu0 0.0
      %513 = vmatpush1.msra.mxu0 0.0
      %514 = vmatprep.subr.mxu0 0.0
      %515 = vmatpush1.msra.mxu0 0.0
      %516 = vmatprep.subr.mxu0 0.0
      %517 = vmatpush1.msra.mxu0 0.0
      %518 = vmatprep.subr.mxu0 0.0
      %519 = vmatpush1.msra.mxu0 0.0
      %520 = vmatprep.subr.mxu0 0.0
      %521 = vmatpush1.msra.mxu0 0.0
      %522 = vmatprep.subr.mxu0 0.0
      %523 = vmatpush1.msra.mxu0 0.0
      %524 = vmatprep.subr.mxu0 0.0
      %525 = vmatpush1.msra.mxu0 0.0
      %526 = vmatprep.subr.mxu0 0.0
      %527 = vmatpush1.msra.mxu0 0.0
      %528 = vmatprep.subr.mxu0 0.0
      %529 = vmatpush1.msra.mxu0 0.0
      %530 = vmatprep.subr.mxu0 0.0
      %531 = vmatpush1.msra.mxu0 0.0
      %532 = vmatprep.subr.mxu0 0.0
      %533 = vmatpush1.msra.mxu0 0.0
      %534 = vmatprep.subr.mxu0 0.0
      %535 = vmatpush1.msra.mxu0 0.0
      %536 = vmatprep.subr.mxu0 0.0
      %537 = vmatpush1.msra.mxu0 0.0
      %538 = vmatprep.subr.mxu0 0.0
      %539 = vmatpush1.msra.mxu0 0.0
      %540 = vmatprep.subr.mxu0 0.0
      %541 = vmatpush1.msra.mxu0 0.0
      %542 = vmatprep.subr.mxu0 0.0
      %543 = vmatpush1.msra.mxu0 0.0
      %544 = vmatprep.subr.mxu0 0.0
      %545 = vmatpush1.msra.mxu0 0.0
      %546 = vmatprep.subr.mxu0 0.0
      %547 = vmatpush1.msra.mxu0 0.0
      %548 = vmatprep.subr.mxu0 0.0
      %549 = vmatpush1.msra.mxu0 0.0
      %550 = vmatprep.mubr.f32.mxu0 0.0
      %551 = vmatmul.mubr.f32.gmra.mrb[0].mxu0 %v484
      %v552 = vpop.f32.mrb[0].mxu0
      %v553 = vadd.f32 0.0, %v552
      %v554 = vpop.f32.mrb[0].mxu0
      %555 = vdwg.mxu0
      %v556 = vadd.f32 %v482, %v553
      %v557 = vxor.u32 %v556, 2147483648
      %v558 = vmul.f32 %v557, 1.442695
      %v559 = vpow.pop %v558
      %v560 = vadd.f32 %v559, 1.0
      %v561 = vrcp.pop %v560
      %v562 = vmul.f32 1.0, %v561
      %563 = vrot.lane.b32.xlu0 %v358, 64
      %v564 = vpop.permute.xlu0 %563
      %v566 = vadd.f32 %v553, %v564
      %568 = vrot.lane.b32.xlu0 %v566, 64
      %v569 = vpop.permute.xlu0 %568
      %v571 = vmul.f32 %v562, %v569
      %573 = vrot.lane.b32.xlu0 %v571, 64
      %v574 = vpop.permute.xlu0 %573
      %v576 = vadd.f32 %v482, %v574
      %v577 = vtanh.pop %v576
      %v578 = vsub.f32 1.0, %v562
      %580 = vrot.lane.b32.xlu0 %v577, 96
      %v581 = vpop.permute.xlu0 %580
      %v583 = vmul.f32 %v578, %v581
      %584 = vrot.lane.b32.xlu0 %v368, 32
      %v585 = vpop.permute.xlu0 %584
      %v587 = vmul.f32 %v562, %v585
      %v588 = vadd.f32 %v583, %v587
      %590 = vrot.lane.b32.xlu0 %v479, 96
      %v591 = vpop.permute.xlu0 %590
      %s593 = scalar_lea.vmem [#allocation4], %s370
      %vm594 = vcmask 254976
      %595 = vst.msk [vmem:[%s593] sm:$0x3] %vm594, %v591
      %597 = vrot.lane.b32.xlu0 %v588, 96
      %v598 = vpop.permute.xlu0 %597
      %s600 = scalar_lea.vmem [#allocation5], %s480
      %601 = vst.msk [vmem:[%s600] sm:$0x3] %vm594, %v598
    $region62: #{entailment_forward.4} parent=1 // loop_footer
      %s366 = sadd.s32 1, %s362
    $region63: #{entailment_forward.4} parent=1 // loop_footer_branch
      %361 = sbr.rel target = $region59
    $region64: #{entailment_forward.4} parent=1 // loop_exit
      _
    %vm602 = vcmask 254976
    %603 = vst.msk [vmem:[#allocation6] sm:$0x3] %vm602, %v367
    %s604 = scalar_lea.vmem [#allocation6], 2
    %605 = vst.msk [vmem:[%s604] sm:$0x3] %vm602, %v368
    %v606 = vld [vmem:[#allocation4] sm:$0x3]
    %v607 = vld [vmem:[#allocation4 + $0x2] sm:$0x3]
    %v608 = vld [vmem:[#allocation4 + $0x4] sm:$0x3]
    %v609 = vld [vmem:[#allocation4 + $0x6] sm:$0x3]
    %v610 = vld [vmem:[#allocation4 + $0x8] sm:$0x3]
    %v611 = vld [vmem:[#allocation4 + $0xa] sm:$0x3]
    %v612 = vld [vmem:[%s11] sm:$0xff]
    %v613 = vld [vmem:[%s11 + $0x8] sm:$0xff]
    %v614 = vld [vmem:[%s11 + $0x10] sm:$0xff]
    %v615 = vld [vmem:[%s11 + $0x18] sm:$0xff]
    %v616 = vld [vmem:[#allocation5] sm:$0x3]
    %v617 = vld [vmem:[#allocation5 + $0x2] sm:$0x3]
    %v618 = vld [vmem:[#allocation5 + $0x4] sm:$0x3]
    %v619 = vld [vmem:[#allocation5 + $0x6] sm:$0x3]
    %v620 = vld [vmem:[#allocation5 + $0x8] sm:$0x3]
    %v621 = vld [vmem:[#allocation5 + $0xa] sm:$0x3]
    %v622 = vld [vmem:[%s12] sm:$0xff]
    %v623 = vld [vmem:[%s12 + $0x8] sm:$0xff]
    %v624 = vld [vmem:[%s12 + $0x10] sm:$0xff]
    %v625 = vld [vmem:[%s12 + $0x18] sm:$0xff]
    %v632 = vcombine.low %v616, %v617
    %v633 = vcombine.low %v618, %v619
    %v635 = vunpack.c.l.s4 1983009808
    %v636 = vunpack.c.0.s8 %v635
    %v637 = vlaneseq
    %v638 = vshrl.u32 %v637, 7
    %v639 = vsub.s32 %v636, %v638
    %v640 = vrot.slane %v632, %v639
    %v642 = vunpack.c.l.s4 1983009808
    %v643 = vunpack.c.0.s8 %v642
    %v644 = vlaneseq
    %v645 = vshrl.u32 %v644, 7
    %v646 = vsub.s32 %v643, %v645
    %v647 = vrot.slane %v633, %v646
    %v648 = vcombine.low %v640, %v647
    %v649 = vcombine.low %v620, %v621
    %v651 = vunpack.c.l.s4 1983009808
    %v652 = vunpack.c.0.s8 %v651
    %v653 = vlaneseq
    %v654 = vshrl.u32 %v653, 7
    %v655 = vsub.s32 %v652, %v654
    %v656 = vrot.slane %v649, %v655
    %vm657 = vcmask 261120
    %v658 = vsel %vm657, %v648, 0
    %v660 = vsel %vm657, %v656, 0
    %662 = vmatprep.subr.mxu0 0.0
    %663 = vmatpush1.msra.mxu0 %v622
    %664 = vmatprep.subr.mxu0 0.0
    %665 = vmatpush1.msra.mxu0 %v623
    %666 = vmatprep.subr.mxu0 0.0
    %667 = vmatpush1.msra.mxu0 %v624
    %668 = vmatprep.subr.mxu0 0.0
    %669 = vmatpush1.msra.mxu0 %v625
    %670 = vmatprep.subr.mxu0 0.0
    %671 = vmatpush1.msra.mxu0 0.0
    %672 = vmatprep.subr.mxu0 0.0
    %673 = vmatpush1.msra.mxu0 0.0
    %674 = vmatprep.subr.mxu0 0.0
    %675 = vmatpush1.msra.mxu0 0.0
    %676 = vmatprep.subr.mxu0 0.0
    %677 = vmatpush1.msra.mxu0 0.0
    %678 = vmatprep.subr.mxu0 0.0
    %679 = vmatpush1.msra.mxu0 0.0
    %680 = vmatprep.subr.mxu0 0.0
    %681 = vmatpush1.msra.mxu0 0.0
    %682 = vmatprep.subr.mxu0 0.0
    %683 = vmatpush1.msra.mxu0 0.0
    %684 = vmatprep.subr.mxu0 0.0
    %685 = vmatpush1.msra.mxu0 0.0
    %686 = vmatprep.subr.mxu0 0.0
    %687 = vmatpush1.msra.mxu0 0.0
    %688 = vmatprep.subr.mxu0 0.0
    %689 = vmatpush1.msra.mxu0 0.0
    %690 = vmatprep.subr.mxu0 0.0
    %691 = vmatpush1.msra.mxu0 0.0
    %692 = vmatprep.subr.mxu0 0.0
    %693 = vmatpush1.msra.mxu0 0.0
    %694 = vmatprep.subr.mxu0 0.0
    %695 = vmatpush1.msra.mxu0 0.0
    %696 = vmatprep.subr.mxu0 0.0
    %697 = vmatpush1.msra.mxu0 0.0
    %698 = vmatprep.subr.mxu0 0.0
    %699 = vmatpush1.msra.mxu0 0.0
    %700 = vmatprep.subr.mxu0 0.0
    %701 = vmatpush1.msra.mxu0 0.0
    %702 = vmatprep.subr.mxu0 0.0
    %703 = vmatpush1.msra.mxu0 0.0
    %704 = vmatprep.subr.mxu0 0.0
    %705 = vmatpush1.msra.mxu0 0.0
    %706 = vmatprep.subr.mxu0 0.0
    %707 = vmatpush1.msra.mxu0 0.0
    %708 = vmatprep.subr.mxu0 0.0
    %709 = vmatpush1.msra.mxu0 0.0
    %710 = vmatprep.subr.mxu0 0.0
    %711 = vmatpush1.msra.mxu0 0.0
    %712 = vmatprep.subr.mxu0 0.0
    %713 = vmatpush1.msra.mxu0 0.0
    %714 = vmatprep.subr.mxu0 0.0
    %715 = vmatpush1.msra.mxu0 0.0
    %716 = vmatprep.subr.mxu0 0.0
    %717 = vmatpush1.msra.mxu0 0.0
    %718 = vmatprep.subr.mxu0 0.0
    %719 = vmatpush1.msra.mxu0 0.0
    %720 = vmatprep.subr.mxu0 0.0
    %721 = vmatpush1.msra.mxu0 0.0
    %722 = vmatprep.subr.mxu0 0.0
    %723 = vmatpush1.msra.mxu0 0.0
    %724 = vmatprep.subr.mxu0 0.0
    %725 = vmatpush1.msra.mxu0 0.0
    %726 = vmatprep.mubr.f32.mxu0 0.0
    %727 = vmatmul.mubr.f32.gmra.mrb[0].mxu0 %v658
    %v728 = vpop.f32.mrb[0].mxu0
    %v729 = vadd.f32 0.0, %v728
    %v730 = vpop.f32.mrb[0].mxu0
    %731 = vmatprep.mubr.f32.mxu0 0.0
    %732 = vmatmul.mubr.f32.gmra.mrb[0].mxu0 %v660
    %v733 = vpop.f32.mrb[0].mxu0
    %v734 = vadd.f32 0.0, %v733
    %v735 = vpop.f32.mrb[0].mxu0
    %736 = vdwg.mxu0
    %v743 = vcombine.low %v606, %v607
    %v744 = vcombine.low %v608, %v609
    %v746 = vunpack.c.l.s4 1983009808
    %v747 = vunpack.c.0.s8 %v746
    %v748 = vlaneseq
    %v749 = vshrl.u32 %v748, 7
    %v750 = vsub.s32 %v747, %v749
    %v751 = vrot.slane %v743, %v750
    %v753 = vunpack.c.l.s4 1983009808
    %v754 = vunpack.c.0.s8 %v753
    %v755 = vlaneseq
    %v756 = vshrl.u32 %v755, 7
    %v757 = vsub.s32 %v754, %v756
    %v758 = vrot.slane %v744, %v757
    %v759 = vcombine.low %v751, %v758
    %v760 = vcombine.low %v610, %v611
    %v762 = vunpack.c.l.s4 1983009808
    %v763 = vunpack.c.0.s8 %v762
    %v764 = vlaneseq
    %v765 = vshrl.u32 %v764, 7
    %v766 = vsub.s32 %v763, %v765
    %v767 = vrot.slane %v760, %v766
    %v768 = vsel %vm657, %v759, 0
    %v770 = vsel %vm657, %v767, 0
    %772 = vmatprep.subr.mxu0 0.0
    %773 = vmatpush1.msra.mxu0 %v612
    %774 = vmatprep.subr.mxu0 0.0
    %775 = vmatpush1.msra.mxu0 %v613
    %776 = vmatprep.subr.mxu0 0.0
    %777 = vmatpush1.msra.mxu0 %v614
    %778 = vmatprep.subr.mxu0 0.0
    %779 = vmatpush1.msra.mxu0 %v615
    %780 = vmatprep.subr.mxu0 0.0
    %781 = vmatpush1.msra.mxu0 0.0
    %782 = vmatprep.subr.mxu0 0.0
    %783 = vmatpush1.msra.mxu0 0.0
    %784 = vmatprep.subr.mxu0 0.0
    %785 = vmatpush1.msra.mxu0 0.0
    %786 = vmatprep.subr.mxu0 0.0
    %787 = vmatpush1.msra.mxu0 0.0
    %788 = vmatprep.subr.mxu0 0.0
    %789 = vmatpush1.msra.mxu0 0.0
    %790 = vmatprep.subr.mxu0 0.0
    %791 = vmatpush1.msra.mxu0 0.0
    %792 = vmatprep.subr.mxu0 0.0
    %793 = vmatpush1.msra.mxu0 0.0
    %794 = vmatprep.subr.mxu0 0.0
    %795 = vmatpush1.msra.mxu0 0.0
    %796 = vmatprep.subr.mxu0 0.0
    %797 = vmatpush1.msra.mxu0 0.0
    %798 = vmatprep.subr.mxu0 0.0
    %799 = vmatpush1.msra.mxu0 0.0
    %800 = vmatprep.subr.mxu0 0.0
    %801 = vmatpush1.msra.mxu0 0.0
    %802 = vmatprep.subr.mxu0 0.0
    %803 = vmatpush1.msra.mxu0 0.0
    %804 = vmatprep.subr.mxu0 0.0
    %805 = vmatpush1.msra.mxu0 0.0
    %806 = vmatprep.subr.mxu0 0.0
    %807 = vmatpush1.msra.mxu0 0.0
    %808 = vmatprep.subr.mxu0 0.0
    %809 = vmatpush1.msra.mxu0 0.0
    %810 = vmatprep.subr.mxu0 0.0
    %811 = vmatpush1.msra.mxu0 0.0
    %812 = vmatprep.subr.mxu0 0.0
    %813 = vmatpush1.msra.mxu0 0.0
    %814 = vmatprep.subr.mxu0 0.0
    %815 = vmatpush1.msra.mxu0 0.0
    %816 = vmatprep.subr.mxu0 0.0
    %817 = vmatpush1.msra.mxu0 0.0
    %818 = vmatprep.subr.mxu0 0.0
    %819 = vmatpush1.msra.mxu0 0.0
    %820 = vmatprep.subr.mxu0 0.0
    %821 = vmatpush1.msra.mxu0 0.0
    %822 = vmatprep.subr.mxu0 0.0
    %823 = vmatpush1.msra.mxu0 0.0
    %824 = vmatprep.subr.mxu0 0.0
    %825 = vmatpush1.msra.mxu0 0.0
    %826 = vmatprep.subr.mxu0 0.0
    %827 = vmatpush1.msra.mxu0 0.0
    %828 = vmatprep.subr.mxu0 0.0
    %829 = vmatpush1.msra.mxu0 0.0
    %830 = vmatprep.subr.mxu0 0.0
    %831 = vmatpush1.msra.mxu0 0.0
    %832 = vmatprep.subr.mxu0 0.0
    %833 = vmatpush1.msra.mxu0 0.0
    %834 = vmatprep.subr.mxu0 0.0
    %835 = vmatpush1.msra.mxu0 0.0
    %836 = vmatprep.mubr.f32.mxu0 0.0
    %837 = vmatmul.mubr.f32.gmra.mrb[0].mxu0 %v768
    %v838 = vpop.f32.mrb[0].mxu0
    %v839 = vadd.f32 %v729, %v838
    %v840 = vpop.f32.mrb[0].mxu0
    %841 = vmatprep.mubr.f32.mxu0 0.0
    %842 = vmatmul.mubr.f32.gmra.mrb[0].mxu0 %v770
    %v843 = vpop.f32.mrb[0].mxu0
    %v844 = vadd.f32 %v734, %v843
    %v845 = vpop.f32.mrb[0].mxu0
    %846 = vdwg.mxu0
    %v847 = vld [vmem:[%s13] sm:$0x1]
    %v849 = vlaneseq
    %v850 = vshrl.u32 %v849, 7
    %v851 = vsub.s32 0, %v850
    %v852 = vrot.slane %v847, %v851
    %v854 = vadd.f32 %v839, %v852
    %v855 = vadd.f32 %v844, %v852
    %v858 = vcombine.high %v854, %v854
    %v860 = vunpack.c.l.s4 1983009808
    %v861 = vunpack.c.0.s8 %v860
    %v862 = vlaneseq
    %v863 = vshrl.u32 %v862, 7
    %v864 = vsub.s32 %v861, %v863
    %v865 = vrot.slane %v854, %v864
    %v867 = vunpack.c.l.s4 1983009808
    %v868 = vunpack.c.0.s8 %v867
    %v869 = vlaneseq
    %v870 = vshrl.u32 %v869, 7
    %v871 = vsub.s32 %v868, %v870
    %v872 = vrot.slane %v858, %v871
    %v873 = vcombine.high %v865, %v865
    %v874 = vcombine.high %v872, %v872
    %v876 = vunpack.c.l.s4 1983009808
    %v877 = vunpack.c.0.s8 %v876
    %v878 = vlaneseq
    %v879 = vshrl.u32 %v878, 7
    %v880 = vsub.s32 %v877, %v879
    %v881 = vrot.slane %v855, %v880
    %v882 = vcombine.high %v881, %v881
    %889 = vst.msk [vmem:[%s14] sm:$0x3] %vm602, %v865
    %890 = vst.msk [vmem:[%s14 + $0x2] sm:$0x3] %vm602, %v873
    %891 = vst.msk [vmem:[%s14 + $0x4] sm:$0x3] %vm602, %v872
    %892 = vst.msk [vmem:[%s14 + $0x6] sm:$0x3] %vm602, %v874
    %893 = vst.msk [vmem:[%s14 + $0x8] sm:$0x3] %vm602, %v881
    %894 = vst.msk [vmem:[%s14 + $0xa] sm:$0x3] %vm602, %v882
    // Predicated region
    $region65: #{entailment_forward.4} parent=1 // pred_check
      _
    $region66: #{entailment_forward.4} parent=1 // pred_check_branch
      %896 = sbr.rel (0) target = $region68
    $region67: #{entailment_forward.4} parent=1 // pred_region
      _
    $region68: #{entailment_forward.4} parent=1 // pred_fallthru
      _
    // Predicated region
    $region69: #{entailment_forward.4} parent=1 // pred_check
      _
    $region70: #{entailment_forward.4} parent=1 // pred_check_branch
      %898 = sbr.rel (0) target = $region72
    $region71: #{entailment_forward.4} parent=1 // pred_region
      %s900 = ssub.s32 64, 64
      %901 = vsyncadd [#allocation7], %s900
      %s902 = sshll.u32 [#allocation6], 4
      %s903 = int_to_ptr.vmem [resolvable:$true] %s902
      %908 = dma.vmem_to_hbm [thread:$0]  %s903, 64, %s15, [#allocation7], 32, 32, 2
    $region72: #{entailment_forward.4} parent=1 // pred_fallthru
      _
    // Predicated region
    $region73: #{entailment_forward.4} parent=1 // pred_check
      _
    $region74: #{entailment_forward.4} parent=1 // pred_check_branch
      %910 = sbr.rel (0) target = $region76
    $region75: #{entailment_forward.4} parent=1 // pred_region
      _
    $region76: #{entailment_forward.4} parent=1 // pred_fallthru
      _
    // Predicated region
    $region77: #{entailment_forward.4} parent=1 // pred_check
      _
    $region78: #{entailment_forward.4} parent=1 // pred_check_branch
      %912 = sbr.rel (0) target = $region80
    $region79: #{entailment_forward.4} parent=1 // pred_region
      %913 = dma.done [#allocation7], 64
    $region80: #{entailment_forward.4} parent=1 // pred_fallthru
      _
    %914 = vsyncpa [#allocation7], 1

// kernel: entailment_forward.5
$region0: #{entailment_forward.5}
  #allocation0 [shape = 'u32[]', space=smem, size = 0x4, offset = 0x4, fixed_abs, tag = 'smem constant byte address 0x4 - core index']
  #allocation1 [shape = 'u32[144,128]{1,0:T(1,128)}', space=vmem, size = 0x12000, scoped, tag = 'internal scratch']
  #allocation2 [shape = 'f32[6,2,32]{2,1,0:T(2,128)}', space=vmem, size = 0x1800, scoped, tag = 'scratch operand']
  #allocation3 [shape = 'f32[1,1]{1,0:T(1,128)S(1)}', space=vmem, size = 0x200, scoped, tag = 'scoped memory for entailment_forward.5']
  #allocation4 [shape = 'f32[1,1]{1,0:T(1,128)S(1)}', space=vmem, size = 0x200, scoped, tag = 'scoped memory for entailment_forward.5']
  %s0 = inlined_call_operand.vmem [shape: f32[6,2,32], index: 0, kind: input, shape index: {}]
  %s1 = inlined_call_operand.vmem [shape: f32[2,8,32], index: 1, kind: input, shape index: {}]
  %s2 = inlined_call_operand.vmem [shape: f32[2,8,32], index: 2, kind: input, shape index: {}]
  %s3 = inlined_call_operand.vmem [shape: f32[2,8], index: 3, kind: input, shape index: {}]
  %s4 = inlined_call_operand.vmem [shape: f32[1,32], index: 4, kind: input, shape index: {}]
  %s5 = inlined_call_operand.vmem [shape: f32[32,32], index: 5, kind: input, shape index: {}]
  %s6 = inlined_call_operand.vmem [shape: f32[1,32], index: 6, kind: input, shape index: {}]
  %s7 = inlined_call_operand.vmem [shape: f32[32,32], index: 7, kind: input, shape index: {}]
  %s8 = inlined_call_operand.vmem [shape: f32[1,32], index: 8, kind: input, shape index: {}]
  %s9 = inlined_call_operand.vmem [shape: f32[1,32], index: 9, kind: input, shape index: {}]
  %s10 = inlined_call_operand.<no memory space> [shape: f32[1,1], index: 10, kind: input, shape index: {}]
  %s11 = inlined_call_operand.vmem [shape: f32[32,32], index: 11, kind: input, shape index: {}]
  %s12 = inlined_call_operand.vmem [shape: f32[1,32], index: 12, kind: input, shape index: {}]
  %s13 = inlined_call_operand.vmem [shape: f32[32,32], index: 13, kind: input, shape index: {}]
  %s14 = inlined_call_operand.vmem [shape: f32[1,32], index: 14, kind: input, shape index: {}]
  %s15 = inlined_call_operand.<no memory space> [shape: f32[1,1], index: 15, kind: input, shape index: {}]
  %s16 = inlined_call_operand.vmem [shape: f32[32,32], index: 16, kind: input, shape index: {}]
  %s17 = inlined_call_operand.vmem [shape: f32[1,32], index: 17, kind: input, shape index: {}]
  %s18 = inlined_call_operand.vmem [shape: f32[32,32], index: 18, kind: input, shape index: {}]
  %s19 = inlined_call_operand.vmem [shape: f32[1,32], index: 19, kind: input, shape index: {}]
  %s20 = inlined_call_operand.vmem [shape: f32[32,32], index: 20, kind: input, shape index: {}]
  %s21 = inlined_call_operand.vmem [shape: f32[1,32], index: 21, kind: input, shape index: {}]
  %s22 = inlined_call_operand.vmem [shape: f32[32,3], index: 22, kind: input, shape index: {}]
  %s23 = inlined_call_operand.vmem [shape: f32[1,3], index: 23, kind: input, shape index: {}]
  %s24 = inlined_call_operand.hbm [shape: f32[2,3], index: 24, kind: output, shape index: {}]
  %s25 = sld [smem:[#allocation0]]
  $region113: #{entailment_forward.5} parent=0
    _
  %s27 = ssub.s32 1, %s25
  %s28 = scalar_select 0, %s27, %s25
  %v29 = vstv %s10
  %30 = vst [vmem:[#allocation3] sm:$0x1] %v29
  %v31 = vstv %s15
  %32 = vst [vmem:[#allocation4] sm:$0x1] %v31
  $region1: #{entailment_forward.5} parent=0
    #allocation5 [shape = 'u8[1024]{0}', space=vmem, size = 0x400, scoped, tag = 'output window, operand 0, single buffered']
    #allocation6 [shape = 's32[1]{0}', space=sflag, size = 0x4, scoped, tag = 'scoped memory for entailment_forward.5']
    %33 = vsyncpa [#allocation6], 0
    // Predicated region
    $region2: #{entailment_forward.5} parent=1 // pred_check
      _
    $region3: #{entailment_forward.5} parent=1 // pred_check_branch
      %35 = sbr.rel (0) target = $region5
    $region4: #{entailment_forward.5} parent=1 // pred_region
      _
    $region5: #{entailment_forward.5} parent=1 // pred_fallthru
      _
    // Predicated region
    $region6: #{entailment_forward.5} parent=1 // pred_check
      _
    $region7: #{entailment_forward.5} parent=1 // pred_check_branch
      %37 = sbr.rel (0) target = $region9
    $region8: #{entailment_forward.5} parent=1 // pred_region
      _
    $region9: #{entailment_forward.5} parent=1 // pred_fallthru
      _
    // Predicated region
    $region10: #{entailment_forward.5} parent=1 // pred_check
      _
    $region11: #{entailment_forward.5} parent=1 // pred_check_branch
      %39 = sbr.rel (0) target = $region13
    $region12: #{entailment_forward.5} parent=1 // pred_region
      _
    $region13: #{entailment_forward.5} parent=1 // pred_fallthru
      _
    // Predicated region
    $region14: #{entailment_forward.5} parent=1 // pred_check
      _
    $region15: #{entailment_forward.5} parent=1 // pred_check_branch
      %41 = sbr.rel (0) target = $region17
    $region16: #{entailment_forward.5} parent=1 // pred_region
      _
    $region17: #{entailment_forward.5} parent=1 // pred_fallthru
      _
    // Predicated region
    $region18: #{entailment_forward.5} parent=1 // pred_check
      _
    $region19: #{entailment_forward.5} parent=1 // pred_check_branch
      %43 = sbr.rel (0) target = $region21
    $region20: #{entailment_forward.5} parent=1 // pred_region
      _
    $region21: #{entailment_forward.5} parent=1 // pred_fallthru
      _
    // Predicated region
    $region22: #{entailment_forward.5} parent=1 // pred_check
      _
    $region23: #{entailment_forward.5} parent=1 // pred_check_branch
      %45 = sbr.rel (0) target = $region25
    $region24: #{entailment_forward.5} parent=1 // pred_region
      _
    $region25: #{entailment_forward.5} parent=1 // pred_fallthru
      _
    // Predicated region
    $region26: #{entailment_forward.5} parent=1 // pred_check
      _
    $region27: #{entailment_forward.5} parent=1 // pred_check_branch
      %47 = sbr.rel (0) target = $region29
    $region28: #{entailment_forward.5} parent=1 // pred_region
      _
    $region29: #{entailment_forward.5} parent=1 // pred_fallthru
      _
    // Predicated region
    $region30: #{entailment_forward.5} parent=1 // pred_check
      _
    $region31: #{entailment_forward.5} parent=1 // pred_check_branch
      %49 = sbr.rel (0) target = $region33
    $region32: #{entailment_forward.5} parent=1 // pred_region
      _
    $region33: #{entailment_forward.5} parent=1 // pred_fallthru
      _
    // Predicated region
    $region34: #{entailment_forward.5} parent=1 // pred_check
      _
    $region35: #{entailment_forward.5} parent=1 // pred_check_branch
      %51 = sbr.rel (0) target = $region37
    $region36: #{entailment_forward.5} parent=1 // pred_region
      _
    $region37: #{entailment_forward.5} parent=1 // pred_fallthru
      _
    // Predicated region
    $region38: #{entailment_forward.5} parent=1 // pred_check
      _
    $region39: #{entailment_forward.5} parent=1 // pred_check_branch
      %53 = sbr.rel (0) target = $region41
    $region40: #{entailment_forward.5} parent=1 // pred_region
      _
    $region41: #{entailment_forward.5} parent=1 // pred_fallthru
      _
    // Predicated region
    $region42: #{entailment_forward.5} parent=1 // pred_check
      _
    $region43: #{entailment_forward.5} parent=1 // pred_check_branch
      %55 = sbr.rel (0) target = $region45
    $region44: #{entailment_forward.5} parent=1 // pred_region
      _
    $region45: #{entailment_forward.5} parent=1 // pred_fallthru
      _
    // Predicated region
    $region46: #{entailment_forward.5} parent=1 // pred_check
      _
    $region47: #{entailment_forward.5} parent=1 // pred_check_branch
      %57 = sbr.rel (0) target = $region49
    $region48: #{entailment_forward.5} parent=1 // pred_region
      _
    $region49: #{entailment_forward.5} parent=1 // pred_fallthru
      _
    // Predicated region
    $region50: #{entailment_forward.5} parent=1 // pred_check
      _
    $region51: #{entailment_forward.5} parent=1 // pred_check_branch
      %59 = sbr.rel (0) target = $region53
    $region52: #{entailment_forward.5} parent=1 // pred_region
      _
    $region53: #{entailment_forward.5} parent=1 // pred_fallthru
      _
    // Predicated region
    $region54: #{entailment_forward.5} parent=1 // pred_check
      _
    $region55: #{entailment_forward.5} parent=1 // pred_check_branch
      %61 = sbr.rel (0) target = $region57
    $region56: #{entailment_forward.5} parent=1 // pred_region
      _
    $region57: #{entailment_forward.5} parent=1 // pred_fallthru
      _
    // Predicated region
    $region58: #{entailment_forward.5} parent=1 // pred_check
      _
    $region59: #{entailment_forward.5} parent=1 // pred_check_branch
      %63 = sbr.rel (0) target = $region61
    $region60: #{entailment_forward.5} parent=1 // pred_region
      _
    $region61: #{entailment_forward.5} parent=1 // pred_fallthru
      _
    // Predicated region
    $region62: #{entailment_forward.5} parent=1 // pred_check
      _
    $region63: #{entailment_forward.5} parent=1 // pred_check_branch
      %65 = sbr.rel (0) target = $region65
    $region64: #{entailment_forward.5} parent=1 // pred_region
      _
    $region65: #{entailment_forward.5} parent=1 // pred_fallthru
      _
    // Predicated region
    $region66: #{entailment_forward.5} parent=1 // pred_check
      _
    $region67: #{entailment_forward.5} parent=1 // pred_check_branch
      %67 = sbr.rel (0) target = $region69
    $region68: #{entailment_forward.5} parent=1 // pred_region
      _
    $region69: #{entailment_forward.5} parent=1 // pred_fallthru
      _
    // Predicated region
    $region70: #{entailment_forward.5} parent=1 // pred_check
      _
    $region71: #{entailment_forward.5} parent=1 // pred_check_branch
      %69 = sbr.rel (0) target = $region73
    $region72: #{entailment_forward.5} parent=1 // pred_region
      _
    $region73: #{entailment_forward.5} parent=1 // pred_fallthru
      _
    // Predicated region
    $region74: #{entailment_forward.5} parent=1 // pred_check
      _
    $region75: #{entailment_forward.5} parent=1 // pred_check_branch
      %71 = sbr.rel (0) target = $region77
    $region76: #{entailment_forward.5} parent=1 // pred_region
      _
    $region77: #{entailment_forward.5} parent=1 // pred_fallthru
      _
    // Predicated region
    $region78: #{entailment_forward.5} parent=1 // pred_check
      _
    $region79: #{entailment_forward.5} parent=1 // pred_check_branch
      %73 = sbr.rel (0) target = $region81
    $region80: #{entailment_forward.5} parent=1 // pred_region
      _
    $region81: #{entailment_forward.5} parent=1 // pred_fallthru
      _
    // Predicated region
    $region82: #{entailment_forward.5} parent=1 // pred_check
      _
    $region83: #{entailment_forward.5} parent=1 // pred_check_branch
      %75 = sbr.rel (0) target = $region85
    $region84: #{entailment_forward.5} parent=1 // pred_region
      _
    $region85: #{entailment_forward.5} parent=1 // pred_fallthru
      _
    // Predicated region
    $region86: #{entailment_forward.5} parent=1 // pred_check
      _
    $region87: #{entailment_forward.5} parent=1 // pred_check_branch
      %77 = sbr.rel (0) target = $region89
    $region88: #{entailment_forward.5} parent=1 // pred_region
      _
    $region89: #{entailment_forward.5} parent=1 // pred_fallthru
      _
    // Predicated region
    $region90: #{entailment_forward.5} parent=1 // pred_check
      _
    $region91: #{entailment_forward.5} parent=1 // pred_check_branch
      %79 = sbr.rel (0) target = $region93
    $region92: #{entailment_forward.5} parent=1 // pred_region
      _
    $region93: #{entailment_forward.5} parent=1 // pred_fallthru
      _
    // Predicated region
    $region94: #{entailment_forward.5} parent=1 // pred_check
      _
    $region95: #{entailment_forward.5} parent=1 // pred_check_branch
      %81 = sbr.rel (0) target = $region97
    $region96: #{entailment_forward.5} parent=1 // pred_region
      _
    $region97: #{entailment_forward.5} parent=1 // pred_fallthru
      _
    %v82 = vld [vmem:[%s3] sm:$0x3]
    %v83 = vld [vmem:[%s1] sm:$0xff]
    %v84 = vld [vmem:[%s1 + $0x8] sm:$0xff]
    %v85 = vld [vmem:[%s5] sm:$0xff]
    %v86 = vld [vmem:[%s5 + $0x8] sm:$0xff]
    %v87 = vld [vmem:[%s5 + $0x10] sm:$0xff]
    %v88 = vld [vmem:[%s5 + $0x18] sm:$0xff]
    %v89 = vld [vmem:[%s6] sm:$0x1]
    %v91 = vlaneseq
    %v92 = vshrl.u32 %v91, 7
    %v93 = vsub.s32 0, %v92
    %v94 = vrot.slane %v89, %v93
    %vm96 = vcmask 261120
    %v98 = vsel %vm96, %v83, 0
    %v101 = vsel %vm96, %v84, 0
    %103 = vmatprep.subr.mxu0 0.0
    %104 = vmatpush1.msra.mxu0 %v85
    %105 = vmatprep.subr.mxu0 0.0
    %106 = vmatpush1.msra.mxu0 %v86
    %107 = vmatprep.subr.mxu0 0.0
    %108 = vmatpush1.msra.mxu0 %v87
    %109 = vmatprep.subr.mxu0 0.0
    %110 = vmatpush1.msra.mxu0 %v88
    %111 = vmatprep.subr.mxu0 0.0
    %112 = vmatpush1.msra.mxu0 0.0
    %113 = vmatprep.subr.mxu0 0.0
    %114 = vmatpush1.msra.mxu0 0.0
    %115 = vmatprep.subr.mxu0 0.0
    %116 = vmatpush1.msra.mxu0 0.0
    %117 = vmatprep.subr.mxu0 0.0
    %118 = vmatpush1.msra.mxu0 0.0
    %119 = vmatprep.subr.mxu0 0.0
    %120 = vmatpush1.msra.mxu0 0.0
    %121 = vmatprep.subr.mxu0 0.0
    %122 = vmatpush1.msra.mxu0 0.0
    %123 = vmatprep.subr.mxu0 0.0
    %124 = vmatpush1.msra.mxu0 0.0
    %125 = vmatprep.subr.mxu0 0.0
    %126 = vmatpush1.msra.mxu0 0.0
    %127 = vmatprep.subr.mxu0 0.0
    %128 = vmatpush1.msra.mxu0 0.0
    %129 = vmatprep.subr.mxu0 0.0
    %130 = vmatpush1.msra.mxu0 0.0
    %131 = vmatprep.subr.mxu0 0.0
    %132 = vmatpush1.msra.mxu0 0.0
    %133 = vmatprep.subr.mxu0 0.0
    %134 = vmatpush1.msra.mxu0 0.0
    %135 = vmatprep.subr.mxu0 0.0
    %136 = vmatpush1.msra.mxu0 0.0
    %137 = vmatprep.subr.mxu0 0.0
    %138 = vmatpush1.msra.mxu0 0.0
    %139 = vmatprep.subr.mxu0 0.0
    %140 = vmatpush1.msra.mxu0 0.0
    %141 = vmatprep.subr.mxu0 0.0
    %142 = vmatpush1.msra.mxu0 0.0
    %143 = vmatprep.subr.mxu0 0.0
    %144 = vmatpush1.msra.mxu0 0.0
    %145 = vmatprep.subr.mxu0 0.0
    %146 = vmatpush1.msra.mxu0 0.0
    %147 = vmatprep.subr.mxu0 0.0
    %148 = vmatpush1.msra.mxu0 0.0
    %149 = vmatprep.subr.mxu0 0.0
    %150 = vmatpush1.msra.mxu0 0.0
    %151 = vmatprep.subr.mxu0 0.0
    %152 = vmatpush1.msra.mxu0 0.0
    %153 = vmatprep.subr.mxu0 0.0
    %154 = vmatpush1.msra.mxu0 0.0
    %155 = vmatprep.subr.mxu0 0.0
    %156 = vmatpush1.msra.mxu0 0.0
    %157 = vmatprep.subr.mxu0 0.0
    %158 = vmatpush1.msra.mxu0 0.0
    %159 = vmatprep.subr.mxu0 0.0
    %160 = vmatpush1.msra.mxu0 0.0
    %161 = vmatprep.subr.mxu0 0.0
    %162 = vmatpush1.msra.mxu0 0.0
    %163 = vmatprep.subr.mxu0 0.0
    %164 = vmatpush1.msra.mxu0 0.0
    %165 = vmatprep.subr.mxu0 0.0
    %166 = vmatpush1.msra.mxu0 0.0
    %167 = vmatprep.mubr.f32.mxu0 0.0
    %168 = vmatmul.mubr.f32.gmra.mrb[0].mxu0 %v98
    %v169 = vpop.f32.mrb[0].mxu0
    %v170 = vadd.f32 %v94, %v169
    %v171 = vpop.f32.mrb[0].mxu0
    %172 = vmatprep.mubr.f32.mxu0 0.0
    %173 = vmatmul.mubr.f32.gmra.mrb[0].mxu0 %v101
    %v174 = vpop.f32.mrb[0].mxu0
    %v175 = vadd.f32 %v94, %v174
    %v176 = vpop.f32.mrb[0].mxu0
    %177 = vdwg.mxu0
    %v178 = vld [vmem:[%s7] sm:$0xff]
    %v179 = vld [vmem:[%s7 + $0x8] sm:$0xff]
    %v180 = vld [vmem:[%s7 + $0x10] sm:$0xff]
    %v181 = vld [vmem:[%s7 + $0x18] sm:$0xff]
    %v182 = vld [vmem:[%s8] sm:$0x1]
    %v184 = vlaneseq
    %v185 = vshrl.u32 %v184, 7
    %v186 = vsub.s32 0, %v185
    %v187 = vrot.slane %v182, %v186
    %189 = vmatprep.subr.mxu0 0.0
    %190 = vmatpush1.msra.mxu0 %v178
    %191 = vmatprep.subr.mxu0 0.0
    %192 = vmatpush1.msra.mxu0 %v179
    %193 = vmatprep.subr.mxu0 0.0
    %194 = vmatpush1.msra.mxu0 %v180
    %195 = vmatprep.subr.mxu0 0.0
    %196 = vmatpush1.msra.mxu0 %v181
    %197 = vmatprep.subr.mxu0 0.0
    %198 = vmatpush1.msra.mxu0 0.0
    %199 = vmatprep.subr.mxu0 0.0
    %200 = vmatpush1.msra.mxu0 0.0
    %201 = vmatprep.subr.mxu0 0.0
    %202 = vmatpush1.msra.mxu0 0.0
    %203 = vmatprep.subr.mxu0 0.0
    %204 = vmatpush1.msra.mxu0 0.0
    %205 = vmatprep.subr.mxu0 0.0
    %206 = vmatpush1.msra.mxu0 0.0
    %207 = vmatprep.subr.mxu0 0.0
    %208 = vmatpush1.msra.mxu0 0.0
    %209 = vmatprep.subr.mxu0 0.0
    %210 = vmatpush1.msra.mxu0 0.0
    %211 = vmatprep.subr.mxu0 0.0
    %212 = vmatpush1.msra.mxu0 0.0
    %213 = vmatprep.subr.mxu0 0.0
    %214 = vmatpush1.msra.mxu0 0.0
    %215 = vmatprep.subr.mxu0 0.0
    %216 = vmatpush1.msra.mxu0 0.0
    %217 = vmatprep.subr.mxu0 0.0
    %218 = vmatpush1.msra.mxu0 0.0
    %219 = vmatprep.subr.mxu0 0.0
    %220 = vmatpush1.msra.mxu0 0.0
    %221 = vmatprep.subr.mxu0 0.0
    %222 = vmatpush1.msra.mxu0 0.0
    %223 = vmatprep.subr.mxu0 0.0
    %224 = vmatpush1.msra.mxu0 0.0
    %225 = vmatprep.subr.mxu0 0.0
    %226 = vmatpush1.msra.mxu0 0.0
    %227 = vmatprep.subr.mxu0 0.0
    %228 = vmatpush1.msra.mxu0 0.0
    %229 = vmatprep.subr.mxu0 0.0
    %230 = vmatpush1.msra.mxu0 0.0
    %231 = vmatprep.subr.mxu0 0.0
    %232 = vmatpush1.msra.mxu0 0.0
    %233 = vmatprep.subr.mxu0 0.0
    %234 = vmatpush1.msra.mxu0 0.0
    %235 = vmatprep.subr.mxu0 0.0
    %236 = vmatpush1.msra.mxu0 0.0
    %237 = vmatprep.subr.mxu0 0.0
    %238 = vmatpush1.msra.mxu0 0.0
    %239 = vmatprep.subr.mxu0 0.0
    %240 = vmatpush1.msra.mxu0 0.0
    %241 = vmatprep.subr.mxu0 0.0
    %242 = vmatpush1.msra.mxu0 0.0
    %243 = vmatprep.subr.mxu0 0.0
    %244 = vmatpush1.msra.mxu0 0.0
    %245 = vmatprep.subr.mxu0 0.0
    %246 = vmatpush1.msra.mxu0 0.0
    %247 = vmatprep.subr.mxu0 0.0
    %248 = vmatpush1.msra.mxu0 0.0
    %249 = vmatprep.subr.mxu0 0.0
    %250 = vmatpush1.msra.mxu0 0.0
    %251 = vmatprep.subr.mxu0 0.0
    %252 = vmatpush1.msra.mxu0 0.0
    %253 = vmatprep.mubr.f32.mxu0 0.0
    %254 = vmatmul.mubr.f32.gmra.mrb[0].mxu0 %v98
    %v255 = vpop.f32.mrb[0].mxu0
    %v256 = vadd.f32 %v187, %v255
    %v257 = vpop.f32.mrb[0].mxu0
    %258 = vmatprep.mubr.f32.mxu0 0.0
    %259 = vmatmul.mubr.f32.gmra.mrb[0].mxu0 %v101
    %v260 = vpop.f32.mrb[0].mxu0
    %v261 = vadd.f32 %v187, %v260
    %v262 = vpop.f32.mrb[0].mxu0
    %263 = vdwg.mxu0
    %v264 = vld [vmem:[%s0] sm:$0x3]
    %v265 = vld [vmem:[%s0 + $0x2] sm:$0x3]
    %v266 = vld [vmem:[%s0 + $0x4] sm:$0x3]
    %v267 = vld [vmem:[%s0 + $0x6] sm:$0x3]
    %v268 = vld [vmem:[%s0 + $0x8] sm:$0x3]
    %v269 = vld [vmem:[%s0 + $0xa] sm:$0x3]
    %v270 = vld [vmem:[%s11] sm:$0xff]
    %v271 = vld [vmem:[%s11 + $0x8] sm:$0xff]
    %v272 = vld [vmem:[%s11 + $0x10] sm:$0xff]
    %v273 = vld [vmem:[%s11 + $0x18] sm:$0xff]
    %v274 = vld [vmem:[%s12] sm:$0x1]
    %v276 = vlaneseq
    %v277 = vshrl.u32 %v276, 7
    %v278 = vsub.s32 0, %v277
    %v279 = vrot.slane %v274, %v278
    %v287 = vcombine.low %v264, %v265
    %v288 = vcombine.low %v266, %v267
    %v290 = vunpack.c.l.s4 1983009808
    %v291 = vunpack.c.0.s8 %v290
    %v292 = vlaneseq
    %v293 = vshrl.u32 %v292, 7
    %v294 = vsub.s32 %v291, %v293
    %v295 = vrot.slane %v287, %v294
    %v297 = vunpack.c.l.s4 1983009808
    %v298 = vunpack.c.0.s8 %v297
    %v299 = vlaneseq
    %v300 = vshrl.u32 %v299, 7
    %v301 = vsub.s32 %v298, %v300
    %v302 = vrot.slane %v288, %v301
    %v303 = vcombine.low %v295, %v302
    %v304 = vcombine.low %v268, %v269
    %v306 = vunpack.c.l.s4 1983009808
    %v307 = vunpack.c.0.s8 %v306
    %v308 = vlaneseq
    %v309 = vshrl.u32 %v308, 7
    %v310 = vsub.s32 %v307, %v309
    %v311 = vrot.slane %v304, %v310
    %v312 = vsel %vm96, %v303, 0
    %v314 = vsel %vm96, %v311, 0
    %316 = vmatprep.subr.mxu0 0.0
    %317 = vmatpush1.msra.mxu0 %v270
    %318 = vmatprep.subr.mxu0 0.0
    %319 = vmatpush1.msra.mxu0 %v271
    %320 = vmatprep.subr.mxu0 0.0
    %321 = vmatpush1.msra.mxu0 %v272
    %322 = vmatprep.subr.mxu0 0.0
    %323 = vmatpush1.msra.mxu0 %v273
    %324 = vmatprep.subr.mxu0 0.0
    %325 = vmatpush1.msra.mxu0 0.0
    %326 = vmatprep.subr.mxu0 0.0
    %327 = vmatpush1.msra.mxu0 0.0
    %328 = vmatprep.subr.mxu0 0.0
    %329 = vmatpush1.msra.mxu0 0.0
    %330 = vmatprep.subr.mxu0 0.0
    %331 = vmatpush1.msra.mxu0 0.0
    %332 = vmatprep.subr.mxu0 0.0
    %333 = vmatpush1.msra.mxu0 0.0
    %334 = vmatprep.subr.mxu0 0.0
    %335 = vmatpush1.msra.mxu0 0.0
    %336 = vmatprep.subr.mxu0 0.0
    %337 = vmatpush1.msra.mxu0 0.0
    %338 = vmatprep.subr.mxu0 0.0
    %339 = vmatpush1.msra.mxu0 0.0
    %340 = vmatprep.subr.mxu0 0.0
    %341 = vmatpush1.msra.mxu0 0.0
    %342 = vmatprep.subr.mxu0 0.0
    %343 = vmatpush1.msra.mxu0 0.0
    %344 = vmatprep.subr.mxu0 0.0
    %345 = vmatpush1.msra.mxu0 0.0
    %346 = vmatprep.subr.mxu0 0.0
    %347 = vmatpush1.msra.mxu0 0.0
    %348 = vmatprep.subr.mxu0 0.0
    %349 = vmatpush1.msra.mxu0 0.0
    %350 = vmatprep.subr.mxu0 0.0
    %351 = vmatpush1.msra.mxu0 0.0
    %352 = vmatprep.subr.mxu0 0.0
    %353 = vmatpush1.msra.mxu0 0.0
    %354 = vmatprep.subr.mxu0 0.0
    %355 = vmatpush1.msra.mxu0 0.0
    %356 = vmatprep.subr.mxu0 0.0
    %357 = vmatpush1.msra.mxu0 0.0
    %358 = vmatprep.subr.mxu0 0.0
    %359 = vmatpush1.msra.mxu0 0.0
    %360 = vmatprep.subr.mxu0 0.0
    %361 = vmatpush1.msra.mxu0 0.0
    %362 = vmatprep.subr.mxu0 0.0
    %363 = vmatpush1.msra.mxu0 0.0
    %364 = vmatprep.subr.mxu0 0.0
    %365 = vmatpush1.msra.mxu0 0.0
    %366 = vmatprep.subr.mxu0 0.0
    %367 = vmatpush1.msra.mxu0 0.0
    %368 = vmatprep.subr.mxu0 0.0
    %369 = vmatpush1.msra.mxu0 0.0
    %370 = vmatprep.subr.mxu0 0.0
    %371 = vmatpush1.msra.mxu0 0.0
    %372 = vmatprep.subr.mxu0 0.0
    %373 = vmatpush1.msra.mxu0 0.0
    %374 = vmatprep.subr.mxu0 0.0
    %375 = vmatpush1.msra.mxu0 0.0
    %376 = vmatprep.subr.mxu0 0.0
    %377 = vmatpush1.msra.mxu0 0.0
    %378 = vmatprep.subr.mxu0 0.0
    %379 = vmatpush1.msra.mxu0 0.0
    %380 = vmatprep.mubr.f32.mxu0 0.0
    %381 = vmatmul.mubr.f32.gmra.mrb[0].mxu0 %v312
    %v382 = vpop.f32.mrb[0].mxu0
    %v383 = vadd.f32 %v279, %v382
    %v384 = vpop.f32.mrb[0].mxu0
    %385 = vmatprep.mubr.f32.mxu0 0.0
    %386 = vmatmul.mubr.f32.gmra.mrb[0].mxu0 %v314
    %v387 = vpop.f32.mrb[0].mxu0
    %v388 = vadd.f32 %v279, %v387
    %v389 = vpop.f32.mrb[0].mxu0
    %390 = vdwg.mxu0
    %v393 = vcombine.high %v383, %v383
    %v395 = vunpack.c.l.s4 1983009808
    %v396 = vunpack.c.0.s8 %v395
    %v397 = vlaneseq
    %v398 = vshrl.u32 %v397, 7
    %v399 = vsub.s32 %v396, %v398
    %v400 = vrot.slane %v383, %v399
    %v402 = vunpack.c.l.s4 1983009808
    %v403 = vunpack.c.0.s8 %v402
    %v404 = vlaneseq
    %v405 = vshrl.u32 %v404, 7
    %v406 = vsub.s32 %v403, %v405
    %v407 = vrot.slane %v393, %v406
    %v408 = vcombine.high %v400, %v400
    %v409 = vcombine.high %v407, %v407
    %v411 = vunpack.c.l.s4 1983009808
    %v412 = vunpack.c.0.s8 %v411
    %v413 = vlaneseq
    %v414 = vshrl.u32 %v413, 7
    %v415 = vsub.s32 %v412, %v414
    %v416 = vrot.slane %v388, %v415
    %v417 = vcombine.high %v416, %v416
    %vm424 = vcmask 254976
    %425 = vst.msk [vmem:[#allocation2] sm:$0x3] %vm424, %v400
    %426 = vst.msk [vmem:[#allocation2 + $0x2] sm:$0x3] %vm424, %v408
    %427 = vst.msk [vmem:[#allocation2 + $0x4] sm:$0x3] %vm424, %v407
    %428 = vst.msk [vmem:[#allocation2 + $0x6] sm:$0x3] %vm424, %v409
    %429 = vst.msk [vmem:[#allocation2 + $0x8] sm:$0x3] %vm424, %v416
    %430 = vst.msk [vmem:[#allocation2 + $0xa] sm:$0x3] %vm424, %v417
    %v431 = vld [vmem:[%s9] sm:$0x1]
    %v433 = vlaneseq
    %v434 = vshrl.u32 %v433, 7
    %v435 = vsub.s32 0, %v434
    %v436 = vrot.slane %v431, %v435
    %v438 = vld [vmem:[%s14] sm:$0x1]
    %v440 = vlaneseq
    %v441 = vshrl.u32 %v440, 7
    %v442 = vsub.s32 0, %v441
    %v443 = vrot.slane %v438, %v442
    %v445 = vld [vmem:[#allocation3] sm:$0x1]
    %v446 = vld [vmem:[#allocation4] sm:$0x1]
    %v447 = vld [vmem:[%s4] sm:$0x1]
    %v449 = vlaneseq
    %v450 = vshrl.u32 %v449, 7
    %v451 = vsub.s32 0, %v450
    %v452 = vrot.slane %v447, %v451
    %v454 = vadd.f32 %v170, %v452
    %v455 = vadd.f32 %v175, %v452
    %v456 = vtanh.pop %v454
    %v457 = vtanh.pop %v455
    %v458 = vmul.f32 %v456, %v436
    %v459 = vmul.f32 %v457, %v436
    %v460 = vsel %vm96, %v458, 0.0
    %461 = vadd.xlane.f32.xlu0 %v460
    %v462 = vpop.xlane.xlu0 %461
    %v463 = vsel %vm96, %v459, 0.0
    %464 = vadd.xlane.f32.xlu0 %v463
    %v465 = vpop.xlane.xlu0 %464
    %v467 = vlaneseq
    %v468 = vshrl.u32 %v467, 7
    %v469 = vsub.s32 0, %v468
    %v470 = vrot.slane %v445, %v469
    %471 = vset.pattern.permute.xlu0 0
    %472 = vperm.xlu0 %471, %v470
    %v473 = vpop.permute.xlu0 %472
    %v475 = vadd.f32 %v462, %v473
    %v476 = vadd.f32 %v465, %v473
    %v479 = vlaneseq
    %v480 = vand.u32 %v479, 127
    %v481 = vlaneseq
    %v482 = vshrl.u32 %v481, 7
    %v483 = vsub.s32 %v480, %v482
    %v484 = vrot.slane %v475, %v483
    %v485 = vlaneseq
    %v486 = vshrl.u32 %v485, 7
    %v487 = vsub.s32 %v480, %v486
    %v488 = vrot.slane %v476, %v487
    %vm489 = vcmask 1041409
    %v490 = vsel %vm489, %v488, %v484
    %vm492 = vcmask 58368
    %v493 = vsel %vm492, %v490, -inf
    %494 = vmax.xlane.f32.xlu0 %v493
    %v495 = vpop.xlane.xlu0 %494
    %v497 = vlaneseq
    %v498 = vshrl.u32 %v497, 7
    %v499 = vsub.s32 0, %v498
    %v500 = vrot.slane %v495, %v499
    %v501 = vlaneseq
    %v502 = vshrl.u32 %v501, 7
    %v503 = vsub.s32 1, %v502
    %v504 = vrot.slane %v495, %v503
    %v507 = vsub.f32 %v475, %v500
    %v508 = vsub.f32 %v476, %v504
    %v509 = vmul.f32 %v507, 1.442695
    %v510 = vpow.pop %v509
    %v511 = vmul.f32 %v508, 1.442695
    %v512 = vpow.pop %v511
    %515 = vset.pattern.permute.xlu0 0
    %516 = vperm.xlu0 %515, %v510
    %v517 = vpop.permute.xlu0 %516
    %518 = vset.pattern.permute.xlu0 0
    %519 = vperm.xlu0 %518, %v512
    %v520 = vpop.permute.xlu0 %519
    %v521 = vlaneseq
    %v522 = vshrl.u32 %v521, 7
    %v523 = vsub.s32 %v480, %v522
    %v524 = vrot.slane %v517, %v523
    %v525 = vlaneseq
    %v526 = vshrl.u32 %v525, 7
    %v527 = vsub.s32 %v480, %v526
    %v528 = vrot.slane %v520, %v527
    %v529 = vsel %vm489, %v528, %v524
    %v531 = vsel %vm492, %v529, 0.0
    %532 = vadd.xlane.f32.xlu0 %v531
    %v533 = vpop.xlane.xlu0 %532
    %v534 = vrcp.pop %v533
    %v536 = vlaneseq
    %v537 = vshrl.u32 %v536, 7
    %v538 = vsub.s32 0, %v537
    %v539 = vrot.slane %v534, %v538
    %v540 = vlaneseq
    %v541 = vshrl.u32 %v540, 7
    %v542 = vsub.s32 1, %v541
    %v543 = vrot.slane %v534, %v542
    %v546 = vmul.f32 %v510, %v539
    %v547 = vmul.f32 %v512, %v543
    %v549 = vlaneseq
    %v550 = vshrl.u32 %v549, 7
    %v551 = vsub.s32 0, %v550
    %v552 = vrot.slane %v82, %v551
    %554 = vbcast.lane.b32.xlu0 %v552, 256
    %v555 = vpop.permute.xlu0 %554
    %v556 = vlaneseq
    %v557 = vshrl.u32 %v556, 7
    %v558 = vsub.s32 1, %v557
    %v559 = vrot.slane %v82, %v558
    %561 = vbcast.lane.b32.xlu0 %v559, 256
    %v562 = vpop.permute.xlu0 %561
    %v565 = vmul.f32 %v546, %v555
    %v566 = vmul.f32 %v547, %v562
    %569 = vset.pattern.permute.xlu0 0
    %570 = vperm.xlu0 %569, %v565
    %v571 = vpop.permute.xlu0 %570
    %572 = vset.pattern.permute.xlu0 0
    %573 = vperm.xlu0 %572, %v566
    %v574 = vpop.permute.xlu0 %573
    %v575 = vlaneseq
    %v576 = vshrl.u32 %v575, 7
    %v577 = vsub.s32 %v480, %v576
    %v578 = vrot.slane %v571, %v577
    %v579 = vlaneseq
    %v580 = vshrl.u32 %v579, 7
    %v581 = vsub.s32 %v480, %v580
    %v582 = vrot.slane %v574, %v581
    %v583 = vsel %vm489, %v582, %v578
    %v585 = vsel %vm492, %v583, 0.0
    %586 = vadd.xlane.f32.xlu0 %v585
    %v587 = vpop.xlane.xlu0 %586
    %v588 = vrcp.pop %v587
    %v590 = vlaneseq
    %v591 = vshrl.u32 %v590, 7
    %v592 = vsub.s32 0, %v591
    %v593 = vrot.slane %v588, %v592
    %v594 = vlaneseq
    %v595 = vshrl.u32 %v594, 7
    %v596 = vsub.s32 1, %v595
    %v597 = vrot.slane %v588, %v596
    %v600 = vmul.f32 %v565, %v593
    %v601 = vmul.f32 %v566, %v597
    %v602 = vld [vmem:[%s2] sm:$0xff]
    %v603 = vld [vmem:[%s2 + $0x8] sm:$0xff]
    %605 = vset.pattern.permute.xlu0 0
    %606 = vperm.xlu0 %605, %v600
    %v607 = vpop.permute.xlu0 %606
    %610 = vset.pattern.permute.xlu0 0
    %611 = vperm.xlu0 %610, %v601
    %v612 = vpop.permute.xlu0 %611
    %v614 = vmul.f32 %v607, %v602
    %v615 = vmul.f32 %v612, %v603
    %v616 = vsel %vm96, %v614, 0.0
    %v617 = vrot.slane %v616, 4
    %v618 = vadd.f32 %v616, %v617
    %v619 = vrot.slane %v618, 2
    %v620 = vadd.f32 %v618, %v619
    %v621 = vrot.slane %v620, 1
    %v622 = vadd.f32 %v620, %v621
    %v623 = vsel %vm96, %v615, 0.0
    %v624 = vrot.slane %v623, 4
    %v625 = vadd.f32 %v623, %v624
    %v626 = vrot.slane %v625, 2
    %v627 = vadd.f32 %v625, %v626
    %v628 = vrot.slane %v627, 1
    %v629 = vadd.f32 %v627, %v628
    %v630 = vld [vmem:[%s13] sm:$0xff]
    %v631 = vld [vmem:[%s13 + $0x8] sm:$0xff]
    %v632 = vld [vmem:[%s13 + $0x10] sm:$0xff]
    %v633 = vld [vmem:[%s13 + $0x18] sm:$0xff]
    %v634 = vld [vmem:[%s16] sm:$0xff]
    %v635 = vld [vmem:[%s16 + $0x8] sm:$0xff]
    %v636 = vld [vmem:[%s16 + $0x10] sm:$0xff]
    %v637 = vld [vmem:[%s16 + $0x18] sm:$0xff]
    %v638 = vld [vmem:[%s17] sm:$0x1]
    %v640 = vlaneseq
    %v641 = vshrl.u32 %v640, 7
    %v642 = vsub.s32 0, %v641
    %v643 = vrot.slane %v638, %v642
    loop: start=0, step=1, limit=6
    $region98: #{entailment_forward.5} parent=1 // loop_pre_header
      _
    $region99: #{entailment_forward.5} parent=1 // loop_header
      %s646 = sphi 0, %s650
      %p647 = scmp.ge.s32.totalorder %s646, 6
      %v651 = vphi %v622, %v994
      %v652 = vphi %v629, %v995
    $region100: #{entailment_forward.5} parent=1 // loop_header_branch
      %649 = sbr.rel (%p647) target = $region104
    $region101: #{entailment_forward.5} parent=1 // loop_body
      %s653 = smul.u32 %s646, 2
      %s654 = scalar_lea.vmem [#allocation2], %s653
      %v655 = vld [vmem:[%s654] sm:$0x3]
      %v658 = vrot.slane %v652, 7
      %v659 = vsel %vm489, %v658, %v651
      %v660 = vsel %vm96, %v659, 0
      %662 = vmatprep.subr.mxu0 0.0
      %663 = vmatpush1.msra.mxu0 %v630
      %664 = vmatprep.subr.mxu0 0.0
      %665 = vmatpush1.msra.mxu0 %v631
      %666 = vmatprep.subr.mxu0 0.0
      %667 = vmatpush1.msra.mxu0 %v632
      %668 = vmatprep.subr.mxu0 0.0
      %669 = vmatpush1.msra.mxu0 %v633
      %670 = vmatprep.subr.mxu0 0.0
      %671 = vmatpush1.msra.mxu0 0.0
      %672 = vmatprep.subr.mxu0 0.0
      %673 = vmatpush1.msra.mxu0 0.0
      %674 = vmatprep.subr.mxu0 0.0
      %675 = vmatpush1.msra.mxu0 0.0
      %676 = vmatprep.subr.mxu0 0.0
      %677 = vmatpush1.msra.mxu0 0.0
      %678 = vmatprep.subr.mxu0 0.0
      %679 = vmatpush1.msra.mxu0 0.0
      %680 = vmatprep.subr.mxu0 0.0
      %681 = vmatpush1.msra.mxu0 0.0
      %682 = vmatprep.subr.mxu0 0.0
      %683 = vmatpush1.msra.mxu0 0.0
      %684 = vmatprep.subr.mxu0 0.0
      %685 = vmatpush1.msra.mxu0 0.0
      %686 = vmatprep.subr.mxu0 0.0
      %687 = vmatpush1.msra.mxu0 0.0
      %688 = vmatprep.subr.mxu0 0.0
      %689 = vmatpush1.msra.mxu0 0.0
      %690 = vmatprep.subr.mxu0 0.0
      %691 = vmatpush1.msra.mxu0 0.0
      %692 = vmatprep.subr.mxu0 0.0
      %693 = vmatpush1.msra.mxu0 0.0
      %694 = vmatprep.subr.mxu0 0.0
      %695 = vmatpush1.msra.mxu0 0.0
      %696 = vmatprep.subr.mxu0 0.0
      %697 = vmatpush1.msra.mxu0 0.0
      %698 = vmatprep.subr.mxu0 0.0
      %699 = vmatpush1.msra.mxu0 0.0
      %700 = vmatprep.subr.mxu0 0.0
      %701 = vmatpush1.msra.mxu0 0.0
      %702 = vmatprep.subr.mxu0 0.0
      %703 = vmatpush1.msra.mxu0 0.0
      %704 = vmatprep.subr.mxu0 0.0
      %705 = vmatpush1.msra.mxu0 0.0
      %706 = vmatprep.subr.mxu0 0.0
      %707 = vmatpush1.msra.mxu0 0.0
      %708 = vmatprep.subr.mxu0 0.0
      %709 = vmatpush1.msra.mxu0 0.0
      %710 = vmatprep.subr.mxu0 0.0
      %711 = vmatpush1.msra.mxu0 0.0
      %712 = vmatprep.subr.mxu0 0.0
      %713 = vmatpush1.msra.mxu0 0.0
      %714 = vmatprep.subr.mxu0 0.0
      %715 = vmatpush1.msra.mxu0 0.0
      %716 = vmatprep.subr.mxu0 0.0
      %717 = vmatpush1.msra.mxu0 0.0
      %718 = vmatprep.subr.mxu0 0.0
      %719 = vmatpush1.msra.mxu0 0.0
      %720 = vmatprep.subr.mxu0 0.0
      %721 = vmatpush1.msra.mxu0 0.0
      %722 = vmatprep.subr.mxu0 0.0
      %723 = vmatpush1.msra.mxu0 0.0
      %724 = vmatprep.subr.mxu0 0.0
      %725 = vmatpush1.msra.mxu0 0.0
      %726 = vmatprep.mubr.f32.mxu0 0.0
      %727 = vmatmul.mubr.f32.gmra.mrb[0].mxu0 %v660
      %v728 = vpop.f32.mrb[0].mxu0
      %v729 = vadd.f32 0.0, %v728
      %v730 = vpop.f32.mrb[0].mxu0
      %731 = vdwg.mxu0
      %v732 = vadd.f32 %v655, %v729
      %v735 = vunpack.c.l.s4 1966171168
      %v736 = vunpack.c.0.s8 %v735
      %v737 = vlaneseq
      %v738 = vshrl.u32 %v737, 7
      %v739 = vsub.s32 %v736, %v738
      %v740 = vrot.slane %v732, %v739
      %v741 = vcombine.high %v740, %v740
      %v743 = vunpack.c.l.s4 1966171168
      %v744 = vunpack.c.0.s8 %v743
      %v745 = vlaneseq
      %v746 = vshrl.u32 %v745, 7
      %v747 = vsub.s32 %v744, %v746
      %v748 = vrot.slane %v740, %v747
      %v750 = vunpack.c.l.s4 1966171168
      %v751 = vunpack.c.0.s8 %v750
      %v752 = vlaneseq
      %v753 = vshrl.u32 %v752, 7
      %v754 = vsub.s32 %v751, %v753
      %v755 = vrot.slane %v741, %v754
      %v756 = vlaneseq
      %v757 = vshrl.u32 %v756, 7
      %v758 = vsub.s32 0, %v757
      %v759 = vrot.slane %v748, %v758
      %v760 = vlaneseq
      %v761 = vshrl.u32 %v760, 7
      %v762 = vsub.s32 0, %v761
      %v763 = vrot.slane %v755, %v762
      %v766 = vadd.f32 %v256, %v759
      %v767 = vadd.f32 %v261, %v763
      %v768 = vtanh.pop %v766
      %v769 = vtanh.pop %v767
      %v770 = vmul.f32 %v768, %v443
      %v771 = vmul.f32 %v769, %v443
      %v772 = vsel %vm96, %v770, 0.0
      %773 = vadd.xlane.f32.xlu0 %v772
      %v774 = vpop.xlane.xlu0 %773
      %v775 = vsel %vm96, %v771, 0.0
      %776 = vadd.xlane.f32.xlu0 %v775
      %v777 = vpop.xlane.xlu0 %776
      %v779 = vlaneseq
      %v780 = vshrl.u32 %v779, 7
      %v781 = vsub.s32 0, %v780
      %v782 = vrot.slane %v446, %v781
      %783 = vset.pattern.permute.xlu0 0
      %784 = vperm.xlu0 %783, %v782
      %v785 = vpop.permute.xlu0 %784
      %v787 = vadd.f32 %v774, %v785
      %v788 = vadd.f32 %v777, %v785
      %v791 = vlaneseq
      %v792 = vshrl.u32 %v791, 7
      %v793 = vsub.s32 %v480, %v792
      %v794 = vrot.slane %v787, %v793
      %v795 = vlaneseq
      %v796 = vshrl.u32 %v795, 7
      %v797 = vsub.s32 %v480, %v796
      %v798 = vrot.slane %v788, %v797
      %v799 = vsel %vm489, %v798, %v794
      %v801 = vsel %vm492, %v799, -inf
      %802 = vmax.xlane.f32.xlu0 %v801
      %v803 = vpop.xlane.xlu0 %802
      %v805 = vlaneseq
      %v806 = vshrl.u32 %v805, 7
      %v807 = vsub.s32 0, %v806
      %v808 = vrot.slane %v803, %v807
      %v809 = vlaneseq
      %v810 = vshrl.u32 %v809, 7
      %v811 = vsub.s32 1, %v810
      %v812 = vrot.slane %v803, %v811
      %v815 = vsub.f32 %v787, %v808
      %v816 = vsub.f32 %v788, %v812
      %v817 = vmul.f32 %v815, 1.442695
      %v818 = vpow.pop %v817
      %v819 = vmul.f32 %v816, 1.442695
      %v820 = vpow.pop %v819
      %823 = vset.pattern.permute.xlu0 0
      %824 = vperm.xlu0 %823, %v818
      %v825 = vpop.permute.xlu0 %824
      %826 = vset.pattern.permute.xlu0 0
      %827 = vperm.xlu0 %826, %v820
      %v828 = vpop.permute.xlu0 %827
      %v829 = vlaneseq
      %v830 = vshrl.u32 %v829, 7
      %v831 = vsub.s32 %v480, %v830
      %v832 = vrot.slane %v825, %v831
      %v833 = vlaneseq
      %v834 = vshrl.u32 %v833, 7
      %v835 = vsub.s32 %v480, %v834
      %v836 = vrot.slane %v828, %v835
      %v837 = vsel %vm489, %v836, %v832
      %v839 = vsel %vm492, %v837, 0.0
      %840 = vadd.xlane.f32.xlu0 %v839
      %v841 = vpop.xlane.xlu0 %840
      %v842 = vrcp.pop %v841
      %v844 = vlaneseq
      %v845 = vshrl.u32 %v844, 7
      %v846 = vsub.s32 0, %v845
      %v847 = vrot.slane %v842, %v846
      %v848 = vlaneseq
      %v849 = vshrl.u32 %v848, 7
      %v850 = vsub.s32 1, %v849
      %v851 = vrot.slane %v842, %v850
      %v854 = vmul.f32 %v818, %v847
      %v855 = vmul.f32 %v820, %v851
      %v856 = vmul.f32 %v854, %v555
      %v857 = vmul.f32 %v855, %v562
      %860 = vset.pattern.permute.xlu0 0
      %861 = vperm.xlu0 %860, %v856
      %v862 = vpop.permute.xlu0 %861
      %863 = vset.pattern.permute.xlu0 0
      %864 = vperm.xlu0 %863, %v857
      %v865 = vpop.permute.xlu0 %864
      %v866 = vlaneseq
      %v867 = vshrl.u32 %v866, 7
      %v868 = vsub.s32 %v480, %v867
      %v869 = vrot.slane %v862, %v868
      %v870 = vlaneseq
      %v871 = vshrl.u32 %v870, 7
      %v872 = vsub.s32 %v480, %v871
      %v873 = vrot.slane %v865, %v872
      %v874 = vsel %vm489, %v873, %v869
      %v876 = vsel %vm492, %v874, 0.0
      %877 = vadd.xlane.f32.xlu0 %v876
      %v878 = vpop.xlane.xlu0 %877
      %v879 = vrcp.pop %v878
      %v881 = vlaneseq
      %v882 = vshrl.u32 %v881, 7
      %v883 = vsub.s32 0, %v882
      %v884 = vrot.slane %v879, %v883
      %v885 = vlaneseq
      %v886 = vshrl.u32 %v885, 7
      %v887 = vsub.s32 1, %v886
      %v888 = vrot.slane %v879, %v887
      %v891 = vmul.f32 %v856, %v884
      %v892 = vmul.f32 %v857, %v888
      %894 = vset.pattern.permute.xlu0 0
      %895 = vperm.xlu0 %894, %v891
      %v896 = vpop.permute.xlu0 %895
      %899 = vset.pattern.permute.xlu0 0
      %900 = vperm.xlu0 %899, %v892
      %v901 = vpop.permute.xlu0 %900
      %v903 = vmul.f32 %v896, %v83
      %v904 = vmul.f32 %v901, %v84
      %v905 = vsel %vm96, %v903, 0.0
      %v906 = vrot.slane %v905, 4
      %v907 = vadd.f32 %v905, %v906
      %v908 = vrot.slane %v907, 2
      %v909 = vadd.f32 %v907, %v908
      %v910 = vrot.slane %v909, 1
      %v911 = vadd.f32 %v909, %v910
      %v912 = vsel %vm96, %v904, 0.0
      %v913 = vrot.slane %v912, 4
      %v914 = vadd.f32 %v912, %v913
      %v915 = vrot.slane %v914, 2
      %v916 = vadd.f32 %v914, %v915
      %v917 = vrot.slane %v916, 1
      %v918 = vadd.f32 %v916, %v917
      %919 = vmatprep.subr.mxu0 0.0
      %920 = vmatpush1.msra.mxu0 %v634
      %921 = vmatprep.subr.mxu0 0.0
      %922 = vmatpush1.msra.mxu0 %v635
      %923 = vmatprep.subr.mxu0 0.0
      %924 = vmatpush1.msra.mxu0 %v636
      %925 = vmatprep.subr.mxu0 0.0
      %926 = vmatpush1.msra.mxu0 %v637
      %927 = vmatprep.subr.mxu0 0.0
      %928 = vmatpush1.msra.mxu0 0.0
      %929 = vmatprep.subr.mxu0 0.0
      %930 = vmatpush1.msra.mxu0 0.0
      %931 = vmatprep.subr.mxu0 0.0
      %932 = vmatpush1.msra.mxu0 0.0
      %933 = vmatprep.subr.mxu0 0.0
      %934 = vmatpush1.msra.mxu0 0.0
      %935 = vmatprep.subr.mxu0 0.0
      %936 = vmatpush1.msra.mxu0 0.0
      %937 = vmatprep.subr.mxu0 0.0
      %938 = vmatpush1.msra.mxu0 0.0
      %939 = vmatprep.subr.mxu0 0.0
      %940 = vmatpush1.msra.mxu0 0.0
      %941 = vmatprep.subr.mxu0 0.0
      %942 = vmatpush1.msra.mxu0 0.0
      %943 = vmatprep.subr.mxu0 0.0
      %944 = vmatpush1.msra.mxu0 0.0
      %945 = vmatprep.subr.mxu0 0.0
      %946 = vmatpush1.msra.mxu0 0.0
      %947 = vmatprep.subr.mxu0 0.0
      %948 = vmatpush1.msra.mxu0 0.0
      %949 = vmatprep.subr.mxu0 0.0
      %950 = vmatpush1.msra.mxu0 0.0
      %951 = vmatprep.subr.mxu0 0.0
      %952 = vmatpush1.msra.mxu0 0.0
      %953 = vmatprep.subr.mxu0 0.0
      %954 = vmatpush1.msra.mxu0 0.0
      %955 = vmatprep.subr.mxu0 0.0
      %956 = vmatpush1.msra.mxu0 0.0
      %957 = vmatprep.subr.mxu0 0.0
      %958 = vmatpush1.msra.mxu0 0.0
      %959 = vmatprep.subr.mxu0 0.0
      %960 = vmatpush1.msra.mxu0 0.0
      %961 = vmatprep.subr.mxu0 0.0
      %962 = vmatpush1.msra.mxu0 0.0
      %963 = vmatprep.subr.mxu0 0.0
      %964 = vmatpush1.msra.mxu0 0.0
      %965 = vmatprep.subr.mxu0 0.0
      %966 = vmatpush1.msra.mxu0 0.0
      %967 = vmatprep.subr.mxu0 0.0
      %968 = vmatpush1.msra.mxu0 0.0
      %969 = vmatprep.subr.mxu0 0.0
      %970 = vmatpush1.msra.mxu0 0.0
      %971 = vmatprep.subr.mxu0 0.0
      %972 = vmatpush1.msra.mxu0 0.0
      %973 = vmatprep.subr.mxu0 0.0
      %974 = vmatpush1.msra.mxu0 0.0
      %975 = vmatprep.subr.mxu0 0.0
      %976 = vmatpush1.msra.mxu0 0.0
      %977 = vmatprep.subr.mxu0 0.0
      %978 = vmatpush1.msra.mxu0 0.0
      %979 = vmatprep.subr.mxu0 0.0
      %980 = vmatpush1.msra.mxu0 0.0
      %981 = vmatprep.subr.mxu0 0.0
      %982 = vmatpush1.msra.mxu0 0.0
      %983 = vmatprep.mubr.f32.mxu0 0.0
      %984 = vmatmul.mubr.f32.gmra.mrb[0].mxu0 %v660
      %v985 = vpop.f32.mrb[0].mxu0
      %v986 = vadd.f32 %v643, %v985
      %v987 = vpop.f32.mrb[0].mxu0
      %988 = vdwg.mxu0
      %v989 = vtanh.pop %v986
      %v991 = vrot.slane %v989, 1
      %v994 = vadd.f32 %v911, %v989
      %v995 = vadd.f32 %v918, %v991
    $region102: #{entailment_forward.5} parent=1 // loop_footer
      %s650 = sadd.s32 1, %s646
    $region103: #{entailment_forward.5} parent=1 // loop_footer_branch
      %645 = sbr.rel target = $region99
    $region104: #{entailment_forward.5} parent=1 // loop_exit
      _
    %s996 = scalar_lea.vmem %s0, 10
    %v997 = vld [vmem:[%s996] sm:$0x3]
    %v998 = vld [vmem:[%s18] sm:$0xff]
    %v999 = vld [vmem:[%s18 + $0x8] sm:$0xff]
    %v1000 = vld [vmem:[%s18 + $0x10] sm:$0xff]
    %v1001 = vld [vmem:[%s18 + $0x18] sm:$0xff]
    %v1002 = vld [vmem:[%s19] sm:$0x1]
    %v1004 = vlaneseq
    %v1005 = vshrl.u32 %v1004, 7
    %v1006 = vsub.s32 0, %v1005
    %v1007 = vrot.slane %v1002, %v1006
    %v1011 = vrot.slane %v652, 7
    %v1012 = vsel %vm489, %v1011, %v651
    %v1013 = vsel %vm96, %v1012, 0
    %1015 = vmatprep.subr.mxu0 0.0
    %1016 = vmatpush1.msra.mxu0 %v998
    %1017 = vmatprep.subr.mxu0 0.0
    %1018 = vmatpush1.msra.mxu0 %v999
    %1019 = vmatprep.subr.mxu0 0.0
    %1020 = vmatpush1.msra.mxu0 %v1000
    %1021 = vmatprep.subr.mxu0 0.0
    %1022 = vmatpush1.msra.mxu0 %v1001
    %1023 = vmatprep.subr.mxu0 0.0
    %1024 = vmatpush1.msra.mxu0 0.0
    %1025 = vmatprep.subr.mxu0 0.0
    %1026 = vmatpush1.msra.mxu0 0.0
    %1027 = vmatprep.subr.mxu0 0.0
    %1028 = vmatpush1.msra.mxu0 0.0
    %1029 = vmatprep.subr.mxu0 0.0
    %1030 = vmatpush1.msra.mxu0 0.0
    %1031 = vmatprep.subr.mxu0 0.0
    %1032 = vmatpush1.msra.mxu0 0.0
    %1033 = vmatprep.subr.mxu0 0.0
    %1034 = vmatpush1.msra.mxu0 0.0
    %1035 = vmatprep.subr.mxu0 0.0
    %1036 = vmatpush1.msra.mxu0 0.0
    %1037 = vmatprep.subr.mxu0 0.0
    %1038 = vmatpush1.msra.mxu0 0.0
    %1039 = vmatprep.subr.mxu0 0.0
    %1040 = vmatpush1.msra.mxu0 0.0
    %1041 = vmatprep.subr.mxu0 0.0
    %1042 = vmatpush1.msra.mxu0 0.0
    %1043 = vmatprep.subr.mxu0 0.0
    %1044 = vmatpush1.msra.mxu0 0.0
    %1045 = vmatprep.subr.mxu0 0.0
    %1046 = vmatpush1.msra.mxu0 0.0
    %1047 = vmatprep.subr.mxu0 0.0
    %1048 = vmatpush1.msra.mxu0 0.0
    %1049 = vmatprep.subr.mxu0 0.0
    %1050 = vmatpush1.msra.mxu0 0.0
    %1051 = vmatprep.subr.mxu0 0.0
    %1052 = vmatpush1.msra.mxu0 0.0
    %1053 = vmatprep.subr.mxu0 0.0
    %1054 = vmatpush1.msra.mxu0 0.0
    %1055 = vmatprep.subr.mxu0 0.0
    %1056 = vmatpush1.msra.mxu0 0.0
    %1057 = vmatprep.subr.mxu0 0.0
    %1058 = vmatpush1.msra.mxu0 0.0
    %1059 = vmatprep.subr.mxu0 0.0
    %1060 = vmatpush1.msra.mxu0 0.0
    %1061 = vmatprep.subr.mxu0 0.0
    %1062 = vmatpush1.msra.mxu0 0.0
    %1063 = vmatprep.subr.mxu0 0.0
    %1064 = vmatpush1.msra.mxu0 0.0
    %1065 = vmatprep.subr.mxu0 0.0
    %1066 = vmatpush1.msra.mxu0 0.0
    %1067 = vmatprep.subr.mxu0 0.0
    %1068 = vmatpush1.msra.mxu0 0.0
    %1069 = vmatprep.subr.mxu0 0.0
    %1070 = vmatpush1.msra.mxu0 0.0
    %1071 = vmatprep.subr.mxu0 0.0
    %1072 = vmatpush1.msra.mxu0 0.0
    %1073 = vmatprep.subr.mxu0 0.0
    %1074 = vmatpush1.msra.mxu0 0.0
    %1075 = vmatprep.subr.mxu0 0.0
    %1076 = vmatpush1.msra.mxu0 0.0
    %1077 = vmatprep.subr.mxu0 0.0
    %1078 = vmatpush1.msra.mxu0 0.0
    %1079 = vmatprep.mubr.f32.mxu0 0.0
    %1080 = vmatmul.mubr.f32.gmra.mrb[0].mxu0 %v1013
    %v1081 = vpop.f32.mrb[0].mxu0
    %v1082 = vadd.f32 %v1007, %v1081
    %v1083 = vpop.f32.mrb[0].mxu0
    %1084 = vdwg.mxu0
    %v1085 = vld [vmem:[%s20] sm:$0xff]
    %v1086 = vld [vmem:[%s20 + $0x8] sm:$0xff]
    %v1087 = vld [vmem:[%s20 + $0x10] sm:$0xff]
    %v1088 = vld [vmem:[%s20 + $0x18] sm:$0xff]
    %v1090 = vsel %vm96, %v997, 0
    %1092 = vmatprep.subr.mxu0 0.0
    %1093 = vmatpush1.msra.mxu0 %v1085
    %1094 = vmatprep.subr.mxu0 0.0
    %1095 = vmatpush1.msra.mxu0 %v1086
    %1096 = vmatprep.subr.mxu0 0.0
    %1097 = vmatpush1.msra.mxu0 %v1087
    %1098 = vmatprep.subr.mxu0 0.0
    %1099 = vmatpush1.msra.mxu0 %v1088
    %1100 = vmatprep.subr.mxu0 0.0
    %1101 = vmatpush1.msra.mxu0 0.0
    %1102 = vmatprep.subr.mxu0 0.0
    %1103 = vmatpush1.msra.mxu0 0.0
    %1104 = vmatprep.subr.mxu0 0.0
    %1105 = vmatpush1.msra.mxu0 0.0
    %1106 = vmatprep.subr.mxu0 0.0
    %1107 = vmatpush1.msra.mxu0 0.0
    %1108 = vmatprep.subr.mxu0 0.0
    %1109 = vmatpush1.msra.mxu0 0.0
    %1110 = vmatprep.subr.mxu0 0.0
    %1111 = vmatpush1.msra.mxu0 0.0
    %1112 = vmatprep.subr.mxu0 0.0
    %1113 = vmatpush1.msra.mxu0 0.0
    %1114 = vmatprep.subr.mxu0 0.0
    %1115 = vmatpush1.msra.mxu0 0.0
    %1116 = vmatprep.subr.mxu0 0.0
    %1117 = vmatpush1.msra.mxu0 0.0
    %1118 = vmatprep.subr.mxu0 0.0
    %1119 = vmatpush1.msra.mxu0 0.0
    %1120 = vmatprep.subr.mxu0 0.0
    %1121 = vmatpush1.msra.mxu0 0.0
    %1122 = vmatprep.subr.mxu0 0.0
    %1123 = vmatpush1.msra.mxu0 0.0
    %1124 = vmatprep.subr.mxu0 0.0
    %1125 = vmatpush1.msra.mxu0 0.0
    %1126 = vmatprep.subr.mxu0 0.0
    %1127 = vmatpush1.msra.mxu0 0.0
    %1128 = vmatprep.subr.mxu0 0.0
    %1129 = vmatpush1.msra.mxu0 0.0
    %1130 = vmatprep.subr.mxu0 0.0
    %1131 = vmatpush1.msra.mxu0 0.0
    %1132 = vmatprep.subr.mxu0 0.0
    %1133 = vmatpush1.msra.mxu0 0.0
    %1134 = vmatprep.subr.mxu0 0.0
    %1135 = vmatpush1.msra.mxu0 0.0
    %1136 = vmatprep.subr.mxu0 0.0
    %1137 = vmatpush1.msra.mxu0 0.0
    %1138 = vmatprep.subr.mxu0 0.0
    %1139 = vmatpush1.msra.mxu0 0.0
    %1140 = vmatprep.subr.mxu0 0.0
    %1141 = vmatpush1.msra.mxu0 0.0
    %1142 = vmatprep.subr.mxu0 0.0
    %1143 = vmatpush1.msra.mxu0 0.0
    %1144 = vmatprep.subr.mxu0 0.0
    %1145 = vmatpush1.msra.mxu0 0.0
    %1146 = vmatprep.subr.mxu0 0.0
    %1147 = vmatpush1.msra.mxu0 0.0
    %1148 = vmatprep.subr.mxu0 0.0
    %1149 = vmatpush1.msra.mxu0 0.0
    %1150 = vmatprep.subr.mxu0 0.0
    %1151 = vmatpush1.msra.mxu0 0.0
    %1152 = vmatprep.subr.mxu0 0.0
    %1153 = vmatpush1.msra.mxu0 0.0
    %1154 = vmatprep.subr.mxu0 0.0
    %1155 = vmatpush1.msra.mxu0 0.0
    %1156 = vmatprep.mubr.f32.mxu0 0.0
    %1157 = vmatmul.mubr.f32.gmra.mrb[0].mxu0 %v1090
    %v1158 = vpop.f32.mrb[0].mxu0
    %v1159 = vadd.f32 0.0, %v1158
    %v1160 = vpop.f32.mrb[0].mxu0
    %1161 = vdwg.mxu0
    %v1162 = vadd.f32 %v1082, %v1159
    %v1163 = vld [vmem:[%s21] sm:$0x1]
    %v1165 = vlaneseq
    %v1166 = vshrl.u32 %v1165, 7
    %v1167 = vsub.s32 0, %v1166
    %v1168 = vrot.slane %v1163, %v1167
    %v1170 = vadd.f32 %v1162, %v1168
    %v1171 = vtanh.pop %v1170
    %v1172 = vld [vmem:[%s22] sm:$0xff]
    %v1173 = vld [vmem:[%s22 + $0x8] sm:$0xff]
    %v1174 = vld [vmem:[%s22 + $0x10] sm:$0xff]
    %v1175 = vld [vmem:[%s22 + $0x18] sm:$0xff]
    %v1176 = vld [vmem:[%s23] sm:$0x1]
    %v1178 = vlaneseq
    %v1179 = vshrl.u32 %v1178, 7
    %v1180 = vsub.s32 0, %v1179
    %v1181 = vrot.slane %v1176, %v1180
    %v1184 = vsel %vm96, %v1171, 0
    %1186 = vmatprep.subr.mxu0 0.0
    %1187 = vmatpush1.msra.mxu0 %v1172
    %1188 = vmatprep.subr.mxu0 0.0
    %1189 = vmatpush1.msra.mxu0 %v1173
    %1190 = vmatprep.subr.mxu0 0.0
    %1191 = vmatpush1.msra.mxu0 %v1174
    %1192 = vmatprep.subr.mxu0 0.0
    %1193 = vmatpush1.msra.mxu0 %v1175
    %1194 = vmatprep.subr.mxu0 0.0
    %1195 = vmatpush1.msra.mxu0 0.0
    %1196 = vmatprep.subr.mxu0 0.0
    %1197 = vmatpush1.msra.mxu0 0.0
    %1198 = vmatprep.subr.mxu0 0.0
    %1199 = vmatpush1.msra.mxu0 0.0
    %1200 = vmatprep.subr.mxu0 0.0
    %1201 = vmatpush1.msra.mxu0 0.0
    %1202 = vmatprep.subr.mxu0 0.0
    %1203 = vmatpush1.msra.mxu0 0.0
    %1204 = vmatprep.subr.mxu0 0.0
    %1205 = vmatpush1.msra.mxu0 0.0
    %1206 = vmatprep.subr.mxu0 0.0
    %1207 = vmatpush1.msra.mxu0 0.0
    %1208 = vmatprep.subr.mxu0 0.0
    %1209 = vmatpush1.msra.mxu0 0.0
    %1210 = vmatprep.subr.mxu0 0.0
    %1211 = vmatpush1.msra.mxu0 0.0
    %1212 = vmatprep.subr.mxu0 0.0
    %1213 = vmatpush1.msra.mxu0 0.0
    %1214 = vmatprep.subr.mxu0 0.0
    %1215 = vmatpush1.msra.mxu0 0.0
    %1216 = vmatprep.subr.mxu0 0.0
    %1217 = vmatpush1.msra.mxu0 0.0
    %1218 = vmatprep.subr.mxu0 0.0
    %1219 = vmatpush1.msra.mxu0 0.0
    %1220 = vmatprep.subr.mxu0 0.0
    %1221 = vmatpush1.msra.mxu0 0.0
    %1222 = vmatprep.subr.mxu0 0.0
    %1223 = vmatpush1.msra.mxu0 0.0
    %1224 = vmatprep.subr.mxu0 0.0
    %1225 = vmatpush1.msra.mxu0 0.0
    %1226 = vmatprep.subr.mxu0 0.0
    %1227 = vmatpush1.msra.mxu0 0.0
    %1228 = vmatprep.subr.mxu0 0.0
    %1229 = vmatpush1.msra.mxu0 0.0
    %1230 = vmatprep.subr.mxu0 0.0
    %1231 = vmatpush1.msra.mxu0 0.0
    %1232 = vmatprep.subr.mxu0 0.0
    %1233 = vmatpush1.msra.mxu0 0.0
    %1234 = vmatprep.subr.mxu0 0.0
    %1235 = vmatpush1.msra.mxu0 0.0
    %1236 = vmatprep.subr.mxu0 0.0
    %1237 = vmatpush1.msra.mxu0 0.0
    %1238 = vmatprep.subr.mxu0 0.0
    %1239 = vmatpush1.msra.mxu0 0.0
    %1240 = vmatprep.subr.mxu0 0.0
    %1241 = vmatpush1.msra.mxu0 0.0
    %1242 = vmatprep.subr.mxu0 0.0
    %1243 = vmatpush1.msra.mxu0 0.0
    %1244 = vmatprep.subr.mxu0 0.0
    %1245 = vmatpush1.msra.mxu0 0.0
    %1246 = vmatprep.subr.mxu0 0.0
    %1247 = vmatpush1.msra.mxu0 0.0
    %1248 = vmatprep.subr.mxu0 0.0
    %1249 = vmatpush1.msra.mxu0 0.0
    %1250 = vmatprep.mubr.f32.mxu0 0.0
    %1251 = vmatmul.mubr.f32.gmra.mrb[0].mxu0 %v1184
    %v1252 = vpop.f32.mrb[0].mxu0
    %v1253 = vadd.f32 %v1181, %v1252
    %v1254 = vpop.f32.mrb[0].mxu0
    %1255 = vdwg.mxu0
    %vm1256 = vcmask 17408
    %1257 = vst.msk [vmem:[#allocation5] sm:$0x3] %vm1256, %v1253
    // Predicated region
    $region105: #{entailment_forward.5} parent=1 // pred_check
      _
    $region106: #{entailment_forward.5} parent=1 // pred_check_branch
      %1259 = sbr.rel (0) target = $region108
    $region107: #{entailment_forward.5} parent=1 // pred_region
      %s1261 = ssub.s32 32, 32
      %1262 = vsyncadd [#allocation6], %s1261
      %s1264 = sshll.u32 [#allocation5], 4
      %s1265 = int_to_ptr.vmem [resolvable:$true] %s1264
      %1267 = dma.vmem_to_hbm [thread:$0]  %s1265, 32, %s24, [#allocation6]
    $region108: #{entailment_forward.5} parent=1 // pred_fallthru
      _
    // Predicated region
    $region109: #{entailment_forward.5} parent=1 // pred_check
      _
    $region110: #{entailment_forward.5} parent=1 // pred_check_branch
      %1269 = sbr.rel (0) target = $region112
    $region111: #{entailment_forward.5} parent=1 // pred_region
      %1270 = dma.done [#allocation6], 32
    $region112: #{entailment_forward.5} parent=1 // pred_fallthru
      _
    %1271 = vsyncpa [#allocation6], 1

</llo_original>
